<compile_context>
chip_gen: v7x
topology: tpu7x:2x2x1
jax: 0.10.0
libtpu: 0.0.40
codegen_flags: <defaults>
</compile_context>

<pallas_src>
import jax
import jax.numpy as jnp
from jax.experimental import pallas as pl
from jax.experimental.pallas import tpu as pltpu

# ----------------------------- configuration -------------------------------
C_IN = 64                 # module uses 2048
C_BRANCH = C_IN // 4      # 16   (module 512)
C_CAT = 2 * C_IN          # 128  (module 4096)
C_MID = 32                # module uses 512
NCLASS = 8
NCLS_PAD = 128            # lane-dense padded class dim for the kernel output
N, H, W = 2, 12, 12       # H, W divisible by 6 so adaptive-avg-pool bins are uniform
HW = H * W
MARGIN = 16               # zero rows above/below the flat padded scratch (>= W + 1)
PADROWS = HW + 2 * MARGIN
BN_EPS = 1e-5
BINS = (1, 2, 3, 6)
MXU_DTYPE = jnp.bfloat16  # 3x3-conv MXU operand dtype (accumulation stays f32)


# --------------------------- fused head Pallas kernel -----------------------
def _fused_head_kernel(x_ref, u1_ref, u2_ref, u3_ref, u4_ref, mask_ref,
                       w3_ref, b3_ref, w1_ref, b1_ref, o_ref, xpad_ref):
    # xpad_ref: f32 VMEM scratch (PADROWS, C_CAT) holding the *virtually concatenated*
    # sources in a flat (row-major) spatial layout with zero margins on top/bottom.
    zeros_m = jnp.zeros((MARGIN, C_CAT), xpad_ref.dtype)
    xpad_ref[0:MARGIN, :] = zeros_m                    # top halo
    xpad_ref[MARGIN + HW:PADROWS, :] = zeros_m         # bottom halo

    # Virtual concat: each source writes its own channel range (no HBM concat).
    off = 0
    for src_ref, csrc in ((x_ref, C_IN), (u1_ref, C_BRANCH), (u2_ref, C_BRANCH),
                          (u3_ref, C_BRANCH), (u4_ref, C_BRANCH)):
        xpad_ref[MARGIN:MARGIN + HW, off:off + csrc] = src_ref[0]
        off += csrc

    # 3x3 conv (pad=1) as 9 shifted, contiguous, full-K (C_CAT) matmuls.
    # Row (dy) overflow is handled by the zero halos; column (dx) wrap by mask_ref.
    acc = jnp.zeros((HW, C_MID), jnp.float32)
    for t in range(9):
        ky, kx = divmod(t, 3)
        d = (ky - 1) * W + (kx - 1)
        patch = xpad_ref[MARGIN + d:MARGIN + d + HW, :].astype(MXU_DTYPE)   # (HW, C_CAT)
        contrib = jnp.dot(patch, w3_ref[t], preferred_element_type=jnp.float32)
        if kx != 1:                                     # dx = -1 / +1 taps only
            contrib = contrib * mask_ref[kx]            # (HW, 1) column-validity mask
        acc = acc + contrib

    # BN is folded into w3 (scale) and b3 (bias); Dropout(0.1) is identity in eval.
    y = jnp.maximum(acc + b3_ref[...], 0.0)
    # Final 1x1 conv with bias, class dim pre-padded to 128 -> lane-dense store.
    out = jnp.dot(y, w1_ref[...], preferred_element_type=jnp.float32) + b1_ref[...]
    o_ref[...] = out[None].astype(o_ref.dtype)


def fused_psp_head(x_flat, u1, u2, u3, u4, w3f, b3, w1p, b1p):
    n = x_flat.shape[0]
    # Column-wrap masks per horizontal tap index kx (0:left, 1:center, 2:right).
    cols = jnp.arange(HW, dtype=jnp.int32) % W
    masks = jnp.stack([
        (cols != 0).astype(jnp.float32),
        jnp.ones((HW,), jnp.float32),
        (cols != W - 1).astype(jnp.float32),
    ]).reshape(3, HW, 1)

    flops = 2 * n * HW * (9 * C_CAT * C_MID + C_MID * NCLS_PAD)
    bytes_accessed = (n * HW * C_CAT * 4            # x + branch feature maps
                      + 9 * C_CAT * C_MID * 2       # bf16 conv weights
                      + n * HW * NCLS_PAD * 4)      # lane-dense output

    grid_spec = pltpu.PrefetchScalarGridSpec(
        num_scalar_prefetch=0,
        grid=(n,),
        in_specs=[
            pl.BlockSpec((1, HW, C_IN), lambda i: (i, 0, 0)),
            pl.BlockSpec((1, HW, C_BRANCH), lambda i: (i, 0, 0)),
            pl.BlockSpec((1, HW, C_BRANCH), lambda i: (i, 0, 0)),
            pl.BlockSpec((1, HW, C_BRANCH), lambda i: (i, 0, 0)),
            pl.BlockSpec((1, HW, C_BRANCH), lambda i: (i, 0, 0)),
            pl.BlockSpec((3, HW, 1), lambda i: (0, 0, 0)),
            pl.BlockSpec((9, C_CAT, C_MID), lambda i: (0, 0, 0)),   # resident weights
            pl.BlockSpec((1, C_MID), lambda i: (0, 0)),
            pl.BlockSpec((C_MID, NCLS_PAD), lambda i: (0, 0)),
            pl.BlockSpec((1, NCLS_PAD), lambda i: (0, 0)),
        ],
        out_specs=pl.BlockSpec((1, HW, NCLS_PAD), lambda i: (i, 0, 0)),
        scratch_shapes=[pltpu.VMEM((PADROWS, C_CAT), jnp.float32)],
    )
    return pl.pallas_call(
        _fused_head_kernel,
        out_shape=jax.ShapeDtypeStruct((n, HW, NCLS_PAD), jnp.float32),
        grid_spec=grid_spec,
        compiler_params=pltpu.CompilerParams(
            dimension_semantics=("parallel",),          # batch across TCs on multi-core chips
            vmem_limit_bytes=32 * 1024 * 1024),
        cost_estimate=pl.CostEstimate(flops=flops, transcendentals=0,
                                      bytes_accessed=bytes_accessed),
    )(x_flat, u1, u2, u3, u4, masks, w3f, b3, w1p, b1p)


# ------------------------------- XLA glue -----------------------------------
def adaptive_avg_pool_nhwc(x, o):
    # Matches nn.AdaptiveAvgPool2d(o) when H % o == 0 and W % o == 0 (holds for 12 and bins 1,2,3,6).
    n, h, w, c = x.shape
    return x.reshape(n, o, h // o, o, w // o, c).mean(axis=(2, 4))


def upsample_bilinear_align_corners(x, out_h, out_w):
    # F.interpolate(..., mode='bilinear', align_corners=True), NHWC layout.
    n, h, w, c = x.shape

    def coords(insz, outsz):
        if outsz == 1 or insz == 1:
            src = jnp.zeros((outsz,), jnp.float32)
        else:
            src = jnp.arange(outsz, dtype=jnp.float32) * ((insz - 1) / (outsz - 1))
        i0 = jnp.clip(jnp.floor(src).astype(jnp.int32), 0, insz - 1)
        i1 = jnp.clip(i0 + 1, 0, insz - 1)
        frac = src - i0.astype(jnp.float32)
        return i0, i1, frac

    y0, y1, fy = coords(h, out_h)
    x0, x1, fx = coords(w, out_w)
    top, bot = x[:, y0, :, :], x[:, y1, :, :]
    rows = top * (1.0 - fy)[None, :, None, None] + bot * fy[None, :, None, None]
    left, right = rows[:, :, x0, :], rows[:, :, x1, :]
    return left * (1.0 - fx)[None, None, :, None] + right * fx[None, None, :, None]


def fold_bn(gamma, beta, mean, var, eps=BN_EPS):
    scale = gamma / jnp.sqrt(var + eps)
    return scale, beta - mean * scale


def init_params(key):
    kb, kh = jax.random.split(key)
    params = {"branches": []}
    for bkey in jax.random.split(kb, 4):   # the four 1x1 conv + BN + ReLU branches
        kw, kg, kbe, km, kv = jax.random.split(bkey, 5)
        w = jax.random.normal(kw, (C_IN, C_BRANCH), jnp.float32) * 0.05
        gamma = 1.0 + 0.1 * jax.random.normal(kg, (C_BRANCH,), jnp.float32)
        beta = 0.1 * jax.random.normal(kbe, (C_BRANCH,), jnp.float32)
        mean = 0.1 * jax.random.normal(km, (C_BRANCH,), jnp.float32)
        var = 0.5 + jax.random.uniform(kv, (C_BRANCH,), jnp.float32)
        params["branches"].append((w, gamma, beta, mean, var))

    k3, kg3, kb3, km3, kv3, kw1, kb1 = jax.random.split(kh, 7)
    params["w3"] = jax.random.normal(k3, (9, C_CAT, C_MID), jnp.float32) * 0.02
    params["gamma3"] = 1.0 + 0.1 * jax.random.normal(kg3, (C_MID,), jnp.float32)
    params["beta3"] = 0.1 * jax.random.normal(kb3, (C_MID,), jnp.float32)
    params["mean3"] = 0.1 * jax.random.normal(km3, (C_MID,), jnp.float32)
    params["var3"] = 0.5 + jax.random.uniform(kv3, (C_MID,), jnp.float32)
    params["w1"] = jax.random.normal(kw1, (C_MID, NCLASS), jnp.float32) * 0.05
    params["b1"] = 0.1 * jax.random.normal(kb1, (NCLASS,), jnp.float32)
    return params


def prepare_inference_params(p):
    """Fold BN into conv weights, cast 3x3 weights to bf16, pad nclass to 128 lanes."""
    prep = {"branches": []}
    for (w, gamma, beta, mean, var) in p["branches"]:
        s, b = fold_bn(gamma, beta, mean, var)
        prep["branches"].append((w * s, b))
    s3, b3 = fold_bn(p["gamma3"], p["beta3"], p["mean3"], p["var3"])
    prep["w3f"] = (p["w3"] * s3).astype(MXU_DTYPE)
    prep["b3"] = b3.reshape(1, C_MID)
    prep["w1p"] = jnp.zeros((C_MID, NCLS_PAD), jnp.float32).at[:, :NCLASS].set(p["w1"])
    prep["b1p"] = jnp.zeros((1, NCLS_PAD), jnp.float32).at[0, :NCLASS].set(p["b1"])
    return prep


@jax.jit
def psp_head_forward(x_nchw, prep):
    x = jnp.transpose(x_nchw, (0, 2, 3, 1))                    # NCHW -> NHWC
    n, h, w, c = x.shape
    x_flat = x.reshape(n, h * w, c)
    ups = []
    for o, (wb, bb) in zip(BINS, prep["branches"]):            # plain XLA (tiny matmuls)
        pooled = adaptive_avg_pool_nhwc(x, o)                  # (N, o, o, C)
        y = jnp.maximum(jnp.einsum("nijc,cd->nijd", pooled, wb) + bb, 0.0)
        ups.append(upsample_bilinear_align_corners(y, h, w).reshape(n, h * w, C_BRANCH))
    out = fused_psp_head(x_flat, *ups, prep["w3f"], prep["b3"], prep["w1p"], prep["b1p"])
    logits = out[..., :NCLASS].reshape(n, h, w, NCLASS)
    return jnp.transpose(logits, (0, 3, 1, 2))                 # NHWC -> NCHW


def reference_forward(x_nchw, params):
    # Pure-JAX f32 reference mirroring the PyTorch module (for a numerical sanity check).
    x = jnp.transpose(x_nchw, (0, 2, 3, 1))
    n, h, w, c = x.shape
    feats = [x]
    for o, (wb, gamma, beta, mean, var) in zip(BINS, params["branches"]):
        s, b = fold_bn(gamma, beta, mean, var)
        pooled = adaptive_avg_pool_nhwc(x, o)
        y = jnp.maximum(jnp.einsum("nijc,cd->nijd", pooled, wb) * s + b, 0.0)
        feats.append(upsample_bilinear_align_corners(y, h, w))
    xcat = jnp.concatenate(feats, axis=-1)
    s3, b3 = fold_bn(params["gamma3"], params["beta3"], params["mean3"], params["var3"])
    xpad = jnp.pad(xcat, ((0, 0), (1, 1), (1, 1), (0, 0)))
    acc = jnp.zeros((n, h, w, C_MID), jnp.float32)
    for t in range(9):
        ky, kx = divmod(t, 3)
        acc = acc + jnp.einsum("nhwc,cd->nhwd",
                               xpad[:, ky:ky + h, kx:kx + w, :], params["w3"][t])
    y = jnp.maximum(acc * s3 + b3, 0.0)
    out = jnp.einsum("nhwc,cd->nhwd", y, params["w1"]) + params["b1"]
    return jnp.transpose(out, (0, 3, 1, 2))


if __name__ == "__main__":
    key = jax.random.PRNGKey(0)
    kx, kp = jax.random.split(key)
    x = jax.random.normal(kx, (N, C_IN, H, W), jnp.float32)    # NCHW like PyTorch
    params = init_params(kp)
    prep = prepare_inference_params(params)

    out = psp_head_forward(x, prep)
    jax.block_until_ready(out)
    assert out.shape == (N, NCLASS, H, W), out.shape
    assert bool(jnp.all(jnp.isfinite(out)))

    ref = reference_forward(x, params)
    max_err = float(jnp.max(jnp.abs(out - ref)))
    assert max_err < 2e-2, f"max abs err vs reference: {max_err}"
    print("KERNEL_OK")
</pallas_src>

<mosaic_0001>
module attributes {stable_mosaic.version = 11 : i64} {
  func.func @_fused_head_kernel(%arg0: i32, %arg1: memref<1x144x64xf32, #tpu.memory_space<vmem>>, %arg2: memref<1x144x16xf32, #tpu.memory_space<vmem>>, %arg3: memref<1x144x16xf32, #tpu.memory_space<vmem>>, %arg4: memref<1x144x16xf32, #tpu.memory_space<vmem>>, %arg5: memref<1x144x16xf32, #tpu.memory_space<vmem>>, %arg6: memref<3x144x1xf32, #tpu.memory_space<vmem>>, %arg7: memref<9x128x32xbf16, #tpu.memory_space<vmem>>, %arg8: memref<1x32xf32, #tpu.memory_space<vmem>>, %arg9: memref<32x128xf32, #tpu.memory_space<vmem>>, %arg10: memref<1x128xf32, #tpu.memory_space<vmem>>, %arg11: memref<1x144x128xf32, #tpu.memory_space<vmem>>, %arg12: memref<176x128xf32, #tpu.memory_space<vmem>>) attributes {dimension_semantics = [#tpu.dimension_semantics<parallel>], iteration_bounds = array<i64: 2>, scalar_prefetch = 0 : i64, scratch_operands = 1 : i64, tpu.core_type = #tpu.core_type<tc>, window_params = [{transform_indices = @transform_0, window_bounds = array<i64: 1, 144, 64>}, {transform_indices = @transform_1, window_bounds = array<i64: 1, 144, 16>}, {transform_indices = @transform_2, window_bounds = array<i64: 1, 144, 16>}, {transform_indices = @transform_3, window_bounds = array<i64: 1, 144, 16>}, {transform_indices = @transform_4, window_bounds = array<i64: 1, 144, 16>}, {pipeline_mode = #tpu.pipeline_mode<synchronous>, transform_indices = @transform_5, window_bounds = array<i64: 3, 144, 1>}, {pipeline_mode = #tpu.pipeline_mode<synchronous>, transform_indices = @transform_6, window_bounds = array<i64: 9, 128, 32>}, {pipeline_mode = #tpu.pipeline_mode<synchronous>, transform_indices = @transform_7, window_bounds = array<i64: 1, 32>}, {pipeline_mode = #tpu.pipeline_mode<synchronous>, transform_indices = @transform_8, window_bounds = array<i64: 32, 128>}, {pipeline_mode = #tpu.pipeline_mode<synchronous>, transform_indices = @transform_9, window_bounds = array<i64: 1, 128>}, {transform_indices = @transform_10, window_bounds = array<i64: 1, 144, 128>}]} {
    %cst = arith.constant 0.000000e+00 : f32
    %0 = vector.broadcast %cst : f32 to vector<16x128xf32>
    %c0 = arith.constant 0 : index
    %c0_0 = arith.constant 0 : index
    %1 = vector.load %arg12[%c0, %c0_0] : memref<176x128xf32, #tpu.memory_space<vmem>>, vector<16x128xf32>
    tpu.vector_store %arg12[%c0, %c0_0], %0 {strides = array<i32>} : memref<176x128xf32, #tpu.memory_space<vmem>>, vector<16x128xf32>,
    %c160 = arith.constant 160 : index
    %c0_1 = arith.constant 0 : index
    %2 = vector.load %arg12[%c160, %c0_1] : memref<176x128xf32, #tpu.memory_space<vmem>>, vector<16x128xf32>
    tpu.vector_store %arg12[%c160, %c0_1], %0 {strides = array<i32>} : memref<176x128xf32, #tpu.memory_space<vmem>>, vector<16x128xf32>,
    %c0_2 = arith.constant 0 : index
    %c0_3 = arith.constant 0 : index
    %c0_4 = arith.constant 0 : index
    %3 = vector.load %arg1[%c0_2, %c0_3, %c0_4] : memref<1x144x64xf32, #tpu.memory_space<vmem>>, vector<1x144x64xf32>
    %4 = vector.shape_cast %3 : vector<1x144x64xf32> to vector<144x64xf32>
    %c16 = arith.constant 16 : index
    %c0_5 = arith.constant 0 : index
    %5 = vector.load %arg12[%c16, %c0_5] : memref<176x128xf32, #tpu.memory_space<vmem>>, vector<144x64xf32>
    tpu.vector_store %arg12[%c16, %c0_5], %4 {strides = array<i32>} : memref<176x128xf32, #tpu.memory_space<vmem>>, vector<144x64xf32>,
    %c0_6 = arith.constant 0 : index
    %c0_7 = arith.constant 0 : index
    %c0_8 = arith.constant 0 : index
    %6 = vector.load %arg2[%c0_6, %c0_7, %c0_8] : memref<1x144x16xf32, #tpu.memory_space<vmem>>, vector<1x144x16xf32>
    %7 = vector.shape_cast %6 : vector<1x144x16xf32> to vector<144x16xf32>
    %c16_9 = arith.constant 16 : index
    %c64 = arith.constant 64 : index
    %8 = vector.load %arg12[%c16_9, %c64] : memref<176x128xf32, #tpu.memory_space<vmem>>, vector<144x16xf32>
    tpu.vector_store %arg12[%c16_9, %c64], %7 {strides = array<i32>} : memref<176x128xf32, #tpu.memory_space<vmem>>, vector<144x16xf32>,
    %c0_10 = arith.constant 0 : index
    %c0_11 = arith.constant 0 : index
    %c0_12 = arith.constant 0 : index
    %9 = vector.load %arg3[%c0_10, %c0_11, %c0_12] : memref<1x144x16xf32, #tpu.memory_space<vmem>>, vector<1x144x16xf32>
    %10 = vector.shape_cast %9 : vector<1x144x16xf32> to vector<144x16xf32>
    %c16_13 = arith.constant 16 : index
    %c80 = arith.constant 80 : index
    %11 = vector.load %arg12[%c16_13, %c80] : memref<176x128xf32, #tpu.memory_space<vmem>>, vector<144x16xf32>
    tpu.vector_store %arg12[%c16_13, %c80], %10 {strides = array<i32>} : memref<176x128xf32, #tpu.memory_space<vmem>>, vector<144x16xf32>,
    %c0_14 = arith.constant 0 : index
    %c0_15 = arith.constant 0 : index
    %c0_16 = arith.constant 0 : index
    %12 = vector.load %arg4[%c0_14, %c0_15, %c0_16] : memref<1x144x16xf32, #tpu.memory_space<vmem>>, vector<1x144x16xf32>
    %13 = vector.shape_cast %12 : vector<1x144x16xf32> to vector<144x16xf32>
    %c16_17 = arith.constant 16 : index
    %c96 = arith.constant 96 : index
    %14 = vector.load %arg12[%c16_17, %c96] : memref<176x128xf32, #tpu.memory_space<vmem>>, vector<144x16xf32>
    tpu.vector_store %arg12[%c16_17, %c96], %13 {strides = array<i32>} : memref<176x128xf32, #tpu.memory_space<vmem>>, vector<144x16xf32>,
    %c0_18 = arith.constant 0 : index
    %c0_19 = arith.constant 0 : index
    %c0_20 = arith.constant 0 : index
    %15 = vector.load %arg5[%c0_18, %c0_19, %c0_20] : memref<1x144x16xf32, #tpu.memory_space<vmem>>, vector<1x144x16xf32>
    %16 = vector.shape_cast %15 : vector<1x144x16xf32> to vector<144x16xf32>
    %c16_21 = arith.constant 16 : index
    %c112 = arith.constant 112 : index
    %17 = vector.load %arg12[%c16_21, %c112] : memref<176x128xf32, #tpu.memory_space<vmem>>, vector<144x16xf32>
    tpu.vector_store %arg12[%c16_21, %c112], %16 {strides = array<i32>} : memref<176x128xf32, #tpu.memory_space<vmem>>, vector<144x16xf32>,
    %cst_22 = arith.constant 0.000000e+00 : f32
    %18 = vector.broadcast %cst_22 : f32 to vector<144x32xf32>
    %c3 = arith.constant 3 : index
    %c0_23 = arith.constant 0 : index
    %19 = vector.load %arg12[%c3, %c0_23] : memref<176x128xf32, #tpu.memory_space<vmem>>, vector<144x128xf32>
    %20 = arith.truncf %19 : vector<144x128xf32> to vector<144x128xbf16>
    %c0_24 = arith.constant 0 : index
    %c0_25 = arith.constant 0 : index
    %c0_26 = arith.constant 0 : index
    %21 = vector.load %arg7[%c0_24, %c0_25, %c0_26] : memref<9x128x32xbf16, #tpu.memory_space<vmem>>, vector<1x128x32xbf16>
    %22 = vector.shape_cast %21 : vector<1x128x32xbf16> to vector<128x32xbf16>
    %cst_27 = arith.constant dense<0.000000e+00> : vector<144x32xf32>
    %23 = tpu.matmul %20, %22, %cst_27 {dimension_numbers = #tpu.dot_dimension_numbers<[1], [0], [0], [1], [0, 0, 1, 1], [], []>} : vector<144x128xbf16>, vector<128x32xbf16>, vector<144x32xf32> -> vector<144x32xf32>
    %c0_28 = arith.constant 0 : index
    %c0_29 = arith.constant 0 : index
    %c0_30 = arith.constant 0 : index
    %24 = vector.load %arg6[%c0_28, %c0_29, %c0_30] : memref<3x144x1xf32, #tpu.memory_space<vmem>>, vector<1x144x1xf32>
    %25 = vector.shape_cast %24 : vector<1x144x1xf32> to vector<144x1xf32>
    %26 = vector.broadcast %25 : vector<144x1xf32> to vector<144x32xf32>
    %27 = arith.mulf %23, %26 : vector<144x32xf32>
    %28 = arith.addf %18, %27 : vector<144x32xf32>
    %c4 = arith.constant 4 : index
    %c0_31 = arith.constant 0 : index
    %29 = vector.load %arg12[%c4, %c0_31] : memref<176x128xf32, #tpu.memory_space<vmem>>, vector<144x128xf32>
    %30 = arith.truncf %29 : vector<144x128xf32> to vector<144x128xbf16>
    %c1 = arith.constant 1 : index
    %c0_32 = arith.constant 0 : index
    %c0_33 = arith.constant 0 : index
    %31 = vector.load %arg7[%c1, %c0_32, %c0_33] : memref<9x128x32xbf16, #tpu.memory_space<vmem>>, vector<1x128x32xbf16>
    %32 = vector.shape_cast %31 : vector<1x128x32xbf16> to vector<128x32xbf16>
    %cst_34 = arith.constant dense<0.000000e+00> : vector<144x32xf32>
    %33 = tpu.matmul %30, %32, %cst_34 {dimension_numbers = #tpu.dot_dimension_numbers<[1], [0], [0], [1], [0, 0, 1, 1], [], []>} : vector<144x128xbf16>, vector<128x32xbf16>, vector<144x32xf32> -> vector<144x32xf32>
    %34 = arith.addf %28, %33 : vector<144x32xf32>
    %c5 = arith.constant 5 : index
    %c0_35 = arith.constant 0 : index
    %35 = vector.load %arg12[%c5, %c0_35] : memref<176x128xf32, #tpu.memory_space<vmem>>, vector<144x128xf32>
    %36 = arith.truncf %35 : vector<144x128xf32> to vector<144x128xbf16>
    %c2 = arith.constant 2 : index
    %c0_36 = arith.constant 0 : index
    %c0_37 = arith.constant 0 : index
    %37 = vector.load %arg7[%c2, %c0_36, %c0_37] : memref<9x128x32xbf16, #tpu.memory_space<vmem>>, vector<1x128x32xbf16>
    %38 = vector.shape_cast %37 : vector<1x128x32xbf16> to vector<128x32xbf16>
    %cst_38 = arith.constant dense<0.000000e+00> : vector<144x32xf32>
    %39 = tpu.matmul %36, %38, %cst_38 {dimension_numbers = #tpu.dot_dimension_numbers<[1], [0], [0], [1], [0, 0, 1, 1], [], []>} : vector<144x128xbf16>, vector<128x32xbf16>, vector<144x32xf32> -> vector<144x32xf32>
    %c2_39 = arith.constant 2 : index
    %c0_40 = arith.constant 0 : index
    %c0_41 = arith.constant 0 : index
    %40 = vector.load %arg6[%c2_39, %c0_40, %c0_41] : memref<3x144x1xf32, #tpu.memory_space<vmem>>, vector<1x144x1xf32>
    %41 = vector.shape_cast %40 : vector<1x144x1xf32> to vector<144x1xf32>
    %42 = vector.broadcast %41 : vector<144x1xf32> to vector<144x32xf32>
    %43 = arith.mulf %39, %42 : vector<144x32xf32>
    %44 = arith.addf %34, %43 : vector<144x32xf32>
    %c15 = arith.constant 15 : index
    %c0_42 = arith.constant 0 : index
    %45 = vector.load %arg12[%c15, %c0_42] : memref<176x128xf32, #tpu.memory_space<vmem>>, vector<144x128xf32>
    %46 = arith.truncf %45 : vector<144x128xf32> to vector<144x128xbf16>
    %c3_43 = arith.constant 3 : index
    %c0_44 = arith.constant 0 : index
    %c0_45 = arith.constant 0 : index
    %47 = vector.load %arg7[%c3_43, %c0_44, %c0_45] : memref<9x128x32xbf16, #tpu.memory_space<vmem>>, vector<1x128x32xbf16>
    %48 = vector.shape_cast %47 : vector<1x128x32xbf16> to vector<128x32xbf16>
    %cst_46 = arith.constant dense<0.000000e+00> : vector<144x32xf32>
    %49 = tpu.matmul %46, %48, %cst_46 {dimension_numbers = #tpu.dot_dimension_numbers<[1], [0], [0], [1], [0, 0, 1, 1], [], []>} : vector<144x128xbf16>, vector<128x32xbf16>, vector<144x32xf32> -> vector<144x32xf32>
    %c0_47 = arith.constant 0 : index
    %c0_48 = arith.constant 0 : index
    %c0_49 = arith.constant 0 : index
    %50 = vector.load %arg6[%c0_47, %c0_48, %c0_49] : memref<3x144x1xf32, #tpu.memory_space<vmem>>, vector<1x144x1xf32>
    %51 = vector.shape_cast %50 : vector<1x144x1xf32> to vector<144x1xf32>
    %52 = vector.broadcast %51 : vector<144x1xf32> to vector<144x32xf32>
    %53 = arith.mulf %49, %52 : vector<144x32xf32>
    %54 = arith.addf %44, %53 : vector<144x32xf32>
    %c16_50 = arith.constant 16 : index
    %c0_51 = arith.constant 0 : index
    %55 = vector.load %arg12[%c16_50, %c0_51] : memref<176x128xf32, #tpu.memory_space<vmem>>, vector<144x128xf32>
    %56 = arith.truncf %55 : vector<144x128xf32> to vector<144x128xbf16>
    %c4_52 = arith.constant 4 : index
    %c0_53 = arith.constant 0 : index
    %c0_54 = arith.constant 0 : index
    %57 = vector.load %arg7[%c4_52, %c0_53, %c0_54] : memref<9x128x32xbf16, #tpu.memory_space<vmem>>, vector<1x128x32xbf16>
    %58 = vector.shape_cast %57 : vector<1x128x32xbf16> to vector<128x32xbf16>
    %cst_55 = arith.constant dense<0.000000e+00> : vector<144x32xf32>
    %59 = tpu.matmul %56, %58, %cst_55 {dimension_numbers = #tpu.dot_dimension_numbers<[1], [0], [0], [1], [0, 0, 1, 1], [], []>} : vector<144x128xbf16>, vector<128x32xbf16>, vector<144x32xf32> -> vector<144x32xf32>
    %60 = arith.addf %54, %59 : vector<144x32xf32>
    %c17 = arith.constant 17 : index
    %c0_56 = arith.constant 0 : index
    %61 = vector.load %arg12[%c17, %c0_56] : memref<176x128xf32, #tpu.memory_space<vmem>>, vector<144x128xf32>
    %62 = arith.truncf %61 : vector<144x128xf32> to vector<144x128xbf16>
    %c5_57 = arith.constant 5 : index
    %c0_58 = arith.constant 0 : index
    %c0_59 = arith.constant 0 : index
    %63 = vector.load %arg7[%c5_57, %c0_58, %c0_59] : memref<9x128x32xbf16, #tpu.memory_space<vmem>>, vector<1x128x32xbf16>
    %64 = vector.shape_cast %63 : vector<1x128x32xbf16> to vector<128x32xbf16>
    %cst_60 = arith.constant dense<0.000000e+00> : vector<144x32xf32>
    %65 = tpu.matmul %62, %64, %cst_60 {dimension_numbers = #tpu.dot_dimension_numbers<[1], [0], [0], [1], [0, 0, 1, 1], [], []>} : vector<144x128xbf16>, vector<128x32xbf16>, vector<144x32xf32> -> vector<144x32xf32>
    %c2_61 = arith.constant 2 : index
    %c0_62 = arith.constant 0 : index
    %c0_63 = arith.constant 0 : index
    %66 = vector.load %arg6[%c2_61, %c0_62, %c0_63] : memref<3x144x1xf32, #tpu.memory_space<vmem>>, vector<1x144x1xf32>
    %67 = vector.shape_cast %66 : vector<1x144x1xf32> to vector<144x1xf32>
    %68 = vector.broadcast %67 : vector<144x1xf32> to vector<144x32xf32>
    %69 = arith.mulf %65, %68 : vector<144x32xf32>
    %70 = arith.addf %60, %69 : vector<144x32xf32>
    %c27 = arith.constant 27 : index
    %c0_64 = arith.constant 0 : index
    %71 = vector.load %arg12[%c27, %c0_64] : memref<176x128xf32, #tpu.memory_space<vmem>>, vector<144x128xf32>
    %72 = arith.truncf %71 : vector<144x128xf32> to vector<144x128xbf16>
    %c6 = arith.constant 6 : index
    %c0_65 = arith.constant 0 : index
    %c0_66 = arith.constant 0 : index
    %73 = vector.load %arg7[%c6, %c0_65, %c0_66] : memref<9x128x32xbf16, #tpu.memory_space<vmem>>, vector<1x128x32xbf16>
    %74 = vector.shape_cast %73 : vector<1x128x32xbf16> to vector<128x32xbf16>
    %cst_67 = arith.constant dense<0.000000e+00> : vector<144x32xf32>
    %75 = tpu.matmul %72, %74, %cst_67 {dimension_numbers = #tpu.dot_dimension_numbers<[1], [0], [0], [1], [0, 0, 1, 1], [], []>} : vector<144x128xbf16>, vector<128x32xbf16>, vector<144x32xf32> -> vector<144x32xf32>
    %c0_68 = arith.constant 0 : index
    %c0_69 = arith.constant 0 : index
    %c0_70 = arith.constant 0 : index
    %76 = vector.load %arg6[%c0_68, %c0_69, %c0_70] : memref<3x144x1xf32, #tpu.memory_space<vmem>>, vector<1x144x1xf32>
    %77 = vector.shape_cast %76 : vector<1x144x1xf32> to vector<144x1xf32>
    %78 = vector.broadcast %77 : vector<144x1xf32> to vector<144x32xf32>
    %79 = arith.mulf %75, %78 : vector<144x32xf32>
    %80 = arith.addf %70, %79 : vector<144x32xf32>
    %c28 = arith.constant 28 : index
    %c0_71 = arith.constant 0 : index
    %81 = vector.load %arg12[%c28, %c0_71] : memref<176x128xf32, #tpu.memory_space<vmem>>, vector<144x128xf32>
    %82 = arith.truncf %81 : vector<144x128xf32> to vector<144x128xbf16>
    %c7 = arith.constant 7 : index
    %c0_72 = arith.constant 0 : index
    %c0_73 = arith.constant 0 : index
    %83 = vector.load %arg7[%c7, %c0_72, %c0_73] : memref<9x128x32xbf16, #tpu.memory_space<vmem>>, vector<1x128x32xbf16>
    %84 = vector.shape_cast %83 : vector<1x128x32xbf16> to vector<128x32xbf16>
    %cst_74 = arith.constant dense<0.000000e+00> : vector<144x32xf32>
    %85 = tpu.matmul %82, %84, %cst_74 {dimension_numbers = #tpu.dot_dimension_numbers<[1], [0], [0], [1], [0, 0, 1, 1], [], []>} : vector<144x128xbf16>, vector<128x32xbf16>, vector<144x32xf32> -> vector<144x32xf32>
    %86 = arith.addf %80, %85 : vector<144x32xf32>
    %c29 = arith.constant 29 : index
    %c0_75 = arith.constant 0 : index
    %87 = vector.load %arg12[%c29, %c0_75] : memref<176x128xf32, #tpu.memory_space<vmem>>, vector<144x128xf32>
    %88 = arith.truncf %87 : vector<144x128xf32> to vector<144x128xbf16>
    %c8 = arith.constant 8 : index
    %c0_76 = arith.constant 0 : index
    %c0_77 = arith.constant 0 : index
    %89 = vector.load %arg7[%c8, %c0_76, %c0_77] : memref<9x128x32xbf16, #tpu.memory_space<vmem>>, vector<1x128x32xbf16>
    %90 = vector.shape_cast %89 : vector<1x128x32xbf16> to vector<128x32xbf16>
    %cst_78 = arith.constant dense<0.000000e+00> : vector<144x32xf32>
    %91 = tpu.matmul %88, %90, %cst_78 {dimension_numbers = #tpu.dot_dimension_numbers<[1], [0], [0], [1], [0, 0, 1, 1], [], []>} : vector<144x128xbf16>, vector<128x32xbf16>, vector<144x32xf32> -> vector<144x32xf32>
    %c2_79 = arith.constant 2 : index
    %c0_80 = arith.constant 0 : index
    %c0_81 = arith.constant 0 : index
    %92 = vector.load %arg6[%c2_79, %c0_80, %c0_81] : memref<3x144x1xf32, #tpu.memory_space<vmem>>, vector<1x144x1xf32>
    %93 = vector.shape_cast %92 : vector<1x144x1xf32> to vector<144x1xf32>
    %94 = vector.broadcast %93 : vector<144x1xf32> to vector<144x32xf32>
    %95 = arith.mulf %91, %94 : vector<144x32xf32>
    %96 = arith.addf %86, %95 : vector<144x32xf32>
    %c0_82 = arith.constant 0 : index
    %c0_83 = arith.constant 0 : index
    %97 = vector.load %arg8[%c0_82, %c0_83] : memref<1x32xf32, #tpu.memory_space<vmem>>, vector<1x32xf32>
    %98 = vector.broadcast %97 : vector<1x32xf32> to vector<144x32xf32>
    %99 = arith.addf %96, %98 : vector<144x32xf32>
    %cst_84 = arith.constant 0.000000e+00 : f32
    %100 = vector.broadcast %cst_84 : f32 to vector<144x32xf32>
    %101 = arith.maximumf %99, %100 : vector<144x32xf32>
    %c0_85 = arith.constant 0 : index
    %c0_86 = arith.constant 0 : index
    %102 = vector.load %arg9[%c0_85, %c0_86] : memref<32x128xf32, #tpu.memory_space<vmem>>, vector<32x128xf32>
    %cst_87 = arith.constant dense<0.000000e+00> : vector<144x128xf32>
    %103 = tpu.matmul %101, %102, %cst_87 {dimension_numbers = #tpu.dot_dimension_numbers<[1], [0], [0], [1], [0, 0, 1, 1], [], []>} : vector<144x32xf32>, vector<32x128xf32>, vector<144x128xf32> -> vector<144x128xf32>
    %c0_88 = arith.constant 0 : index
    %c0_89 = arith.constant 0 : index
    %104 = vector.load %arg10[%c0_88, %c0_89] : memref<1x128xf32, #tpu.memory_space<vmem>>, vector<1x128xf32>
    %105 = vector.broadcast %104 : vector<1x128xf32> to vector<144x128xf32>
    %106 = arith.addf %103, %105 : vector<144x128xf32>
    %107 = vector.shape_cast %106 : vector<144x128xf32> to vector<1x144x128xf32>
    %c0_90 = arith.constant 0 : index
    %c0_91 = arith.constant 0 : index
    %c0_92 = arith.constant 0 : index
    %108 = vector.load %arg11[%c0_90, %c0_91, %c0_92] : memref<1x144x128xf32, #tpu.memory_space<vmem>>, vector<1x144x128xf32>
    tpu.vector_store %arg11[%c0_90, %c0_91, %c0_92], %107 {strides = array<i32>} : memref<1x144x128xf32, #tpu.memory_space<vmem>>, vector<1x144x128xf32>,
    return
  }
  func.func @transform_0(%arg0: i32) -> (i32, i32, i32) {
    %c0_i32 = arith.constant 0 : i32
    %c0_i32_0 = arith.constant 0 : i32
    %c0_i32_1 = arith.constant 0 : i32
    return %arg0, %c0_i32, %c0_i32_0 : i32, i32, i32
  }
  func.func @transform_1(%arg0: i32) -> (i32, i32, i32) {
    %c0_i32 = arith.constant 0 : i32
    %c0_i32_0 = arith.constant 0 : i32
    %c0_i32_1 = arith.constant 0 : i32
    return %arg0, %c0_i32, %c0_i32_0 : i32, i32, i32
  }
  func.func @transform_2(%arg0: i32) -> (i32, i32, i32) {
    %c0_i32 = arith.constant 0 : i32
    %c0_i32_0 = arith.constant 0 : i32
    %c0_i32_1 = arith.constant 0 : i32
    return %arg0, %c0_i32, %c0_i32_0 : i32, i32, i32
  }
  func.func @transform_3(%arg0: i32) -> (i32, i32, i32) {
    %c0_i32 = arith.constant 0 : i32
    %c0_i32_0 = arith.constant 0 : i32
    %c0_i32_1 = arith.constant 0 : i32
    return %arg0, %c0_i32, %c0_i32_0 : i32, i32, i32
  }
  func.func @transform_4(%arg0: i32) -> (i32, i32, i32) {
    %c0_i32 = arith.constant 0 : i32
    %c0_i32_0 = arith.constant 0 : i32
    %c0_i32_1 = arith.constant 0 : i32
    return %arg0, %c0_i32, %c0_i32_0 : i32, i32, i32
  }
  func.func @transform_5(%arg0: i32) -> (i32, i32, i32) {
    %c0_i32 = arith.constant 0 : i32
    %c0_i32_0 = arith.constant 0 : i32
    %c0_i32_1 = arith.constant 0 : i32
    %c0_i32_2 = arith.constant 0 : i32
    return %c0_i32, %c0_i32_0, %c0_i32_1 : i32, i32, i32
  }
  func.func @transform_6(%arg0: i32) -> (i32, i32, i32) {
    %c0_i32 = arith.constant 0 : i32
    %c0_i32_0 = arith.constant 0 : i32
    %c0_i32_1 = arith.constant 0 : i32
    %c0_i32_2 = arith.constant 0 : i32
    return %c0_i32, %c0_i32_0, %c0_i32_1 : i32, i32, i32
  }
  func.func @transform_7(%arg0: i32) -> (i32, i32) {
    %c0_i32 = arith.constant 0 : i32
    %c0_i32_0 = arith.constant 0 : i32
    %c0_i32_1 = arith.constant 0 : i32
    return %c0_i32, %c0_i32_0 : i32, i32
  }
  func.func @transform_8(%arg0: i32) -> (i32, i32) {
    %c0_i32 = arith.constant 0 : i32
    %c0_i32_0 = arith.constant 0 : i32
    %c0_i32_1 = arith.constant 0 : i32
    return %c0_i32, %c0_i32_0 : i32, i32
  }
  func.func @transform_9(%arg0: i32) -> (i32, i32) {
    %c0_i32 = arith.constant 0 : i32
    %c0_i32_0 = arith.constant 0 : i32
    %c0_i32_1 = arith.constant 0 : i32
    return %c0_i32, %c0_i32_0 : i32, i32
  }
  func.func @transform_10(%arg0: i32) -> (i32, i32, i32) {
    %c0_i32 = arith.constant 0 : i32
    %c0_i32_0 = arith.constant 0 : i32
    %c0_i32_1 = arith.constant 0 : i32
    return %arg0, %c0_i32, %c0_i32_0 : i32, i32, i32
  }
}

</mosaic_0001>

<llo_original>
// kernel: psp_head_forward.1
$region0: #{psp_head_forward.1}
  #allocation0 [shape = 'u32[]', space=smem, size = 0x4, offset = 0x4, fixed_abs, tag = 'smem constant byte address 0x4 - core index']
  #allocation1 [shape = 'u32[144,128]{1,0:T(1,128)}', space=vmem, size = 0x12000, scoped, tag = 'internal scratch']
  #allocation2 [shape = 'f32[176,128]{1,0:T(8,128)}', space=vmem, size = 0x16000, scoped, tag = 'scratch operand']
  %s0 = inlined_call_operand.vmem [shape: f32[2,144,64], index: 0, kind: input, shape index: {}]
  %s1 = inlined_call_operand.vmem [shape: f32[2,144,16], index: 1, kind: input, shape index: {}]
  %s2 = inlined_call_operand.vmem [shape: f32[2,144,16], index: 2, kind: input, shape index: {}]
  %s3 = inlined_call_operand.vmem [shape: f32[2,144,16], index: 3, kind: input, shape index: {}]
  %s4 = inlined_call_operand.vmem [shape: f32[2,144,16], index: 4, kind: input, shape index: {}]
  %s5 = inlined_call_operand.vmem [shape: f32[3,144,1], index: 5, kind: input, shape index: {}]
  %s6 = inlined_call_operand.vmem [shape: bf16[9,128,32], index: 6, kind: input, shape index: {}]
  %s7 = inlined_call_operand.vmem [shape: f32[1,32], index: 7, kind: input, shape index: {}]
  %s8 = inlined_call_operand.vmem [shape: f32[32,128], index: 8, kind: input, shape index: {}]
  %s9 = inlined_call_operand.vmem [shape: f32[1,128], index: 9, kind: input, shape index: {}]
  %s10 = inlined_call_operand.vmem [shape: f32[2,144,128], index: 10, kind: output, shape index: {}]
  %s11 = sld [smem:[#allocation0]]
  $region73: #{psp_head_forward.1} parent=0
    _
  %s13 = ssub.s32 1, %s11
  %s14 = scalar_select 0, %s13, %s11
  loop: start=0, step=1, limit=4
  $region2: #{psp_head_forward.1} parent=0 // loop_pre_header
    _
  $region3: #{psp_head_forward.1} parent=0 // loop_header
    %s16 = sphi 0, %s20
    %p17 = scmp.ge.s32.totalorder %s16, 4
    %s26 = sphi 0, %s28
    %s29 = sphi 0, %s26
    %s30 = sphi 0, %s29
    %s46 = sphi 0, %s30
    %s52 = sphi 0, %s54
    %s55 = sphi 0, %s52
    %s56 = sphi 0, %s55
    %s72 = sphi 0, %s56
    %s78 = sphi 0, %s80
    %s81 = sphi 0, %s78
    %s82 = sphi 0, %s81
    %s98 = sphi 0, %s82
    %s104 = sphi 0, %s106
    %s107 = sphi 0, %s104
    %s108 = sphi 0, %s107
    %s124 = sphi 0, %s108
    %s130 = sphi 0, %s132
    %s133 = sphi 0, %s130
    %s134 = sphi 0, %s133
    %s150 = sphi 0, %s134
    %s154 = sphi 0, %s154
    %s156 = sphi 0, %s154
    %s157 = sphi 0, %s156
    %s171 = sphi 0, %s157
    %s175 = sphi 0, %s175
    %s177 = sphi 0, %s175
    %s178 = sphi 0, %s177
    %s192 = sphi 0, %s178
    %s196 = sphi 0, %s196
    %s198 = sphi 0, %s196
    %s199 = sphi 0, %s198
    %s213 = sphi 0, %s199
    %s217 = sphi 0, %s217
    %s219 = sphi 0, %s217
    %s220 = sphi 0, %s219
    %s234 = sphi 0, %s220
    %s238 = sphi 0, %s238
    %s240 = sphi 0, %s238
    %s241 = sphi 0, %s240
    %s255 = sphi 0, %s241
    %s261 = sphi 0, %s263
    %s264 = sphi 0, %s261
    %s265 = sphi 0, %s264
    %s281 = sphi 0, %s265
  $region4: #{psp_head_forward.1} parent=0 // loop_header_branch
    %19 = sbr.rel (%p17) target = $region8
  $region5: #{psp_head_forward.1} parent=0 // loop_body
    %s21 = ssub.s32 %s16, 1
    %s22 = ssub.s32 %s16, 2
    %s23 = sadd.s32 %s16, 1
    %s24 = ssub.s32 %s16, %s23
    %p25 = scmp.eq.s32.totalorder %s24, 0
    %s27 = sadd.s32 %s26, 1
    %s28 = scalar_select %p25, %s26, %s27
    %p31 = pneg %p25
    %p32 = scmp.eq.s32.totalorder %s16, 1
    %p33 = por %p31, %p32
    %p34 = scmp.ne.s32.totalorder %s26, %s29
    %p35 = scmp.eq.s32.totalorder %s16, 0
    %p36 = por %p34, %p35
    %p37 = scmp.ne.s32.totalorder %s26, %s29
    %p38 = scmp.eq.s32.totalorder %s21, 1
    %p39 = por %p37, %p38
    %p40 = scmp.ne.s32.totalorder %s29, %s30
    %p41 = scmp.eq.s32.totalorder %s21, 0
    %p42 = por %p40, %p41
    %p43 = scmp.ne.s32.totalorder %s29, %s30
    %p44 = scmp.eq.s32.totalorder %s22, 1
    %p45 = por %p43, %p44
    %p47 = scmp.ne.s32.totalorder %s30, %s46
    %p48 = scmp.eq.s32.totalorder %s22, 0
    %p49 = por %p47, %p48
    %s50 = ssub.s32 %s16, %s23
    %p51 = scmp.eq.s32.totalorder %s50, 0
    %s53 = sadd.s32 %s52, 1
    %s54 = scalar_select %p51, %s52, %s53
    %p57 = pneg %p51
    %p58 = scmp.eq.s32.totalorder %s16, 1
    %p59 = por %p57, %p58
    %p60 = scmp.ne.s32.totalorder %s52, %s55
    %p61 = scmp.eq.s32.totalorder %s16, 0
    %p62 = por %p60, %p61
    %p63 = scmp.ne.s32.totalorder %s52, %s55
    %p64 = scmp.eq.s32.totalorder %s21, 1
    %p65 = por %p63, %p64
    %p66 = scmp.ne.s32.totalorder %s55, %s56
    %p67 = scmp.eq.s32.totalorder %s21, 0
    %p68 = por %p66, %p67
    %p69 = scmp.ne.s32.totalorder %s55, %s56
    %p70 = scmp.eq.s32.totalorder %s22, 1
    %p71 = por %p69, %p70
    %p73 = scmp.ne.s32.totalorder %s56, %s72
    %p74 = scmp.eq.s32.totalorder %s22, 0
    %p75 = por %p73, %p74
    %s76 = ssub.s32 %s16, %s23
    %p77 = scmp.eq.s32.totalorder %s76, 0
    %s79 = sadd.s32 %s78, 1
    %s80 = scalar_select %p77, %s78, %s79
    %p83 = pneg %p77
    %p84 = scmp.eq.s32.totalorder %s16, 1
    %p85 = por %p83, %p84
    %p86 = scmp.ne.s32.totalorder %s78, %s81
    %p87 = scmp.eq.s32.totalorder %s16, 0
    %p88 = por %p86, %p87
    %p89 = scmp.ne.s32.totalorder %s78, %s81
    %p90 = scmp.eq.s32.totalorder %s21, 1
    %p91 = por %p89, %p90
    %p92 = scmp.ne.s32.totalorder %s81, %s82
    %p93 = scmp.eq.s32.totalorder %s21, 0
    %p94 = por %p92, %p93
    %p95 = scmp.ne.s32.totalorder %s81, %s82
    %p96 = scmp.eq.s32.totalorder %s22, 1
    %p97 = por %p95, %p96
    %p99 = scmp.ne.s32.totalorder %s82, %s98
    %p100 = scmp.eq.s32.totalorder %s22, 0
    %p101 = por %p99, %p100
    %s102 = ssub.s32 %s16, %s23
    %p103 = scmp.eq.s32.totalorder %s102, 0
    %s105 = sadd.s32 %s104, 1
    %s106 = scalar_select %p103, %s104, %s105
    %p109 = pneg %p103
    %p110 = scmp.eq.s32.totalorder %s16, 1
    %p111 = por %p109, %p110
    %p112 = scmp.ne.s32.totalorder %s104, %s107
    %p113 = scmp.eq.s32.totalorder %s16, 0
    %p114 = por %p112, %p113
    %p115 = scmp.ne.s32.totalorder %s104, %s107
    %p116 = scmp.eq.s32.totalorder %s21, 1
    %p117 = por %p115, %p116
    %p118 = scmp.ne.s32.totalorder %s107, %s108
    %p119 = scmp.eq.s32.totalorder %s21, 0
    %p120 = por %p118, %p119
    %p121 = scmp.ne.s32.totalorder %s107, %s108
    %p122 = scmp.eq.s32.totalorder %s22, 1
    %p123 = por %p121, %p122
    %p125 = scmp.ne.s32.totalorder %s108, %s124
    %p126 = scmp.eq.s32.totalorder %s22, 0
    %p127 = por %p125, %p126
    %s128 = ssub.s32 %s16, %s23
    %p129 = scmp.eq.s32.totalorder %s128, 0
    %s131 = sadd.s32 %s130, 1
    %s132 = scalar_select %p129, %s130, %s131
    %p135 = pneg %p129
    %p136 = scmp.eq.s32.totalorder %s16, 1
    %p137 = por %p135, %p136
    %p138 = scmp.ne.s32.totalorder %s130, %s133
    %p139 = scmp.eq.s32.totalorder %s16, 0
    %p140 = por %p138, %p139
    %p141 = scmp.ne.s32.totalorder %s130, %s133
    %p142 = scmp.eq.s32.totalorder %s21, 1
    %p143 = por %p141, %p142
    %p144 = scmp.ne.s32.totalorder %s133, %s134
    %p145 = scmp.eq.s32.totalorder %s21, 0
    %p146 = por %p144, %p145
    %p147 = scmp.ne.s32.totalorder %s133, %s134
    %p148 = scmp.eq.s32.totalorder %s22, 1
    %p149 = por %p147, %p148
    %p151 = scmp.ne.s32.totalorder %s134, %s150
    %p152 = scmp.eq.s32.totalorder %s22, 0
    %p153 = por %p151, %p152
    %s155 = sadd.s32 %s154, 1
    %p158 = scmp.eq.s32.totalorder %s16, 1
    %p159 = scmp.ne.s32.totalorder %s154, %s156
    %p160 = scmp.eq.s32.totalorder %s16, 0
    %p161 = por %p159, %p160
    %p162 = scmp.ne.s32.totalorder %s154, %s156
    %p163 = scmp.eq.s32.totalorder %s21, 1
    %p164 = por %p162, %p163
    %p165 = scmp.ne.s32.totalorder %s156, %s157
    %p166 = scmp.eq.s32.totalorder %s21, 0
    %p167 = por %p165, %p166
    %p168 = scmp.ne.s32.totalorder %s156, %s157
    %p169 = scmp.eq.s32.totalorder %s22, 1
    %p170 = por %p168, %p169
    %p172 = scmp.ne.s32.totalorder %s157, %s171
    %p173 = scmp.eq.s32.totalorder %s22, 0
    %p174 = por %p172, %p173
    %s176 = sadd.s32 %s175, 1
    %p179 = scmp.eq.s32.totalorder %s16, 1
    %p180 = scmp.ne.s32.totalorder %s175, %s177
    %p181 = scmp.eq.s32.totalorder %s16, 0
    %p182 = por %p180, %p181
    %p183 = scmp.ne.s32.totalorder %s175, %s177
    %p184 = scmp.eq.s32.totalorder %s21, 1
    %p185 = por %p183, %p184
    %p186 = scmp.ne.s32.totalorder %s177, %s178
    %p187 = scmp.eq.s32.totalorder %s21, 0
    %p188 = por %p186, %p187
    %p189 = scmp.ne.s32.totalorder %s177, %s178
    %p190 = scmp.eq.s32.totalorder %s22, 1
    %p191 = por %p189, %p190
    %p193 = scmp.ne.s32.totalorder %s178, %s192
    %p194 = scmp.eq.s32.totalorder %s22, 0
    %p195 = por %p193, %p194
    %s197 = sadd.s32 %s196, 1
    %p200 = scmp.eq.s32.totalorder %s16, 1
    %p201 = scmp.ne.s32.totalorder %s196, %s198
    %p202 = scmp.eq.s32.totalorder %s16, 0
    %p203 = por %p201, %p202
    %p204 = scmp.ne.s32.totalorder %s196, %s198
    %p205 = scmp.eq.s32.totalorder %s21, 1
    %p206 = por %p204, %p205
    %p207 = scmp.ne.s32.totalorder %s198, %s199
    %p208 = scmp.eq.s32.totalorder %s21, 0
    %p209 = por %p207, %p208
    %p210 = scmp.ne.s32.totalorder %s198, %s199
    %p211 = scmp.eq.s32.totalorder %s22, 1
    %p212 = por %p210, %p211
    %p214 = scmp.ne.s32.totalorder %s199, %s213
    %p215 = scmp.eq.s32.totalorder %s22, 0
    %p216 = por %p214, %p215
    %s218 = sadd.s32 %s217, 1
    %p221 = scmp.eq.s32.totalorder %s16, 1
    %p222 = scmp.ne.s32.totalorder %s217, %s219
    %p223 = scmp.eq.s32.totalorder %s16, 0
    %p224 = por %p222, %p223
    %p225 = scmp.ne.s32.totalorder %s217, %s219
    %p226 = scmp.eq.s32.totalorder %s21, 1
    %p227 = por %p225, %p226
    %p228 = scmp.ne.s32.totalorder %s219, %s220
    %p229 = scmp.eq.s32.totalorder %s21, 0
    %p230 = por %p228, %p229
    %p231 = scmp.ne.s32.totalorder %s219, %s220
    %p232 = scmp.eq.s32.totalorder %s22, 1
    %p233 = por %p231, %p232
    %p235 = scmp.ne.s32.totalorder %s220, %s234
    %p236 = scmp.eq.s32.totalorder %s22, 0
    %p237 = por %p235, %p236
    %s239 = sadd.s32 %s238, 1
    %p242 = scmp.eq.s32.totalorder %s16, 1
    %p243 = scmp.ne.s32.totalorder %s238, %s240
    %p244 = scmp.eq.s32.totalorder %s16, 0
    %p245 = por %p243, %p244
    %p246 = scmp.ne.s32.totalorder %s238, %s240
    %p247 = scmp.eq.s32.totalorder %s21, 1
    %p248 = por %p246, %p247
    %p249 = scmp.ne.s32.totalorder %s240, %s241
    %p250 = scmp.eq.s32.totalorder %s21, 0
    %p251 = por %p249, %p250
    %p252 = scmp.ne.s32.totalorder %s240, %s241
    %p253 = scmp.eq.s32.totalorder %s22, 1
    %p254 = por %p252, %p253
    %p256 = scmp.ne.s32.totalorder %s241, %s255
    %p257 = scmp.eq.s32.totalorder %s22, 0
    %p258 = por %p256, %p257
    %s259 = ssub.s32 %s16, %s23
    %p260 = scmp.eq.s32.totalorder %s259, 0
    %s262 = sadd.s32 %s261, 1
    %s263 = scalar_select %p260, %s261, %s262
    %p266 = pneg %p260
    %p267 = scmp.eq.s32.totalorder %s16, 1
    %p268 = por %p266, %p267
    %p269 = scmp.ne.s32.totalorder %s261, %s264
    %p270 = scmp.eq.s32.totalorder %s16, 0
    %p271 = por %p269, %p270
    %p272 = scmp.ne.s32.totalorder %s261, %s264
    %p273 = scmp.eq.s32.totalorder %s21, 1
    %p274 = por %p272, %p273
    %p275 = scmp.ne.s32.totalorder %s264, %s265
    %p276 = scmp.eq.s32.totalorder %s21, 0
    %p277 = por %p275, %p276
    %p278 = scmp.ne.s32.totalorder %s264, %s265
    %p279 = scmp.eq.s32.totalorder %s22, 1
    %p280 = por %p278, %p279
    %p282 = scmp.ne.s32.totalorder %s265, %s281
    %p283 = scmp.eq.s32.totalorder %s22, 0
    %p284 = por %p282, %p283
    %p285 = scmp.le.s32.totalorder 1, %s16
    %p286 = scmp.lt.s32.totalorder %s16, 3
    %p287 = pnand %p285, %p286
    %p288 = pneg %p287
    // Predicated region
    $region9: #{psp_head_forward.1} parent=5 // pred_check
      _
    $region10: #{psp_head_forward.1} parent=5 // pred_check_branch
      %290 = sbr.rel (%p287) target = $region12
    $region11: #{psp_head_forward.1} parent=5 // pred_region
      %s291 = ssub.s32 %s16, 1
      // Predicated region
      $region13: #{psp_head_forward.1} parent=11 // pred_check
        %p292 = pneg %p167
      $region14: #{psp_head_forward.1} parent=11 // pred_check_branch
        %294 = sbr.rel (%p292) target = $region16
      $region15: #{psp_head_forward.1} parent=11 // pred_region
        _
      $region16: #{psp_head_forward.1} parent=11 // pred_fallthru
        _
      // Predicated region
      $region17: #{psp_head_forward.1} parent=11 // pred_check
        %p295 = pneg %p188
      $region18: #{psp_head_forward.1} parent=11 // pred_check_branch
        %297 = sbr.rel (%p295) target = $region20
      $region19: #{psp_head_forward.1} parent=11 // pred_region
        _
      $region20: #{psp_head_forward.1} parent=11 // pred_fallthru
        _
      // Predicated region
      $region21: #{psp_head_forward.1} parent=11 // pred_check
        %p298 = pneg %p209
      $region22: #{psp_head_forward.1} parent=11 // pred_check_branch
        %300 = sbr.rel (%p298) target = $region24
      $region23: #{psp_head_forward.1} parent=11 // pred_region
        _
      $region24: #{psp_head_forward.1} parent=11 // pred_fallthru
        _
      // Predicated region
      $region25: #{psp_head_forward.1} parent=11 // pred_check
        %p301 = pneg %p230
      $region26: #{psp_head_forward.1} parent=11 // pred_check_branch
        %303 = sbr.rel (%p301) target = $region28
      $region27: #{psp_head_forward.1} parent=11 // pred_region
        _
      $region28: #{psp_head_forward.1} parent=11 // pred_fallthru
        _
      // Predicated region
      $region29: #{psp_head_forward.1} parent=11 // pred_check
        %p304 = pneg %p251
      $region30: #{psp_head_forward.1} parent=11 // pred_check_branch
        %306 = sbr.rel (%p304) target = $region32
      $region31: #{psp_head_forward.1} parent=11 // pred_region
        _
      $region32: #{psp_head_forward.1} parent=11 // pred_fallthru
        _
    $region12: #{psp_head_forward.1} parent=5 // pred_fallthru
      _
    %p307 = scmp.lt.s32.totalorder %s16, 2
    // Predicated region
    $region33: #{psp_head_forward.1} parent=5 // pred_check
      %p308 = pneg %p307
    $region34: #{psp_head_forward.1} parent=5 // pred_check_branch
      %310 = sbr.rel (%p308) target = $region36
    $region35: #{psp_head_forward.1} parent=5 // pred_region
      // Predicated region
      $region37: #{psp_head_forward.1} parent=35 // pred_check
        %p311 = pneg %p36
      $region38: #{psp_head_forward.1} parent=35 // pred_check_branch
        %313 = sbr.rel (%p311) target = $region40
      $region39: #{psp_head_forward.1} parent=35 // pred_region
        %p314 = scmp.lt.s32.totalorder %s16, 1
        %s315 = scalar_select %p314, %s16, 1
        %s316 = smul.addr %s315, 18
        %s317 = smul.addr %s316, 8
        %s318 = scalar_lea.vmem %s0, %s317
      $region40: #{psp_head_forward.1} parent=35 // pred_fallthru
        _
      // Predicated region
      $region41: #{psp_head_forward.1} parent=35 // pred_check
        %p319 = pneg %p62
      $region42: #{psp_head_forward.1} parent=35 // pred_check_branch
        %321 = sbr.rel (%p319) target = $region44
      $region43: #{psp_head_forward.1} parent=35 // pred_region
        %p322 = scmp.lt.s32.totalorder %s16, 1
        %s323 = scalar_select %p322, %s16, 1
        %s324 = smul.addr %s323, 18
        %s325 = smul.addr %s324, 8
        %s326 = scalar_lea.vmem %s1, %s325
      $region44: #{psp_head_forward.1} parent=35 // pred_fallthru
        _
      // Predicated region
      $region45: #{psp_head_forward.1} parent=35 // pred_check
        %p327 = pneg %p88
      $region46: #{psp_head_forward.1} parent=35 // pred_check_branch
        %329 = sbr.rel (%p327) target = $region48
      $region47: #{psp_head_forward.1} parent=35 // pred_region
        %p330 = scmp.lt.s32.totalorder %s16, 1
        %s331 = scalar_select %p330, %s16, 1
        %s332 = smul.addr %s331, 18
        %s333 = smul.addr %s332, 8
        %s334 = scalar_lea.vmem %s2, %s333
      $region48: #{psp_head_forward.1} parent=35 // pred_fallthru
        _
      // Predicated region
      $region49: #{psp_head_forward.1} parent=35 // pred_check
        %p335 = pneg %p114
      $region50: #{psp_head_forward.1} parent=35 // pred_check_branch
        %337 = sbr.rel (%p335) target = $region52
      $region51: #{psp_head_forward.1} parent=35 // pred_region
        %p338 = scmp.lt.s32.totalorder %s16, 1
        %s339 = scalar_select %p338, %s16, 1
        %s340 = smul.addr %s339, 18
        %s341 = smul.addr %s340, 8
        %s342 = scalar_lea.vmem %s3, %s341
      $region52: #{psp_head_forward.1} parent=35 // pred_fallthru
        _
      // Predicated region
      $region53: #{psp_head_forward.1} parent=35 // pred_check
        %p343 = pneg %p140
      $region54: #{psp_head_forward.1} parent=35 // pred_check_branch
        %345 = sbr.rel (%p343) target = $region56
      $region55: #{psp_head_forward.1} parent=35 // pred_region
        %p346 = scmp.lt.s32.totalorder %s16, 1
        %s347 = scalar_select %p346, %s16, 1
        %s348 = smul.addr %s347, 18
        %s349 = smul.addr %s348, 8
        %s350 = scalar_lea.vmem %s4, %s349
      $region56: #{psp_head_forward.1} parent=35 // pred_fallthru
        _
    $region36: #{psp_head_forward.1} parent=5 // pred_fallthru
      _
    %p351 = scmp.le.s32.totalorder 1, %s16
    %p352 = scmp.lt.s32.totalorder %s16, 3
    %p353 = pnand %p351, %p352
    %p354 = pneg %p353
    // Predicated region
    $region57: #{psp_head_forward.1} parent=5 // pred_check
      _
    $region58: #{psp_head_forward.1} parent=5 // pred_check_branch
      %356 = sbr.rel (%p353) target = $region60
    $region59: #{psp_head_forward.1} parent=5 // pred_region
      %s357 = ssub.s32 %s16, 1
      %p358 = scmp.lt.s32.totalorder %s21, 1
      %s359 = scalar_select %p358, %s21, 1
      %s360 = smul.addr %s359, 18
      %s361 = smul.addr %s360, 8
      %s362 = scalar_lea.vmem %s0, %s361
      %p363 = pneg %p42
      %p364 = pneg %p39
      %p365 = scmp.lt.s32.totalorder %s21, 1
      %s366 = scalar_select %p365, %s21, 1
      %s367 = smul.addr %s366, 18
      %s368 = smul.addr %s367, 8
      %s369 = scalar_lea.vmem %s1, %s368
      %p370 = pneg %p68
      %p371 = pneg %p65
      %p372 = scmp.lt.s32.totalorder %s21, 1
      %s373 = scalar_select %p372, %s21, 1
      %s374 = smul.addr %s373, 18
      %s375 = smul.addr %s374, 8
      %s376 = scalar_lea.vmem %s2, %s375
      %p377 = pneg %p94
      %p378 = pneg %p91
      %p379 = scmp.lt.s32.totalorder %s21, 1
      %s380 = scalar_select %p379, %s21, 1
      %s381 = smul.addr %s380, 18
      %s382 = smul.addr %s381, 8
      %s383 = scalar_lea.vmem %s3, %s382
      %p384 = pneg %p120
      %p385 = pneg %p117
      %p386 = scmp.lt.s32.totalorder %s21, 1
      %s387 = scalar_select %p386, %s21, 1
      %s388 = smul.addr %s387, 18
      %s389 = smul.addr %s388, 8
      %s390 = scalar_lea.vmem %s4, %s389
      %p391 = pneg %p146
      %p392 = pneg %p143
      %p393 = pneg %p167
      %p394 = pneg %p164
      %p395 = pneg %p188
      %p396 = pneg %p185
      %p397 = pneg %p209
      %p398 = pneg %p206
      %p399 = pneg %p230
      %p400 = pneg %p227
      %p401 = pneg %p251
      %p402 = pneg %p248
      %p403 = pneg %p277
      %p404 = pneg %p274
      %p405 = scmp.lt.s32.totalorder %s21, 1
      %s406 = scalar_select %p405, %s21, 1
      %s407 = smul.addr %s406, 18
      %s408 = smul.addr %s407, 8
      %s409 = scalar_lea.vmem %s10, %s408
      %p410 = scmp.lt.s32.totalorder %s21, 1
      %s411 = scalar_select %p410, %s21, 1
      %s412 = smul.addr %s411, 18
      %s413 = smul.addr %s412, 8
      %s414 = scalar_lea.vmem %s0, %s413
      %p415 = scmp.lt.s32.totalorder %s21, 1
      %s416 = scalar_select %p415, %s21, 1
      %s417 = smul.addr %s416, 18
      %s418 = smul.addr %s417, 8
      %s419 = scalar_lea.vmem %s1, %s418
      %p420 = scmp.lt.s32.totalorder %s21, 1
      %s421 = scalar_select %p420, %s21, 1
      %s422 = smul.addr %s421, 18
      %s423 = smul.addr %s422, 8
      %s424 = scalar_lea.vmem %s2, %s423
      %p425 = scmp.lt.s32.totalorder %s21, 1
      %s426 = scalar_select %p425, %s21, 1
      %s427 = smul.addr %s426, 18
      %s428 = smul.addr %s427, 8
      %s429 = scalar_lea.vmem %s3, %s428
      %p430 = scmp.lt.s32.totalorder %s21, 1
      %s431 = scalar_select %p430, %s21, 1
      %s432 = smul.addr %s431, 18
      %s433 = smul.addr %s432, 8
      %s434 = scalar_lea.vmem %s4, %s433
      %p435 = scmp.lt.s32.totalorder %s21, 1
      %s436 = scalar_select %p435, %s21, 1
      %s437 = smul.addr %s436, 18
      %s438 = smul.addr %s437, 8
      %s439 = scalar_lea.vmem %s10, %s438
      %441 = vst [vmem:[#allocation2] sm:$0xff] 0.0
      %442 = vst [vmem:[#allocation2 + $0x8] sm:$0xff] 0.0
      %443 = vst [vmem:[#allocation2 + $0xa0] sm:$0xff] 0.0
      %444 = vst [vmem:[#allocation2 + $0xa8] sm:$0xff] 0.0
      %v445 = vld [vmem:[%s414] sm:$0xff]
      %v446 = vld [vmem:[%s414 + $0x8] sm:$0xff]
      %v447 = vld [vmem:[%s414 + $0x10] sm:$0xff]
      %v448 = vld [vmem:[%s414 + $0x18] sm:$0xff]
      %v449 = vld [vmem:[%s414 + $0x20] sm:$0xff]
      %v450 = vld [vmem:[%s414 + $0x28] sm:$0xff]
      %v451 = vld [vmem:[%s414 + $0x30] sm:$0xff]
      %v452 = vld [vmem:[%s414 + $0x38] sm:$0xff]
      %v453 = vld [vmem:[%s414 + $0x40] sm:$0xff]
      %v454 = vld [vmem:[%s414 + $0x48] sm:$0xff]
      %v455 = vld [vmem:[%s414 + $0x50] sm:$0xff]
      %v456 = vld [vmem:[%s414 + $0x58] sm:$0xff]
      %v457 = vld [vmem:[%s414 + $0x60] sm:$0xff]
      %v458 = vld [vmem:[%s414 + $0x68] sm:$0xff]
      %v459 = vld [vmem:[%s414 + $0x70] sm:$0xff]
      %v460 = vld [vmem:[%s414 + $0x78] sm:$0xff]
      %v461 = vld [vmem:[%s414 + $0x80] sm:$0xff]
      %v462 = vld [vmem:[%s414 + $0x88] sm:$0xff]
      %vm463 = vcmask 523264
      %464 = vst.msk [vmem:[#allocation2 + $0x10] sm:$0xff] %vm463, %v445
      %465 = vst.msk [vmem:[#allocation2 + $0x18] sm:$0xff] %vm463, %v446
      %466 = vst.msk [vmem:[#allocation2 + $0x20] sm:$0xff] %vm463, %v447
      %467 = vst.msk [vmem:[#allocation2 + $0x28] sm:$0xff] %vm463, %v448
      %468 = vst.msk [vmem:[#allocation2 + $0x30] sm:$0xff] %vm463, %v449
      %469 = vst.msk [vmem:[#allocation2 + $0x38] sm:$0xff] %vm463, %v450
      %470 = vst.msk [vmem:[#allocation2 + $0x40] sm:$0xff] %vm463, %v451
      %471 = vst.msk [vmem:[#allocation2 + $0x48] sm:$0xff] %vm463, %v452
      %472 = vst.msk [vmem:[#allocation2 + $0x50] sm:$0xff] %vm463, %v453
      %473 = vst.msk [vmem:[#allocation2 + $0x58] sm:$0xff] %vm463, %v454
      %474 = vst.msk [vmem:[#allocation2 + $0x60] sm:$0xff] %vm463, %v455
      %475 = vst.msk [vmem:[#allocation2 + $0x68] sm:$0xff] %vm463, %v456
      %476 = vst.msk [vmem:[#allocation2 + $0x70] sm:$0xff] %vm463, %v457
      %477 = vst.msk [vmem:[#allocation2 + $0x78] sm:$0xff] %vm463, %v458
      %478 = vst.msk [vmem:[#allocation2 + $0x80] sm:$0xff] %vm463, %v459
      %479 = vst.msk [vmem:[#allocation2 + $0x88] sm:$0xff] %vm463, %v460
      %480 = vst.msk [vmem:[#allocation2 + $0x90] sm:$0xff] %vm463, %v461
      %481 = vst.msk [vmem:[#allocation2 + $0x98] sm:$0xff] %vm463, %v462
      %v482 = vld [vmem:[%s419] sm:$0xff]
      %v483 = vld [vmem:[%s419 + $0x8] sm:$0xff]
      %v484 = vld [vmem:[%s419 + $0x10] sm:$0xff]
      %v485 = vld [vmem:[%s419 + $0x18] sm:$0xff]
      %v486 = vld [vmem:[%s419 + $0x20] sm:$0xff]
      %v487 = vld [vmem:[%s419 + $0x28] sm:$0xff]
      %v488 = vld [vmem:[%s419 + $0x30] sm:$0xff]
      %v489 = vld [vmem:[%s419 + $0x38] sm:$0xff]
      %v490 = vld [vmem:[%s419 + $0x40] sm:$0xff]
      %v491 = vld [vmem:[%s419 + $0x48] sm:$0xff]
      %v492 = vld [vmem:[%s419 + $0x50] sm:$0xff]
      %v493 = vld [vmem:[%s419 + $0x58] sm:$0xff]
      %v494 = vld [vmem:[%s419 + $0x60] sm:$0xff]
      %v495 = vld [vmem:[%s419 + $0x68] sm:$0xff]
      %v496 = vld [vmem:[%s419 + $0x70] sm:$0xff]
      %v497 = vld [vmem:[%s419 + $0x78] sm:$0xff]
      %v498 = vld [vmem:[%s419 + $0x80] sm:$0xff]
      %v499 = vld [vmem:[%s419 + $0x88] sm:$0xff]
      %518 = vrot.lane.b32.xlu0 %v482, 64
      %v519 = vpop.permute.xlu0 %518
      %520 = vrot.lane.b32.xlu0 %v483, 64
      %v521 = vpop.permute.xlu0 %520
      %522 = vrot.lane.b32.xlu0 %v484, 64
      %v523 = vpop.permute.xlu0 %522
      %524 = vrot.lane.b32.xlu0 %v485, 64
      %v525 = vpop.permute.xlu0 %524
      %526 = vrot.lane.b32.xlu0 %v486, 64
      %v527 = vpop.permute.xlu0 %526
      %528 = vrot.lane.b32.xlu0 %v487, 64
      %v529 = vpop.permute.xlu0 %528
      %530 = vrot.lane.b32.xlu0 %v488, 64
      %v531 = vpop.permute.xlu0 %530
      %532 = vrot.lane.b32.xlu0 %v489, 64
      %v533 = vpop.permute.xlu0 %532
      %534 = vrot.lane.b32.xlu0 %v490, 64
      %v535 = vpop.permute.xlu0 %534
      %536 = vrot.lane.b32.xlu0 %v491, 64
      %v537 = vpop.permute.xlu0 %536
      %538 = vrot.lane.b32.xlu0 %v492, 64
      %v539 = vpop.permute.xlu0 %538
      %540 = vrot.lane.b32.xlu0 %v493, 64
      %v541 = vpop.permute.xlu0 %540
      %542 = vrot.lane.b32.xlu0 %v494, 64
      %v543 = vpop.permute.xlu0 %542
      %544 = vrot.lane.b32.xlu0 %v495, 64
      %v545 = vpop.permute.xlu0 %544
      %546 = vrot.lane.b32.xlu0 %v496, 64
      %v547 = vpop.permute.xlu0 %546
      %548 = vrot.lane.b32.xlu0 %v497, 64
      %v549 = vpop.permute.xlu0 %548
      %550 = vrot.lane.b32.xlu0 %v498, 64
      %v551 = vpop.permute.xlu0 %550
      %552 = vrot.lane.b32.xlu0 %v499, 64
      %v553 = vpop.permute.xlu0 %552
      %vm572 = vcmask 654848
      %573 = vst.msk [vmem:[#allocation2 + $0x10] sm:$0xff] %vm572, %v519
      %574 = vst.msk [vmem:[#allocation2 + $0x18] sm:$0xff] %vm572, %v521
      %575 = vst.msk [vmem:[#allocation2 + $0x20] sm:$0xff] %vm572, %v523
      %576 = vst.msk [vmem:[#allocation2 + $0x28] sm:$0xff] %vm572, %v525
      %577 = vst.msk [vmem:[#allocation2 + $0x30] sm:$0xff] %vm572, %v527
      %578 = vst.msk [vmem:[#allocation2 + $0x38] sm:$0xff] %vm572, %v529
      %579 = vst.msk [vmem:[#allocation2 + $0x40] sm:$0xff] %vm572, %v531
      %580 = vst.msk [vmem:[#allocation2 + $0x48] sm:$0xff] %vm572, %v533
      %581 = vst.msk [vmem:[#allocation2 + $0x50] sm:$0xff] %vm572, %v535
      %582 = vst.msk [vmem:[#allocation2 + $0x58] sm:$0xff] %vm572, %v537
      %583 = vst.msk [vmem:[#allocation2 + $0x60] sm:$0xff] %vm572, %v539
      %584 = vst.msk [vmem:[#allocation2 + $0x68] sm:$0xff] %vm572, %v541
      %585 = vst.msk [vmem:[#allocation2 + $0x70] sm:$0xff] %vm572, %v543
      %586 = vst.msk [vmem:[#allocation2 + $0x78] sm:$0xff] %vm572, %v545
      %587 = vst.msk [vmem:[#allocation2 + $0x80] sm:$0xff] %vm572, %v547
      %588 = vst.msk [vmem:[#allocation2 + $0x88] sm:$0xff] %vm572, %v549
      %589 = vst.msk [vmem:[#allocation2 + $0x90] sm:$0xff] %vm572, %v551
      %590 = vst.msk [vmem:[#allocation2 + $0x98] sm:$0xff] %vm572, %v553
      %v591 = vld [vmem:[%s424] sm:$0xff]
      %v592 = vld [vmem:[%s424 + $0x8] sm:$0xff]
      %v593 = vld [vmem:[%s424 + $0x10] sm:$0xff]
      %v594 = vld [vmem:[%s424 + $0x18] sm:$0xff]
      %v595 = vld [vmem:[%s424 + $0x20] sm:$0xff]
      %v596 = vld [vmem:[%s424 + $0x28] sm:$0xff]
      %v597 = vld [vmem:[%s424 + $0x30] sm:$0xff]
      %v598 = vld [vmem:[%s424 + $0x38] sm:$0xff]
      %v599 = vld [vmem:[%s424 + $0x40] sm:$0xff]
      %v600 = vld [vmem:[%s424 + $0x48] sm:$0xff]
      %v601 = vld [vmem:[%s424 + $0x50] sm:$0xff]
      %v602 = vld [vmem:[%s424 + $0x58] sm:$0xff]
      %v603 = vld [vmem:[%s424 + $0x60] sm:$0xff]
      %v604 = vld [vmem:[%s424 + $0x68] sm:$0xff]
      %v605 = vld [vmem:[%s424 + $0x70] sm:$0xff]
      %v606 = vld [vmem:[%s424 + $0x78] sm:$0xff]
      %v607 = vld [vmem:[%s424 + $0x80] sm:$0xff]
      %v608 = vld [vmem:[%s424 + $0x88] sm:$0xff]
      %627 = vrot.lane.b32.xlu0 %v591, 80
      %v628 = vpop.permute.xlu0 %627
      %629 = vrot.lane.b32.xlu0 %v592, 80
      %v630 = vpop.permute.xlu0 %629
      %631 = vrot.lane.b32.xlu0 %v593, 80
      %v632 = vpop.permute.xlu0 %631
      %633 = vrot.lane.b32.xlu0 %v594, 80
      %v634 = vpop.permute.xlu0 %633
      %635 = vrot.lane.b32.xlu0 %v595, 80
      %v636 = vpop.permute.xlu0 %635
      %637 = vrot.lane.b32.xlu0 %v596, 80
      %v638 = vpop.permute.xlu0 %637
      %639 = vrot.lane.b32.xlu0 %v597, 80
      %v640 = vpop.permute.xlu0 %639
      %641 = vrot.lane.b32.xlu0 %v598, 80
      %v642 = vpop.permute.xlu0 %641
      %643 = vrot.lane.b32.xlu0 %v599, 80
      %v644 = vpop.permute.xlu0 %643
      %645 = vrot.lane.b32.xlu0 %v600, 80
      %v646 = vpop.permute.xlu0 %645
      %647 = vrot.lane.b32.xlu0 %v601, 80
      %v648 = vpop.permute.xlu0 %647
      %649 = vrot.lane.b32.xlu0 %v602, 80
      %v650 = vpop.permute.xlu0 %649
      %651 = vrot.lane.b32.xlu0 %v603, 80
      %v652 = vpop.permute.xlu0 %651
      %653 = vrot.lane.b32.xlu0 %v604, 80
      %v654 = vpop.permute.xlu0 %653
      %655 = vrot.lane.b32.xlu0 %v605, 80
      %v656 = vpop.permute.xlu0 %655
      %657 = vrot.lane.b32.xlu0 %v606, 80
      %v658 = vpop.permute.xlu0 %657
      %659 = vrot.lane.b32.xlu0 %v607, 80
      %v660 = vpop.permute.xlu0 %659
      %661 = vrot.lane.b32.xlu0 %v608, 80
      %v662 = vpop.permute.xlu0 %661
      %vm681 = vcmask 786048
      %682 = vst.msk [vmem:[#allocation2 + $0x10] sm:$0xff] %vm681, %v628
      %683 = vst.msk [vmem:[#allocation2 + $0x18] sm:$0xff] %vm681, %v630
      %684 = vst.msk [vmem:[#allocation2 + $0x20] sm:$0xff] %vm681, %v632
      %685 = vst.msk [vmem:[#allocation2 + $0x28] sm:$0xff] %vm681, %v634
      %686 = vst.msk [vmem:[#allocation2 + $0x30] sm:$0xff] %vm681, %v636
      %687 = vst.msk [vmem:[#allocation2 + $0x38] sm:$0xff] %vm681, %v638
      %688 = vst.msk [vmem:[#allocation2 + $0x40] sm:$0xff] %vm681, %v640
      %689 = vst.msk [vmem:[#allocation2 + $0x48] sm:$0xff] %vm681, %v642
      %690 = vst.msk [vmem:[#allocation2 + $0x50] sm:$0xff] %vm681, %v644
      %691 = vst.msk [vmem:[#allocation2 + $0x58] sm:$0xff] %vm681, %v646
      %692 = vst.msk [vmem:[#allocation2 + $0x60] sm:$0xff] %vm681, %v648
      %693 = vst.msk [vmem:[#allocation2 + $0x68] sm:$0xff] %vm681, %v650
      %694 = vst.msk [vmem:[#allocation2 + $0x70] sm:$0xff] %vm681, %v652
      %695 = vst.msk [vmem:[#allocation2 + $0x78] sm:$0xff] %vm681, %v654
      %696 = vst.msk [vmem:[#allocation2 + $0x80] sm:$0xff] %vm681, %v656
      %697 = vst.msk [vmem:[#allocation2 + $0x88] sm:$0xff] %vm681, %v658
      %698 = vst.msk [vmem:[#allocation2 + $0x90] sm:$0xff] %vm681, %v660
      %699 = vst.msk [vmem:[#allocation2 + $0x98] sm:$0xff] %vm681, %v662
      %v700 = vld [vmem:[%s429] sm:$0xff]
      %v701 = vld [vmem:[%s429 + $0x8] sm:$0xff]
      %v702 = vld [vmem:[%s429 + $0x10] sm:$0xff]
      %v703 = vld [vmem:[%s429 + $0x18] sm:$0xff]
      %v704 = vld [vmem:[%s429 + $0x20] sm:$0xff]
      %v705 = vld [vmem:[%s429 + $0x28] sm:$0xff]
      %v706 = vld [vmem:[%s429 + $0x30] sm:$0xff]
      %v707 = vld [vmem:[%s429 + $0x38] sm:$0xff]
      %v708 = vld [vmem:[%s429 + $0x40] sm:$0xff]
      %v709 = vld [vmem:[%s429 + $0x48] sm:$0xff]
      %v710 = vld [vmem:[%s429 + $0x50] sm:$0xff]
      %v711 = vld [vmem:[%s429 + $0x58] sm:$0xff]
      %v712 = vld [vmem:[%s429 + $0x60] sm:$0xff]
      %v713 = vld [vmem:[%s429 + $0x68] sm:$0xff]
      %v714 = vld [vmem:[%s429 + $0x70] sm:$0xff]
      %v715 = vld [vmem:[%s429 + $0x78] sm:$0xff]
      %v716 = vld [vmem:[%s429 + $0x80] sm:$0xff]
      %v717 = vld [vmem:[%s429 + $0x88] sm:$0xff]
      %736 = vrot.lane.b32.xlu0 %v700, 96
      %v737 = vpop.permute.xlu0 %736
      %738 = vrot.lane.b32.xlu0 %v701, 96
      %v739 = vpop.permute.xlu0 %738
      %740 = vrot.lane.b32.xlu0 %v702, 96
      %v741 = vpop.permute.xlu0 %740
      %742 = vrot.lane.b32.xlu0 %v703, 96
      %v743 = vpop.permute.xlu0 %742
      %744 = vrot.lane.b32.xlu0 %v704, 96
      %v745 = vpop.permute.xlu0 %744
      %746 = vrot.lane.b32.xlu0 %v705, 96
      %v747 = vpop.permute.xlu0 %746
      %748 = vrot.lane.b32.xlu0 %v706, 96
      %v749 = vpop.permute.xlu0 %748
      %750 = vrot.lane.b32.xlu0 %v707, 96
      %v751 = vpop.permute.xlu0 %750
      %752 = vrot.lane.b32.xlu0 %v708, 96
      %v753 = vpop.permute.xlu0 %752
      %754 = vrot.lane.b32.xlu0 %v709, 96
      %v755 = vpop.permute.xlu0 %754
      %756 = vrot.lane.b32.xlu0 %v710, 96
      %v757 = vpop.permute.xlu0 %756
      %758 = vrot.lane.b32.xlu0 %v711, 96
      %v759 = vpop.permute.xlu0 %758
      %760 = vrot.lane.b32.xlu0 %v712, 96
      %v761 = vpop.permute.xlu0 %760
      %762 = vrot.lane.b32.xlu0 %v713, 96
      %v763 = vpop.permute.xlu0 %762
      %764 = vrot.lane.b32.xlu0 %v714, 96
      %v765 = vpop.permute.xlu0 %764
      %766 = vrot.lane.b32.xlu0 %v715, 96
      %v767 = vpop.permute.xlu0 %766
      %768 = vrot.lane.b32.xlu0 %v716, 96
      %v769 = vpop.permute.xlu0 %768
      %770 = vrot.lane.b32.xlu0 %v717, 96
      %v771 = vpop.permute.xlu0 %770
      %vm790 = vcmask 917248
      %791 = vst.msk [vmem:[#allocation2 + $0x10] sm:$0xff] %vm790, %v737
      %792 = vst.msk [vmem:[#allocation2 + $0x18] sm:$0xff] %vm790, %v739
      %793 = vst.msk [vmem:[#allocation2 + $0x20] sm:$0xff] %vm790, %v741
      %794 = vst.msk [vmem:[#allocation2 + $0x28] sm:$0xff] %vm790, %v743
      %795 = vst.msk [vmem:[#allocation2 + $0x30] sm:$0xff] %vm790, %v745
      %796 = vst.msk [vmem:[#allocation2 + $0x38] sm:$0xff] %vm790, %v747
      %797 = vst.msk [vmem:[#allocation2 + $0x40] sm:$0xff] %vm790, %v749
      %798 = vst.msk [vmem:[#allocation2 + $0x48] sm:$0xff] %vm790, %v751
      %799 = vst.msk [vmem:[#allocation2 + $0x50] sm:$0xff] %vm790, %v753
      %800 = vst.msk [vmem:[#allocation2 + $0x58] sm:$0xff] %vm790, %v755
      %801 = vst.msk [vmem:[#allocation2 + $0x60] sm:$0xff] %vm790, %v757
      %802 = vst.msk [vmem:[#allocation2 + $0x68] sm:$0xff] %vm790, %v759
      %803 = vst.msk [vmem:[#allocation2 + $0x70] sm:$0xff] %vm790, %v761
      %804 = vst.msk [vmem:[#allocation2 + $0x78] sm:$0xff] %vm790, %v763
      %805 = vst.msk [vmem:[#allocation2 + $0x80] sm:$0xff] %vm790, %v765
      %806 = vst.msk [vmem:[#allocation2 + $0x88] sm:$0xff] %vm790, %v767
      %807 = vst.msk [vmem:[#allocation2 + $0x90] sm:$0xff] %vm790, %v769
      %808 = vst.msk [vmem:[#allocation2 + $0x98] sm:$0xff] %vm790, %v771
      %v809 = vld [vmem:[%s434] sm:$0xff]
      %v810 = vld [vmem:[%s434 + $0x8] sm:$0xff]
      %v811 = vld [vmem:[%s434 + $0x10] sm:$0xff]
      %v812 = vld [vmem:[%s434 + $0x18] sm:$0xff]
      %v813 = vld [vmem:[%s434 + $0x20] sm:$0xff]
      %v814 = vld [vmem:[%s434 + $0x28] sm:$0xff]
      %v815 = vld [vmem:[%s434 + $0x30] sm:$0xff]
      %v816 = vld [vmem:[%s434 + $0x38] sm:$0xff]
      %v817 = vld [vmem:[%s434 + $0x40] sm:$0xff]
      %v818 = vld [vmem:[%s434 + $0x48] sm:$0xff]
      %v819 = vld [vmem:[%s434 + $0x50] sm:$0xff]
      %v820 = vld [vmem:[%s434 + $0x58] sm:$0xff]
      %v821 = vld [vmem:[%s434 + $0x60] sm:$0xff]
      %v822 = vld [vmem:[%s434 + $0x68] sm:$0xff]
      %v823 = vld [vmem:[%s434 + $0x70] sm:$0xff]
      %v824 = vld [vmem:[%s434 + $0x78] sm:$0xff]
      %v825 = vld [vmem:[%s434 + $0x80] sm:$0xff]
      %v826 = vld [vmem:[%s434 + $0x88] sm:$0xff]
      %845 = vrot.lane.b32.xlu0 %v809, 112
      %v846 = vpop.permute.xlu0 %845
      %847 = vrot.lane.b32.xlu0 %v810, 112
      %v848 = vpop.permute.xlu0 %847
      %849 = vrot.lane.b32.xlu0 %v811, 112
      %v850 = vpop.permute.xlu0 %849
      %851 = vrot.lane.b32.xlu0 %v812, 112
      %v852 = vpop.permute.xlu0 %851
      %853 = vrot.lane.b32.xlu0 %v813, 112
      %v854 = vpop.permute.xlu0 %853
      %855 = vrot.lane.b32.xlu0 %v814, 112
      %v856 = vpop.permute.xlu0 %855
      %857 = vrot.lane.b32.xlu0 %v815, 112
      %v858 = vpop.permute.xlu0 %857
      %859 = vrot.lane.b32.xlu0 %v816, 112
      %v860 = vpop.permute.xlu0 %859
      %861 = vrot.lane.b32.xlu0 %v817, 112
      %v862 = vpop.permute.xlu0 %861
      %863 = vrot.lane.b32.xlu0 %v818, 112
      %v864 = vpop.permute.xlu0 %863
      %865 = vrot.lane.b32.xlu0 %v819, 112
      %v866 = vpop.permute.xlu0 %865
      %867 = vrot.lane.b32.xlu0 %v820, 112
      %v868 = vpop.permute.xlu0 %867
      %869 = vrot.lane.b32.xlu0 %v821, 112
      %v870 = vpop.permute.xlu0 %869
      %871 = vrot.lane.b32.xlu0 %v822, 112
      %v872 = vpop.permute.xlu0 %871
      %873 = vrot.lane.b32.xlu0 %v823, 112
      %v874 = vpop.permute.xlu0 %873
      %875 = vrot.lane.b32.xlu0 %v824, 112
      %v876 = vpop.permute.xlu0 %875
      %877 = vrot.lane.b32.xlu0 %v825, 112
      %v878 = vpop.permute.xlu0 %877
      %879 = vrot.lane.b32.xlu0 %v826, 112
      %v880 = vpop.permute.xlu0 %879
      %vm899 = vcmask 1048448
      %900 = vst.msk [vmem:[#allocation2 + $0x10] sm:$0xff] %vm899, %v846
      %901 = vst.msk [vmem:[#allocation2 + $0x18] sm:$0xff] %vm899, %v848
      %902 = vst.msk [vmem:[#allocation2 + $0x20] sm:$0xff] %vm899, %v850
      %903 = vst.msk [vmem:[#allocation2 + $0x28] sm:$0xff] %vm899, %v852
      %904 = vst.msk [vmem:[#allocation2 + $0x30] sm:$0xff] %vm899, %v854
      %905 = vst.msk [vmem:[#allocation2 + $0x38] sm:$0xff] %vm899, %v856
      %906 = vst.msk [vmem:[#allocation2 + $0x40] sm:$0xff] %vm899, %v858
      %907 = vst.msk [vmem:[#allocation2 + $0x48] sm:$0xff] %vm899, %v860
      %908 = vst.msk [vmem:[#allocation2 + $0x50] sm:$0xff] %vm899, %v862
      %909 = vst.msk [vmem:[#allocation2 + $0x58] sm:$0xff] %vm899, %v864
      %910 = vst.msk [vmem:[#allocation2 + $0x60] sm:$0xff] %vm899, %v866
      %911 = vst.msk [vmem:[#allocation2 + $0x68] sm:$0xff] %vm899, %v868
      %912 = vst.msk [vmem:[#allocation2 + $0x70] sm:$0xff] %vm899, %v870
      %913 = vst.msk [vmem:[#allocation2 + $0x78] sm:$0xff] %vm899, %v872
      %914 = vst.msk [vmem:[#allocation2 + $0x80] sm:$0xff] %vm899, %v874
      %915 = vst.msk [vmem:[#allocation2 + $0x88] sm:$0xff] %vm899, %v876
      %916 = vst.msk [vmem:[#allocation2 + $0x90] sm:$0xff] %vm899, %v878
      %917 = vst.msk [vmem:[#allocation2 + $0x98] sm:$0xff] %vm899, %v880
      %v918 = vld [vmem:[#allocation2 + $0x3] sm:$0xff]
      %v919 = vld [vmem:[#allocation2 + $0xb] sm:$0xff]
      %v920 = vld [vmem:[#allocation2 + $0x13] sm:$0xff]
      %v921 = vld [vmem:[#allocation2 + $0x1b] sm:$0xff]
      %v922 = vld [vmem:[#allocation2 + $0x23] sm:$0xff]
      %v923 = vld [vmem:[#allocation2 + $0x2b] sm:$0xff]
      %v924 = vld [vmem:[#allocation2 + $0x33] sm:$0xff]
      %v925 = vld [vmem:[#allocation2 + $0x3b] sm:$0xff]
      %v926 = vld [vmem:[#allocation2 + $0x43] sm:$0xff]
      %v927 = vld [vmem:[#allocation2 + $0x4b] sm:$0xff]
      %v928 = vld [vmem:[#allocation2 + $0x53] sm:$0xff]
      %v929 = vld [vmem:[#allocation2 + $0x5b] sm:$0xff]
      %v930 = vld [vmem:[#allocation2 + $0x63] sm:$0xff]
      %v931 = vld [vmem:[#allocation2 + $0x6b] sm:$0xff]
      %v932 = vld [vmem:[#allocation2 + $0x73] sm:$0xff]
      %v933 = vld [vmem:[#allocation2 + $0x7b] sm:$0xff]
      %v934 = vld [vmem:[#allocation2 + $0x83] sm:$0xff]
      %v935 = vld [vmem:[#allocation2 + $0x8b] sm:$0xff]
      %v936 = vpack.c.bf16 %v919, %v918
      %v937 = vpack.c.bf16 %v921, %v920
      %v938 = vpack.c.bf16 %v923, %v922
      %v939 = vpack.c.bf16 %v925, %v924
      %v940 = vpack.c.bf16 %v927, %v926
      %v941 = vpack.c.bf16 %v929, %v928
      %v942 = vpack.c.bf16 %v931, %v930
      %v943 = vpack.c.bf16 %v933, %v932
      %v944 = vpack.c.bf16 %v935, %v934
      %v945 = vld [vmem:[%s6] sm:$0xf]
      %v946 = vld [vmem:[%s6 + $0x4] sm:$0xf]
      %v947 = vld [vmem:[%s6 + $0x8] sm:$0xf]
      %v948 = vld [vmem:[%s6 + $0xc] sm:$0xf]
      %v949 = vld [vmem:[%s6 + $0x10] sm:$0xf]
      %v950 = vld [vmem:[%s6 + $0x14] sm:$0xf]
      %v951 = vld [vmem:[%s6 + $0x18] sm:$0xf]
      %v952 = vld [vmem:[%s6 + $0x1c] sm:$0xf]
      %v953 = vld [vmem:[%s6 + $0x20] sm:$0xf]
      %v954 = vld [vmem:[%s6 + $0x24] sm:$0xf]
      %v955 = vld [vmem:[%s6 + $0x28] sm:$0xf]
      %v956 = vld [vmem:[%s6 + $0x2c] sm:$0xf]
      %v957 = vld [vmem:[%s6 + $0x30] sm:$0xf]
      %v958 = vld [vmem:[%s6 + $0x34] sm:$0xf]
      %v959 = vld [vmem:[%s6 + $0x38] sm:$0xf]
      %v960 = vld [vmem:[%s6 + $0x3c] sm:$0xf]
      %v977 = vunpack.c.l.b16 %v945
      %v978 = vunpack.c.l.b16 %v946
      %v979 = vunpack.c.l.b16 %v947
      %v980 = vunpack.c.l.b16 %v948
      %v981 = vunpack.c.l.b16 %v949
      %v982 = vunpack.c.l.b16 %v950
      %v983 = vunpack.c.l.b16 %v951
      %v984 = vunpack.c.l.b16 %v952
      %v985 = vunpack.c.l.b16 %v953
      %v986 = vunpack.c.l.b16 %v954
      %v987 = vunpack.c.l.b16 %v955
      %v988 = vunpack.c.l.b16 %v956
      %v989 = vunpack.c.l.b16 %v957
      %v990 = vunpack.c.l.b16 %v958
      %v991 = vunpack.c.l.b16 %v959
      %v992 = vunpack.c.l.b16 %v960
      %v993 = vpack.c.b16 %v978, %v977
      %v994 = vpack.c.b16 %v980, %v979
      %v995 = vpack.c.b16 %v982, %v981
      %v996 = vpack.c.b16 %v984, %v983
      %v997 = vpack.c.b16 %v986, %v985
      %v998 = vpack.c.b16 %v988, %v987
      %v999 = vpack.c.b16 %v990, %v989
      %v1000 = vpack.c.b16 %v992, %v991
      %1009 = vmatprep.subr.bf16.mxu0 0
      %1010 = vmatpush1.bf16.msra.mxu0 %v993
      %1011 = vmatprep.subr.bf16.mxu0 0
      %1012 = vmatpush1.bf16.msra.mxu0 %v994
      %1013 = vmatprep.subr.bf16.mxu0 0
      %1014 = vmatpush1.bf16.msra.mxu0 %v995
      %1015 = vmatprep.subr.bf16.mxu0 0
      %1016 = vmatpush1.bf16.msra.mxu0 %v996
      %1017 = vmatprep.subr.bf16.mxu0 0
      %1018 = vmatpush1.bf16.msra.mxu0 %v997
      %1019 = vmatprep.subr.bf16.mxu0 0
      %1020 = vmatpush1.bf16.msra.mxu0 %v998
      %1021 = vmatprep.subr.bf16.mxu0 0
      %1022 = vmatpush1.bf16.msra.mxu0 %v999
      %1023 = vmatprep.subr.bf16.mxu0 0
      %1024 = vmatpush1.bf16.msra.mxu0 %v1000
      %1025 = vmatprep.subr.bf16.mxu0 0
      %1026 = vmatpush1.bf16.msra.mxu0 0
      %1027 = vmatprep.subr.bf16.mxu0 0
      %1028 = vmatpush1.bf16.msra.mxu0 0
      %1029 = vmatprep.subr.bf16.mxu0 0
      %1030 = vmatpush1.bf16.msra.mxu0 0
      %1031 = vmatprep.subr.bf16.mxu0 0
      %1032 = vmatpush1.bf16.msra.mxu0 0
      %1033 = vmatprep.subr.bf16.mxu0 0
      %1034 = vmatpush1.bf16.msra.mxu0 0
      %1035 = vmatprep.subr.bf16.mxu0 0
      %1036 = vmatpush1.bf16.msra.mxu0 0
      %1037 = vmatprep.subr.bf16.mxu0 0
      %1038 = vmatpush1.bf16.msra.mxu0 0
      %1039 = vmatprep.subr.bf16.mxu0 0
      %1040 = vmatpush1.bf16.msra.mxu0 0
      %1041 = vmatprep.mubr.bf16.mxu0 0
      %1042 = vmatmul.mubr.bf16.gmra.mrb[0].mxu0 %v936
      %v1043 = vpop.f32.mrb[0].mxu0
      %v1044 = vadd.f32 0.0, %v1043
      %v1045 = vpop.f32.mrb[0].mxu0
      %v1046 = vpop.f32.mrb[0].mxu0
      %v1047 = vadd.f32 0.0, %v1046
      %v1048 = vpop.f32.mrb[0].mxu0
      %1049 = vmatprep.mubr.bf16.mxu0 0
      %1050 = vmatmul.mubr.bf16.gmra.mrb[0].mxu0 %v937
      %v1051 = vpop.f32.mrb[0].mxu0
      %v1052 = vadd.f32 0.0, %v1051
      %v1053 = vpop.f32.mrb[0].mxu0
      %v1054 = vpop.f32.mrb[0].mxu0
      %v1055 = vadd.f32 0.0, %v1054
      %v1056 = vpop.f32.mrb[0].mxu0
      %1057 = vmatprep.mubr.bf16.mxu0 0
      %1058 = vmatmul.mubr.bf16.gmra.mrb[0].mxu0 %v938
      %v1059 = vpop.f32.mrb[0].mxu0
      %v1060 = vadd.f32 0.0, %v1059
      %v1061 = vpop.f32.mrb[0].mxu0
      %v1062 = vpop.f32.mrb[0].mxu0
      %v1063 = vadd.f32 0.0, %v1062
      %v1064 = vpop.f32.mrb[0].mxu0
      %1065 = vmatprep.mubr.bf16.mxu0 0
      %1066 = vmatmul.mubr.bf16.gmra.mrb[0].mxu0 %v939
      %v1067 = vpop.f32.mrb[0].mxu0
      %v1068 = vadd.f32 0.0, %v1067
      %v1069 = vpop.f32.mrb[0].mxu0
      %v1070 = vpop.f32.mrb[0].mxu0
      %v1071 = vadd.f32 0.0, %v1070
      %v1072 = vpop.f32.mrb[0].mxu0
      %1073 = vmatprep.mubr.bf16.mxu0 0
      %1074 = vmatmul.mubr.bf16.gmra.mrb[0].mxu0 %v940
      %v1075 = vpop.f32.mrb[0].mxu0
      %v1076 = vadd.f32 0.0, %v1075
      %v1077 = vpop.f32.mrb[0].mxu0
      %v1078 = vpop.f32.mrb[0].mxu0
      %v1079 = vadd.f32 0.0, %v1078
      %v1080 = vpop.f32.mrb[0].mxu0
      %1081 = vmatprep.mubr.bf16.mxu0 0
      %1082 = vmatmul.mubr.bf16.gmra.mrb[0].mxu0 %v941
      %v1083 = vpop.f32.mrb[0].mxu0
      %v1084 = vadd.f32 0.0, %v1083
      %v1085 = vpop.f32.mrb[0].mxu0
      %v1086 = vpop.f32.mrb[0].mxu0
      %v1087 = vadd.f32 0.0, %v1086
      %v1088 = vpop.f32.mrb[0].mxu0
      %1089 = vmatprep.mubr.bf16.mxu0 0
      %1090 = vmatmul.mubr.bf16.gmra.mrb[0].mxu0 %v942
      %v1091 = vpop.f32.mrb[0].mxu0
      %v1092 = vadd.f32 0.0, %v1091
      %v1093 = vpop.f32.mrb[0].mxu0
      %v1094 = vpop.f32.mrb[0].mxu0
      %v1095 = vadd.f32 0.0, %v1094
      %v1096 = vpop.f32.mrb[0].mxu0
      %1097 = vmatprep.mubr.bf16.mxu0 0
      %1098 = vmatmul.mubr.bf16.gmra.mrb[0].mxu0 %v943
      %v1099 = vpop.f32.mrb[0].mxu0
      %v1100 = vadd.f32 0.0, %v1099
      %v1101 = vpop.f32.mrb[0].mxu0
      %v1102 = vpop.f32.mrb[0].mxu0
      %v1103 = vadd.f32 0.0, %v1102
      %v1104 = vpop.f32.mrb[0].mxu0
      %1105 = vmatprep.mubr.bf16.mxu0 0
      %1106 = vmatmul.mubr.bf16.gmra.mrb[0].mxu0 %v944
      %v1107 = vpop.f32.mrb[0].mxu0
      %v1108 = vadd.f32 0.0, %v1107
      %v1109 = vpop.f32.mrb[0].mxu0
      %v1110 = vpop.f32.mrb[0].mxu0
      %v1111 = vadd.f32 0.0, %v1110
      %v1112 = vpop.f32.mrb[0].mxu0
      %1113 = vdwg.mxu0
      %v1114 = vld [vmem:[%s5] sm:$0xff]
      %v1115 = vld [vmem:[%s5 + $0x8] sm:$0xff]
      %v1116 = vld [vmem:[%s5 + $0x10] sm:$0xff]
      %v1117 = vld [vmem:[%s5 + $0x18] sm:$0xff]
      %v1118 = vld [vmem:[%s5 + $0x20] sm:$0xff]
      %v1119 = vld [vmem:[%s5 + $0x28] sm:$0xff]
      %v1120 = vld [vmem:[%s5 + $0x30] sm:$0xff]
      %v1121 = vld [vmem:[%s5 + $0x38] sm:$0xff]
      %v1122 = vld [vmem:[%s5 + $0x40] sm:$0xff]
      %v1123 = vld [vmem:[%s5 + $0x48] sm:$0xff]
      %v1124 = vld [vmem:[%s5 + $0x50] sm:$0xff]
      %v1125 = vld [vmem:[%s5 + $0x58] sm:$0xff]
      %v1126 = vld [vmem:[%s5 + $0x60] sm:$0xff]
      %v1127 = vld [vmem:[%s5 + $0x68] sm:$0xff]
      %v1128 = vld [vmem:[%s5 + $0x70] sm:$0xff]
      %v1129 = vld [vmem:[%s5 + $0x78] sm:$0xff]
      %v1130 = vld [vmem:[%s5 + $0x80] sm:$0xff]
      %v1131 = vld [vmem:[%s5 + $0x88] sm:$0xff]
      %1133 = vset.pattern.permute.xlu0 0
      %1134 = vperm.xlu0 %1133, %v1114
      %v1135 = vpop.permute.xlu0 %1134
      %1138 = vset.pattern.permute.xlu0 0
      %1139 = vperm.xlu0 %1138, %v1115
      %v1140 = vpop.permute.xlu0 %1139
      %1143 = vset.pattern.permute.xlu0 0
      %1144 = vperm.xlu0 %1143, %v1116
      %v1145 = vpop.permute.xlu0 %1144
      %1148 = vset.pattern.permute.xlu0 0
      %1149 = vperm.xlu0 %1148, %v1117
      %v1150 = vpop.permute.xlu0 %1149
      %1153 = vset.pattern.permute.xlu0 0
      %1154 = vperm.xlu0 %1153, %v1118
      %v1155 = vpop.permute.xlu0 %1154
      %1158 = vset.pattern.permute.xlu0 0
      %1159 = vperm.xlu0 %1158, %v1119
      %v1160 = vpop.permute.xlu0 %1159
      %1163 = vset.pattern.permute.xlu0 0
      %1164 = vperm.xlu0 %1163, %v1120
      %v1165 = vpop.permute.xlu0 %1164
      %1168 = vset.pattern.permute.xlu0 0
      %1169 = vperm.xlu0 %1168, %v1121
      %v1170 = vpop.permute.xlu0 %1169
      %1173 = vset.pattern.permute.xlu0 0
      %1174 = vperm.xlu0 %1173, %v1122
      %v1175 = vpop.permute.xlu0 %1174
      %1178 = vset.pattern.permute.xlu0 0
      %1179 = vperm.xlu0 %1178, %v1123
      %v1180 = vpop.permute.xlu0 %1179
      %1183 = vset.pattern.permute.xlu0 0
      %1184 = vperm.xlu0 %1183, %v1124
      %v1185 = vpop.permute.xlu0 %1184
      %1188 = vset.pattern.permute.xlu0 0
      %1189 = vperm.xlu0 %1188, %v1125
      %v1190 = vpop.permute.xlu0 %1189
      %1193 = vset.pattern.permute.xlu0 0
      %1194 = vperm.xlu0 %1193, %v1126
      %v1195 = vpop.permute.xlu0 %1194
      %1198 = vset.pattern.permute.xlu0 0
      %1199 = vperm.xlu0 %1198, %v1127
      %v1200 = vpop.permute.xlu0 %1199
      %1203 = vset.pattern.permute.xlu0 0
      %1204 = vperm.xlu0 %1203, %v1128
      %v1205 = vpop.permute.xlu0 %1204
      %1208 = vset.pattern.permute.xlu0 0
      %1209 = vperm.xlu0 %1208, %v1129
      %v1210 = vpop.permute.xlu0 %1209
      %1213 = vset.pattern.permute.xlu0 0
      %1214 = vperm.xlu0 %1213, %v1130
      %v1215 = vpop.permute.xlu0 %1214
      %1218 = vset.pattern.permute.xlu0 0
      %1219 = vperm.xlu0 %1218, %v1131
      %v1220 = vpop.permute.xlu0 %1219
      %v1222 = vmul.f32 %v1044, %v1135
      %v1223 = vmul.f32 %v1047, %v1140
      %v1224 = vmul.f32 %v1052, %v1145
      %v1225 = vmul.f32 %v1055, %v1150
      %v1226 = vmul.f32 %v1060, %v1155
      %v1227 = vmul.f32 %v1063, %v1160
      %v1228 = vmul.f32 %v1068, %v1165
      %v1229 = vmul.f32 %v1071, %v1170
      %v1230 = vmul.f32 %v1076, %v1175
      %v1231 = vmul.f32 %v1079, %v1180
      %v1232 = vmul.f32 %v1084, %v1185
      %v1233 = vmul.f32 %v1087, %v1190
      %v1234 = vmul.f32 %v1092, %v1195
      %v1235 = vmul.f32 %v1095, %v1200
      %v1236 = vmul.f32 %v1100, %v1205
      %v1237 = vmul.f32 %v1103, %v1210
      %v1238 = vmul.f32 %v1108, %v1215
      %v1239 = vmul.f32 %v1111, %v1220
      %v1240 = vadd.f32 %v1222, 0.0
      %v1241 = vadd.f32 %v1223, 0.0
      %v1242 = vadd.f32 %v1224, 0.0
      %v1243 = vadd.f32 %v1225, 0.0
      %v1244 = vadd.f32 %v1226, 0.0
      %v1245 = vadd.f32 %v1227, 0.0
      %v1246 = vadd.f32 %v1228, 0.0
      %v1247 = vadd.f32 %v1229, 0.0
      %v1248 = vadd.f32 %v1230, 0.0
      %v1249 = vadd.f32 %v1231, 0.0
      %v1250 = vadd.f32 %v1232, 0.0
      %v1251 = vadd.f32 %v1233, 0.0
      %v1252 = vadd.f32 %v1234, 0.0
      %v1253 = vadd.f32 %v1235, 0.0
      %v1254 = vadd.f32 %v1236, 0.0
      %v1255 = vadd.f32 %v1237, 0.0
      %v1256 = vadd.f32 %v1238, 0.0
      %v1257 = vadd.f32 %v1239, 0.0
      %v1258 = vld [vmem:[#allocation2 + $0x4] sm:$0xff]
      %v1259 = vld [vmem:[#allocation2 + $0xc] sm:$0xff]
      %v1260 = vld [vmem:[#allocation2 + $0x14] sm:$0xff]
      %v1261 = vld [vmem:[#allocation2 + $0x1c] sm:$0xff]
      %v1262 = vld [vmem:[#allocation2 + $0x24] sm:$0xff]
      %v1263 = vld [vmem:[#allocation2 + $0x2c] sm:$0xff]
      %v1264 = vld [vmem:[#allocation2 + $0x34] sm:$0xff]
      %v1265 = vld [vmem:[#allocation2 + $0x3c] sm:$0xff]
      %v1266 = vld [vmem:[#allocation2 + $0x44] sm:$0xff]
      %v1267 = vld [vmem:[#allocation2 + $0x4c] sm:$0xff]
      %v1268 = vld [vmem:[#allocation2 + $0x54] sm:$0xff]
      %v1269 = vld [vmem:[#allocation2 + $0x5c] sm:$0xff]
      %v1270 = vld [vmem:[#allocation2 + $0x64] sm:$0xff]
      %v1271 = vld [vmem:[#allocation2 + $0x6c] sm:$0xff]
      %v1272 = vld [vmem:[#allocation2 + $0x74] sm:$0xff]
      %v1273 = vld [vmem:[#allocation2 + $0x7c] sm:$0xff]
      %v1274 = vld [vmem:[#allocation2 + $0x84] sm:$0xff]
      %v1275 = vld [vmem:[#allocation2 + $0x8c] sm:$0xff]
      %v1276 = vpack.c.bf16 %v1259, %v1258
      %v1277 = vpack.c.bf16 %v1261, %v1260
      %v1278 = vpack.c.bf16 %v1263, %v1262
      %v1279 = vpack.c.bf16 %v1265, %v1264
      %v1280 = vpack.c.bf16 %v1267, %v1266
      %v1281 = vpack.c.bf16 %v1269, %v1268
      %v1282 = vpack.c.bf16 %v1271, %v1270
      %v1283 = vpack.c.bf16 %v1273, %v1272
      %v1284 = vpack.c.bf16 %v1275, %v1274
      %s1285 = scalar_lea.vmem %s6, 64
      %v1286 = vld [vmem:[%s1285] sm:$0xf]
      %v1287 = vld [vmem:[%s1285 + $0x4] sm:$0xf]
      %v1288 = vld [vmem:[%s1285 + $0x8] sm:$0xf]
      %v1289 = vld [vmem:[%s1285 + $0xc] sm:$0xf]
      %v1290 = vld [vmem:[%s1285 + $0x10] sm:$0xf]
      %v1291 = vld [vmem:[%s1285 + $0x14] sm:$0xf]
      %v1292 = vld [vmem:[%s1285 + $0x18] sm:$0xf]
      %v1293 = vld [vmem:[%s1285 + $0x1c] sm:$0xf]
      %v1294 = vld [vmem:[%s1285 + $0x20] sm:$0xf]
      %v1295 = vld [vmem:[%s1285 + $0x24] sm:$0xf]
      %v1296 = vld [vmem:[%s1285 + $0x28] sm:$0xf]
      %v1297 = vld [vmem:[%s1285 + $0x2c] sm:$0xf]
      %v1298 = vld [vmem:[%s1285 + $0x30] sm:$0xf]
      %v1299 = vld [vmem:[%s1285 + $0x34] sm:$0xf]
      %v1300 = vld [vmem:[%s1285 + $0x38] sm:$0xf]
      %v1301 = vld [vmem:[%s1285 + $0x3c] sm:$0xf]
      %v1318 = vunpack.c.l.b16 %v1286
      %v1319 = vunpack.c.l.b16 %v1287
      %v1320 = vunpack.c.l.b16 %v1288
      %v1321 = vunpack.c.l.b16 %v1289
      %v1322 = vunpack.c.l.b16 %v1290
      %v1323 = vunpack.c.l.b16 %v1291
      %v1324 = vunpack.c.l.b16 %v1292
      %v1325 = vunpack.c.l.b16 %v1293
      %v1326 = vunpack.c.l.b16 %v1294
      %v1327 = vunpack.c.l.b16 %v1295
      %v1328 = vunpack.c.l.b16 %v1296
      %v1329 = vunpack.c.l.b16 %v1297
      %v1330 = vunpack.c.l.b16 %v1298
      %v1331 = vunpack.c.l.b16 %v1299
      %v1332 = vunpack.c.l.b16 %v1300
      %v1333 = vunpack.c.l.b16 %v1301
      %v1334 = vpack.c.b16 %v1319, %v1318
      %v1335 = vpack.c.b16 %v1321, %v1320
      %v1336 = vpack.c.b16 %v1323, %v1322
      %v1337 = vpack.c.b16 %v1325, %v1324
      %v1338 = vpack.c.b16 %v1327, %v1326
      %v1339 = vpack.c.b16 %v1329, %v1328
      %v1340 = vpack.c.b16 %v1331, %v1330
      %v1341 = vpack.c.b16 %v1333, %v1332
      %1350 = vmatprep.subr.bf16.mxu0 0
      %1351 = vmatpush1.bf16.msra.mxu0 %v1334
      %1352 = vmatprep.subr.bf16.mxu0 0
      %1353 = vmatpush1.bf16.msra.mxu0 %v1335
      %1354 = vmatprep.subr.bf16.mxu0 0
      %1355 = vmatpush1.bf16.msra.mxu0 %v1336
      %1356 = vmatprep.subr.bf16.mxu0 0
      %1357 = vmatpush1.bf16.msra.mxu0 %v1337
      %1358 = vmatprep.subr.bf16.mxu0 0
      %1359 = vmatpush1.bf16.msra.mxu0 %v1338
      %1360 = vmatprep.subr.bf16.mxu0 0
      %1361 = vmatpush1.bf16.msra.mxu0 %v1339
      %1362 = vmatprep.subr.bf16.mxu0 0
      %1363 = vmatpush1.bf16.msra.mxu0 %v1340
      %1364 = vmatprep.subr.bf16.mxu0 0
      %1365 = vmatpush1.bf16.msra.mxu0 %v1341
      %1366 = vmatprep.subr.bf16.mxu0 0
      %1367 = vmatpush1.bf16.msra.mxu0 0
      %1368 = vmatprep.subr.bf16.mxu0 0
      %1369 = vmatpush1.bf16.msra.mxu0 0
      %1370 = vmatprep.subr.bf16.mxu0 0
      %1371 = vmatpush1.bf16.msra.mxu0 0
      %1372 = vmatprep.subr.bf16.mxu0 0
      %1373 = vmatpush1.bf16.msra.mxu0 0
      %1374 = vmatprep.subr.bf16.mxu0 0
      %1375 = vmatpush1.bf16.msra.mxu0 0
      %1376 = vmatprep.subr.bf16.mxu0 0
      %1377 = vmatpush1.bf16.msra.mxu0 0
      %1378 = vmatprep.subr.bf16.mxu0 0
      %1379 = vmatpush1.bf16.msra.mxu0 0
      %1380 = vmatprep.subr.bf16.mxu0 0
      %1381 = vmatpush1.bf16.msra.mxu0 0
      %1382 = vmatprep.mubr.bf16.mxu0 0
      %1383 = vmatmul.mubr.bf16.gmra.mrb[0].mxu0 %v1276
      %v1384 = vpop.f32.mrb[0].mxu0
      %v1385 = vadd.f32 0.0, %v1384
      %v1386 = vpop.f32.mrb[0].mxu0
      %v1387 = vpop.f32.mrb[0].mxu0
      %v1388 = vadd.f32 0.0, %v1387
      %v1389 = vpop.f32.mrb[0].mxu0
      %1390 = vmatprep.mubr.bf16.mxu0 0
      %1391 = vmatmul.mubr.bf16.gmra.mrb[0].mxu0 %v1277
      %v1392 = vpop.f32.mrb[0].mxu0
      %v1393 = vadd.f32 0.0, %v1392
      %v1394 = vpop.f32.mrb[0].mxu0
      %v1395 = vpop.f32.mrb[0].mxu0
      %v1396 = vadd.f32 0.0, %v1395
      %v1397 = vpop.f32.mrb[0].mxu0
      %1398 = vmatprep.mubr.bf16.mxu0 0
      %1399 = vmatmul.mubr.bf16.gmra.mrb[0].mxu0 %v1278
      %v1400 = vpop.f32.mrb[0].mxu0
      %v1401 = vadd.f32 0.0, %v1400
      %v1402 = vpop.f32.mrb[0].mxu0
      %v1403 = vpop.f32.mrb[0].mxu0
      %v1404 = vadd.f32 0.0, %v1403
      %v1405 = vpop.f32.mrb[0].mxu0
      %1406 = vmatprep.mubr.bf16.mxu0 0
      %1407 = vmatmul.mubr.bf16.gmra.mrb[0].mxu0 %v1279
      %v1408 = vpop.f32.mrb[0].mxu0
      %v1409 = vadd.f32 0.0, %v1408
      %v1410 = vpop.f32.mrb[0].mxu0
      %v1411 = vpop.f32.mrb[0].mxu0
      %v1412 = vadd.f32 0.0, %v1411
      %v1413 = vpop.f32.mrb[0].mxu0
      %1414 = vmatprep.mubr.bf16.mxu0 0
      %1415 = vmatmul.mubr.bf16.gmra.mrb[0].mxu0 %v1280
      %v1416 = vpop.f32.mrb[0].mxu0
      %v1417 = vadd.f32 0.0, %v1416
      %v1418 = vpop.f32.mrb[0].mxu0
      %v1419 = vpop.f32.mrb[0].mxu0
      %v1420 = vadd.f32 0.0, %v1419
      %v1421 = vpop.f32.mrb[0].mxu0
      %1422 = vmatprep.mubr.bf16.mxu0 0
      %1423 = vmatmul.mubr.bf16.gmra.mrb[0].mxu0 %v1281
      %v1424 = vpop.f32.mrb[0].mxu0
      %v1425 = vadd.f32 0.0, %v1424
      %v1426 = vpop.f32.mrb[0].mxu0
      %v1427 = vpop.f32.mrb[0].mxu0
      %v1428 = vadd.f32 0.0, %v1427
      %v1429 = vpop.f32.mrb[0].mxu0
      %1430 = vmatprep.mubr.bf16.mxu0 0
      %1431 = vmatmul.mubr.bf16.gmra.mrb[0].mxu0 %v1282
      %v1432 = vpop.f32.mrb[0].mxu0
      %v1433 = vadd.f32 0.0, %v1432
      %v1434 = vpop.f32.mrb[0].mxu0
      %v1435 = vpop.f32.mrb[0].mxu0
      %v1436 = vadd.f32 0.0, %v1435
      %v1437 = vpop.f32.mrb[0].mxu0
      %1438 = vmatprep.mubr.bf16.mxu0 0
      %1439 = vmatmul.mubr.bf16.gmra.mrb[0].mxu0 %v1283
      %v1440 = vpop.f32.mrb[0].mxu0
      %v1441 = vadd.f32 0.0, %v1440
      %v1442 = vpop.f32.mrb[0].mxu0
      %v1443 = vpop.f32.mrb[0].mxu0
      %v1444 = vadd.f32 0.0, %v1443
      %v1445 = vpop.f32.mrb[0].mxu0
      %1446 = vmatprep.mubr.bf16.mxu0 0
      %1447 = vmatmul.mubr.bf16.gmra.mrb[0].mxu0 %v1284
      %v1448 = vpop.f32.mrb[0].mxu0
      %v1449 = vadd.f32 0.0, %v1448
      %v1450 = vpop.f32.mrb[0].mxu0
      %v1451 = vpop.f32.mrb[0].mxu0
      %v1452 = vadd.f32 0.0, %v1451
      %v1453 = vpop.f32.mrb[0].mxu0
      %1454 = vdwg.mxu0
      %v1455 = vadd.f32 %v1240, %v1385
      %v1456 = vadd.f32 %v1241, %v1388
      %v1457 = vadd.f32 %v1242, %v1393
      %v1458 = vadd.f32 %v1243, %v1396
      %v1459 = vadd.f32 %v1244, %v1401
      %v1460 = vadd.f32 %v1245, %v1404
      %v1461 = vadd.f32 %v1246, %v1409
      %v1462 = vadd.f32 %v1247, %v1412
      %v1463 = vadd.f32 %v1248, %v1417
      %v1464 = vadd.f32 %v1249, %v1420
      %v1465 = vadd.f32 %v1250, %v1425
      %v1466 = vadd.f32 %v1251, %v1428
      %v1467 = vadd.f32 %v1252, %v1433
      %v1468 = vadd.f32 %v1253, %v1436
      %v1469 = vadd.f32 %v1254, %v1441
      %v1470 = vadd.f32 %v1255, %v1444
      %v1471 = vadd.f32 %v1256, %v1449
      %v1472 = vadd.f32 %v1257, %v1452
      %v1473 = vld [vmem:[#allocation2 + $0x5] sm:$0xff]
      %v1474 = vld [vmem:[#allocation2 + $0xd] sm:$0xff]
      %v1475 = vld [vmem:[#allocation2 + $0x15] sm:$0xff]
      %v1476 = vld [vmem:[#allocation2 + $0x1d] sm:$0xff]
      %v1477 = vld [vmem:[#allocation2 + $0x25] sm:$0xff]
      %v1478 = vld [vmem:[#allocation2 + $0x2d] sm:$0xff]
      %v1479 = vld [vmem:[#allocation2 + $0x35] sm:$0xff]
      %v1480 = vld [vmem:[#allocation2 + $0x3d] sm:$0xff]
      %v1481 = vld [vmem:[#allocation2 + $0x45] sm:$0xff]
      %v1482 = vld [vmem:[#allocation2 + $0x4d] sm:$0xff]
      %v1483 = vld [vmem:[#allocation2 + $0x55] sm:$0xff]
      %v1484 = vld [vmem:[#allocation2 + $0x5d] sm:$0xff]
      %v1485 = vld [vmem:[#allocation2 + $0x65] sm:$0xff]
      %v1486 = vld [vmem:[#allocation2 + $0x6d] sm:$0xff]
      %v1487 = vld [vmem:[#allocation2 + $0x75] sm:$0xff]
      %v1488 = vld [vmem:[#allocation2 + $0x7d] sm:$0xff]
      %v1489 = vld [vmem:[#allocation2 + $0x85] sm:$0xff]
      %v1490 = vld [vmem:[#allocation2 + $0x8d] sm:$0xff]
      %v1491 = vpack.c.bf16 %v1474, %v1473
      %v1492 = vpack.c.bf16 %v1476, %v1475
      %v1493 = vpack.c.bf16 %v1478, %v1477
      %v1494 = vpack.c.bf16 %v1480, %v1479
      %v1495 = vpack.c.bf16 %v1482, %v1481
      %v1496 = vpack.c.bf16 %v1484, %v1483
      %v1497 = vpack.c.bf16 %v1486, %v1485
      %v1498 = vpack.c.bf16 %v1488, %v1487
      %v1499 = vpack.c.bf16 %v1490, %v1489
      %s1500 = scalar_lea.vmem %s6, 128
      %v1501 = vld [vmem:[%s1500] sm:$0xf]
      %v1502 = vld [vmem:[%s1500 + $0x4] sm:$0xf]
      %v1503 = vld [vmem:[%s1500 + $0x8] sm:$0xf]
      %v1504 = vld [vmem:[%s1500 + $0xc] sm:$0xf]
      %v1505 = vld [vmem:[%s1500 + $0x10] sm:$0xf]
      %v1506 = vld [vmem:[%s1500 + $0x14] sm:$0xf]
      %v1507 = vld [vmem:[%s1500 + $0x18] sm:$0xf]
      %v1508 = vld [vmem:[%s1500 + $0x1c] sm:$0xf]
      %v1509 = vld [vmem:[%s1500 + $0x20] sm:$0xf]
      %v1510 = vld [vmem:[%s1500 + $0x24] sm:$0xf]
      %v1511 = vld [vmem:[%s1500 + $0x28] sm:$0xf]
      %v1512 = vld [vmem:[%s1500 + $0x2c] sm:$0xf]
      %v1513 = vld [vmem:[%s1500 + $0x30] sm:$0xf]
      %v1514 = vld [vmem:[%s1500 + $0x34] sm:$0xf]
      %v1515 = vld [vmem:[%s1500 + $0x38] sm:$0xf]
      %v1516 = vld [vmem:[%s1500 + $0x3c] sm:$0xf]
      %v1533 = vunpack.c.l.b16 %v1501
      %v1534 = vunpack.c.l.b16 %v1502
      %v1535 = vunpack.c.l.b16 %v1503
      %v1536 = vunpack.c.l.b16 %v1504
      %v1537 = vunpack.c.l.b16 %v1505
      %v1538 = vunpack.c.l.b16 %v1506
      %v1539 = vunpack.c.l.b16 %v1507
      %v1540 = vunpack.c.l.b16 %v1508
      %v1541 = vunpack.c.l.b16 %v1509
      %v1542 = vunpack.c.l.b16 %v1510
      %v1543 = vunpack.c.l.b16 %v1511
      %v1544 = vunpack.c.l.b16 %v1512
      %v1545 = vunpack.c.l.b16 %v1513
      %v1546 = vunpack.c.l.b16 %v1514
      %v1547 = vunpack.c.l.b16 %v1515
      %v1548 = vunpack.c.l.b16 %v1516
      %v1549 = vpack.c.b16 %v1534, %v1533
      %v1550 = vpack.c.b16 %v1536, %v1535
      %v1551 = vpack.c.b16 %v1538, %v1537
      %v1552 = vpack.c.b16 %v1540, %v1539
      %v1553 = vpack.c.b16 %v1542, %v1541
      %v1554 = vpack.c.b16 %v1544, %v1543
      %v1555 = vpack.c.b16 %v1546, %v1545
      %v1556 = vpack.c.b16 %v1548, %v1547
      %1565 = vmatprep.subr.bf16.mxu0 0
      %1566 = vmatpush1.bf16.msra.mxu0 %v1549
      %1567 = vmatprep.subr.bf16.mxu0 0
      %1568 = vmatpush1.bf16.msra.mxu0 %v1550
      %1569 = vmatprep.subr.bf16.mxu0 0
      %1570 = vmatpush1.bf16.msra.mxu0 %v1551
      %1571 = vmatprep.subr.bf16.mxu0 0
      %1572 = vmatpush1.bf16.msra.mxu0 %v1552
      %1573 = vmatprep.subr.bf16.mxu0 0
      %1574 = vmatpush1.bf16.msra.mxu0 %v1553
      %1575 = vmatprep.subr.bf16.mxu0 0
      %1576 = vmatpush1.bf16.msra.mxu0 %v1554
      %1577 = vmatprep.subr.bf16.mxu0 0
      %1578 = vmatpush1.bf16.msra.mxu0 %v1555
      %1579 = vmatprep.subr.bf16.mxu0 0
      %1580 = vmatpush1.bf16.msra.mxu0 %v1556
      %1581 = vmatprep.subr.bf16.mxu0 0
      %1582 = vmatpush1.bf16.msra.mxu0 0
      %1583 = vmatprep.subr.bf16.mxu0 0
      %1584 = vmatpush1.bf16.msra.mxu0 0
      %1585 = vmatprep.subr.bf16.mxu0 0
      %1586 = vmatpush1.bf16.msra.mxu0 0
      %1587 = vmatprep.subr.bf16.mxu0 0
      %1588 = vmatpush1.bf16.msra.mxu0 0
      %1589 = vmatprep.subr.bf16.mxu0 0
      %1590 = vmatpush1.bf16.msra.mxu0 0
      %1591 = vmatprep.subr.bf16.mxu0 0
      %1592 = vmatpush1.bf16.msra.mxu0 0
      %1593 = vmatprep.subr.bf16.mxu0 0
      %1594 = vmatpush1.bf16.msra.mxu0 0
      %1595 = vmatprep.subr.bf16.mxu0 0
      %1596 = vmatpush1.bf16.msra.mxu0 0
      %1597 = vmatprep.mubr.bf16.mxu0 0
      %1598 = vmatmul.mubr.bf16.gmra.mrb[0].mxu0 %v1491
      %v1599 = vpop.f32.mrb[0].mxu0
      %v1600 = vadd.f32 0.0, %v1599
      %v1601 = vpop.f32.mrb[0].mxu0
      %v1602 = vpop.f32.mrb[0].mxu0
      %v1603 = vadd.f32 0.0, %v1602
      %v1604 = vpop.f32.mrb[0].mxu0
      %1605 = vmatprep.mubr.bf16.mxu0 0
      %1606 = vmatmul.mubr.bf16.gmra.mrb[0].mxu0 %v1492
      %v1607 = vpop.f32.mrb[0].mxu0
      %v1608 = vadd.f32 0.0, %v1607
      %v1609 = vpop.f32.mrb[0].mxu0
      %v1610 = vpop.f32.mrb[0].mxu0
      %v1611 = vadd.f32 0.0, %v1610
      %v1612 = vpop.f32.mrb[0].mxu0
      %1613 = vmatprep.mubr.bf16.mxu0 0
      %1614 = vmatmul.mubr.bf16.gmra.mrb[0].mxu0 %v1493
      %v1615 = vpop.f32.mrb[0].mxu0
      %v1616 = vadd.f32 0.0, %v1615
      %v1617 = vpop.f32.mrb[0].mxu0
      %v1618 = vpop.f32.mrb[0].mxu0
      %v1619 = vadd.f32 0.0, %v1618
      %v1620 = vpop.f32.mrb[0].mxu0
      %1621 = vmatprep.mubr.bf16.mxu0 0
      %1622 = vmatmul.mubr.bf16.gmra.mrb[0].mxu0 %v1494
      %v1623 = vpop.f32.mrb[0].mxu0
      %v1624 = vadd.f32 0.0, %v1623
      %v1625 = vpop.f32.mrb[0].mxu0
      %v1626 = vpop.f32.mrb[0].mxu0
      %v1627 = vadd.f32 0.0, %v1626
      %v1628 = vpop.f32.mrb[0].mxu0
      %1629 = vmatprep.mubr.bf16.mxu0 0
      %1630 = vmatmul.mubr.bf16.gmra.mrb[0].mxu0 %v1495
      %v1631 = vpop.f32.mrb[0].mxu0
      %v1632 = vadd.f32 0.0, %v1631
      %v1633 = vpop.f32.mrb[0].mxu0
      %v1634 = vpop.f32.mrb[0].mxu0
      %v1635 = vadd.f32 0.0, %v1634
      %v1636 = vpop.f32.mrb[0].mxu0
      %1637 = vmatprep.mubr.bf16.mxu0 0
      %1638 = vmatmul.mubr.bf16.gmra.mrb[0].mxu0 %v1496
      %v1639 = vpop.f32.mrb[0].mxu0
      %v1640 = vadd.f32 0.0, %v1639
      %v1641 = vpop.f32.mrb[0].mxu0
      %v1642 = vpop.f32.mrb[0].mxu0
      %v1643 = vadd.f32 0.0, %v1642
      %v1644 = vpop.f32.mrb[0].mxu0
      %1645 = vmatprep.mubr.bf16.mxu0 0
      %1646 = vmatmul.mubr.bf16.gmra.mrb[0].mxu0 %v1497
      %v1647 = vpop.f32.mrb[0].mxu0
      %v1648 = vadd.f32 0.0, %v1647
      %v1649 = vpop.f32.mrb[0].mxu0
      %v1650 = vpop.f32.mrb[0].mxu0
      %v1651 = vadd.f32 0.0, %v1650
      %v1652 = vpop.f32.mrb[0].mxu0
      %1653 = vmatprep.mubr.bf16.mxu0 0
      %1654 = vmatmul.mubr.bf16.gmra.mrb[0].mxu0 %v1498
      %v1655 = vpop.f32.mrb[0].mxu0
      %v1656 = vadd.f32 0.0, %v1655
      %v1657 = vpop.f32.mrb[0].mxu0
      %v1658 = vpop.f32.mrb[0].mxu0
      %v1659 = vadd.f32 0.0, %v1658
      %v1660 = vpop.f32.mrb[0].mxu0
      %1661 = vmatprep.mubr.bf16.mxu0 0
      %1662 = vmatmul.mubr.bf16.gmra.mrb[0].mxu0 %v1499
      %v1663 = vpop.f32.mrb[0].mxu0
      %v1664 = vadd.f32 0.0, %v1663
      %v1665 = vpop.f32.mrb[0].mxu0
      %v1666 = vpop.f32.mrb[0].mxu0
      %v1667 = vadd.f32 0.0, %v1666
      %v1668 = vpop.f32.mrb[0].mxu0
      %1669 = vdwg.mxu0
      %s1670 = scalar_lea.vmem %s5, 288
      %v1671 = vld [vmem:[%s1670] sm:$0xff]
      %v1672 = vld [vmem:[%s1670 + $0x8] sm:$0xff]
      %v1673 = vld [vmem:[%s1670 + $0x10] sm:$0xff]
      %v1674 = vld [vmem:[%s1670 + $0x18] sm:$0xff]
      %v1675 = vld [vmem:[%s1670 + $0x20] sm:$0xff]
      %v1676 = vld [vmem:[%s1670 + $0x28] sm:$0xff]
      %v1677 = vld [vmem:[%s1670 + $0x30] sm:$0xff]
      %v1678 = vld [vmem:[%s1670 + $0x38] sm:$0xff]
      %v1679 = vld [vmem:[%s1670 + $0x40] sm:$0xff]
      %v1680 = vld [vmem:[%s1670 + $0x48] sm:$0xff]
      %v1681 = vld [vmem:[%s1670 + $0x50] sm:$0xff]
      %v1682 = vld [vmem:[%s1670 + $0x58] sm:$0xff]
      %v1683 = vld [vmem:[%s1670 + $0x60] sm:$0xff]
      %v1684 = vld [vmem:[%s1670 + $0x68] sm:$0xff]
      %v1685 = vld [vmem:[%s1670 + $0x70] sm:$0xff]
      %v1686 = vld [vmem:[%s1670 + $0x78] sm:$0xff]
      %v1687 = vld [vmem:[%s1670 + $0x80] sm:$0xff]
      %v1688 = vld [vmem:[%s1670 + $0x88] sm:$0xff]
      %1690 = vset.pattern.permute.xlu0 0
      %1691 = vperm.xlu0 %1690, %v1671
      %v1692 = vpop.permute.xlu0 %1691
      %1695 = vset.pattern.permute.xlu0 0
      %1696 = vperm.xlu0 %1695, %v1672
      %v1697 = vpop.permute.xlu0 %1696
      %1700 = vset.pattern.permute.xlu0 0
      %1701 = vperm.xlu0 %1700, %v1673
      %v1702 = vpop.permute.xlu0 %1701
      %1705 = vset.pattern.permute.xlu0 0
      %1706 = vperm.xlu0 %1705, %v1674
      %v1707 = vpop.permute.xlu0 %1706
      %1710 = vset.pattern.permute.xlu0 0
      %1711 = vperm.xlu0 %1710, %v1675
      %v1712 = vpop.permute.xlu0 %1711
      %1715 = vset.pattern.permute.xlu0 0
      %1716 = vperm.xlu0 %1715, %v1676
      %v1717 = vpop.permute.xlu0 %1716
      %1720 = vset.pattern.permute.xlu0 0
      %1721 = vperm.xlu0 %1720, %v1677
      %v1722 = vpop.permute.xlu0 %1721
      %1725 = vset.pattern.permute.xlu0 0
      %1726 = vperm.xlu0 %1725, %v1678
      %v1727 = vpop.permute.xlu0 %1726
      %1730 = vset.pattern.permute.xlu0 0
      %1731 = vperm.xlu0 %1730, %v1679
      %v1732 = vpop.permute.xlu0 %1731
      %1735 = vset.pattern.permute.xlu0 0
      %1736 = vperm.xlu0 %1735, %v1680
      %v1737 = vpop.permute.xlu0 %1736
      %1740 = vset.pattern.permute.xlu0 0
      %1741 = vperm.xlu0 %1740, %v1681
      %v1742 = vpop.permute.xlu0 %1741
      %1745 = vset.pattern.permute.xlu0 0
      %1746 = vperm.xlu0 %1745, %v1682
      %v1747 = vpop.permute.xlu0 %1746
      %1750 = vset.pattern.permute.xlu0 0
      %1751 = vperm.xlu0 %1750, %v1683
      %v1752 = vpop.permute.xlu0 %1751
      %1755 = vset.pattern.permute.xlu0 0
      %1756 = vperm.xlu0 %1755, %v1684
      %v1757 = vpop.permute.xlu0 %1756
      %1760 = vset.pattern.permute.xlu0 0
      %1761 = vperm.xlu0 %1760, %v1685
      %v1762 = vpop.permute.xlu0 %1761
      %1765 = vset.pattern.permute.xlu0 0
      %1766 = vperm.xlu0 %1765, %v1686
      %v1767 = vpop.permute.xlu0 %1766
      %1770 = vset.pattern.permute.xlu0 0
      %1771 = vperm.xlu0 %1770, %v1687
      %v1772 = vpop.permute.xlu0 %1771
      %1775 = vset.pattern.permute.xlu0 0
      %1776 = vperm.xlu0 %1775, %v1688
      %v1777 = vpop.permute.xlu0 %1776
      %v1779 = vmul.f32 %v1600, %v1692
      %v1780 = vmul.f32 %v1603, %v1697
      %v1781 = vmul.f32 %v1608, %v1702
      %v1782 = vmul.f32 %v1611, %v1707
      %v1783 = vmul.f32 %v1616, %v1712
      %v1784 = vmul.f32 %v1619, %v1717
      %v1785 = vmul.f32 %v1624, %v1722
      %v1786 = vmul.f32 %v1627, %v1727
      %v1787 = vmul.f32 %v1632, %v1732
      %v1788 = vmul.f32 %v1635, %v1737
      %v1789 = vmul.f32 %v1640, %v1742
      %v1790 = vmul.f32 %v1643, %v1747
      %v1791 = vmul.f32 %v1648, %v1752
      %v1792 = vmul.f32 %v1651, %v1757
      %v1793 = vmul.f32 %v1656, %v1762
      %v1794 = vmul.f32 %v1659, %v1767
      %v1795 = vmul.f32 %v1664, %v1772
      %v1796 = vmul.f32 %v1667, %v1777
      %v1797 = vadd.f32 %v1455, %v1779
      %v1798 = vadd.f32 %v1456, %v1780
      %v1799 = vadd.f32 %v1457, %v1781
      %v1800 = vadd.f32 %v1458, %v1782
      %v1801 = vadd.f32 %v1459, %v1783
      %v1802 = vadd.f32 %v1460, %v1784
      %v1803 = vadd.f32 %v1461, %v1785
      %v1804 = vadd.f32 %v1462, %v1786
      %v1805 = vadd.f32 %v1463, %v1787
      %v1806 = vadd.f32 %v1464, %v1788
      %v1807 = vadd.f32 %v1465, %v1789
      %v1808 = vadd.f32 %v1466, %v1790
      %v1809 = vadd.f32 %v1467, %v1791
      %v1810 = vadd.f32 %v1468, %v1792
      %v1811 = vadd.f32 %v1469, %v1793
      %v1812 = vadd.f32 %v1470, %v1794
      %v1813 = vadd.f32 %v1471, %v1795
      %v1814 = vadd.f32 %v1472, %v1796
      %v1815 = vld [vmem:[#allocation2 + $0xf] sm:$0xff]
      %v1816 = vld [vmem:[#allocation2 + $0x17] sm:$0xff]
      %v1817 = vld [vmem:[#allocation2 + $0x1f] sm:$0xff]
      %v1818 = vld [vmem:[#allocation2 + $0x27] sm:$0xff]
      %v1819 = vld [vmem:[#allocation2 + $0x2f] sm:$0xff]
      %v1820 = vld [vmem:[#allocation2 + $0x37] sm:$0xff]
      %v1821 = vld [vmem:[#allocation2 + $0x3f] sm:$0xff]
      %v1822 = vld [vmem:[#allocation2 + $0x47] sm:$0xff]
      %v1823 = vld [vmem:[#allocation2 + $0x4f] sm:$0xff]
      %v1824 = vld [vmem:[#allocation2 + $0x57] sm:$0xff]
      %v1825 = vld [vmem:[#allocation2 + $0x5f] sm:$0xff]
      %v1826 = vld [vmem:[#allocation2 + $0x67] sm:$0xff]
      %v1827 = vld [vmem:[#allocation2 + $0x6f] sm:$0xff]
      %v1828 = vld [vmem:[#allocation2 + $0x77] sm:$0xff]
      %v1829 = vld [vmem:[#allocation2 + $0x7f] sm:$0xff]
      %v1830 = vld [vmem:[#allocation2 + $0x87] sm:$0xff]
      %v1831 = vld [vmem:[#allocation2 + $0x8f] sm:$0xff]
      %v1832 = vld [vmem:[#allocation2 + $0x97] sm:$0xff]
      %v1833 = vpack.c.bf16 %v1816, %v1815
      %v1834 = vpack.c.bf16 %v1818, %v1817
      %v1835 = vpack.c.bf16 %v1820, %v1819
      %v1836 = vpack.c.bf16 %v1822, %v1821
      %v1837 = vpack.c.bf16 %v1824, %v1823
      %v1838 = vpack.c.bf16 %v1826, %v1825
      %v1839 = vpack.c.bf16 %v1828, %v1827
      %v1840 = vpack.c.bf16 %v1830, %v1829
      %v1841 = vpack.c.bf16 %v1832, %v1831
      %s1842 = scalar_lea.vmem %s6, 192
      %v1843 = vld [vmem:[%s1842] sm:$0xf]
      %v1844 = vld [vmem:[%s1842 + $0x4] sm:$0xf]
      %v1845 = vld [vmem:[%s1842 + $0x8] sm:$0xf]
      %v1846 = vld [vmem:[%s1842 + $0xc] sm:$0xf]
      %v1847 = vld [vmem:[%s1842 + $0x10] sm:$0xf]
      %v1848 = vld [vmem:[%s1842 + $0x14] sm:$0xf]
      %v1849 = vld [vmem:[%s1842 + $0x18] sm:$0xf]
      %v1850 = vld [vmem:[%s1842 + $0x1c] sm:$0xf]
      %v1851 = vld [vmem:[%s1842 + $0x20] sm:$0xf]
      %v1852 = vld [vmem:[%s1842 + $0x24] sm:$0xf]
      %v1853 = vld [vmem:[%s1842 + $0x28] sm:$0xf]
      %v1854 = vld [vmem:[%s1842 + $0x2c] sm:$0xf]
      %v1855 = vld [vmem:[%s1842 + $0x30] sm:$0xf]
      %v1856 = vld [vmem:[%s1842 + $0x34] sm:$0xf]
      %v1857 = vld [vmem:[%s1842 + $0x38] sm:$0xf]
      %v1858 = vld [vmem:[%s1842 + $0x3c] sm:$0xf]
      %v1875 = vunpack.c.l.b16 %v1843
      %v1876 = vunpack.c.l.b16 %v1844
      %v1877 = vunpack.c.l.b16 %v1845
      %v1878 = vunpack.c.l.b16 %v1846
      %v1879 = vunpack.c.l.b16 %v1847
      %v1880 = vunpack.c.l.b16 %v1848
      %v1881 = vunpack.c.l.b16 %v1849
      %v1882 = vunpack.c.l.b16 %v1850
      %v1883 = vunpack.c.l.b16 %v1851
      %v1884 = vunpack.c.l.b16 %v1852
      %v1885 = vunpack.c.l.b16 %v1853
      %v1886 = vunpack.c.l.b16 %v1854
      %v1887 = vunpack.c.l.b16 %v1855
      %v1888 = vunpack.c.l.b16 %v1856
      %v1889 = vunpack.c.l.b16 %v1857
      %v1890 = vunpack.c.l.b16 %v1858
      %v1891 = vpack.c.b16 %v1876, %v1875
      %v1892 = vpack.c.b16 %v1878, %v1877
      %v1893 = vpack.c.b16 %v1880, %v1879
      %v1894 = vpack.c.b16 %v1882, %v1881
      %v1895 = vpack.c.b16 %v1884, %v1883
      %v1896 = vpack.c.b16 %v1886, %v1885
      %v1897 = vpack.c.b16 %v1888, %v1887
      %v1898 = vpack.c.b16 %v1890, %v1889
      %1907 = vmatprep.subr.bf16.mxu0 0
      %1908 = vmatpush1.bf16.msra.mxu0 %v1891
      %1909 = vmatprep.subr.bf16.mxu0 0
      %1910 = vmatpush1.bf16.msra.mxu0 %v1892
      %1911 = vmatprep.subr.bf16.mxu0 0
      %1912 = vmatpush1.bf16.msra.mxu0 %v1893
      %1913 = vmatprep.subr.bf16.mxu0 0
      %1914 = vmatpush1.bf16.msra.mxu0 %v1894
      %1915 = vmatprep.subr.bf16.mxu0 0
      %1916 = vmatpush1.bf16.msra.mxu0 %v1895
      %1917 = vmatprep.subr.bf16.mxu0 0
      %1918 = vmatpush1.bf16.msra.mxu0 %v1896
      %1919 = vmatprep.subr.bf16.mxu0 0
      %1920 = vmatpush1.bf16.msra.mxu0 %v1897
      %1921 = vmatprep.subr.bf16.mxu0 0
      %1922 = vmatpush1.bf16.msra.mxu0 %v1898
      %1923 = vmatprep.subr.bf16.mxu0 0
      %1924 = vmatpush1.bf16.msra.mxu0 0
      %1925 = vmatprep.subr.bf16.mxu0 0
      %1926 = vmatpush1.bf16.msra.mxu0 0
      %1927 = vmatprep.subr.bf16.mxu0 0
      %1928 = vmatpush1.bf16.msra.mxu0 0
      %1929 = vmatprep.subr.bf16.mxu0 0
      %1930 = vmatpush1.bf16.msra.mxu0 0
      %1931 = vmatprep.subr.bf16.mxu0 0
      %1932 = vmatpush1.bf16.msra.mxu0 0
      %1933 = vmatprep.subr.bf16.mxu0 0
      %1934 = vmatpush1.bf16.msra.mxu0 0
      %1935 = vmatprep.subr.bf16.mxu0 0
      %1936 = vmatpush1.bf16.msra.mxu0 0
      %1937 = vmatprep.subr.bf16.mxu0 0
      %1938 = vmatpush1.bf16.msra.mxu0 0
      %1939 = vmatprep.mubr.bf16.mxu0 0
      %1940 = vmatmul.mubr.bf16.gmra.mrb[0].mxu0 %v1833
      %v1941 = vpop.f32.mrb[0].mxu0
      %v1942 = vadd.f32 0.0, %v1941
      %v1943 = vpop.f32.mrb[0].mxu0
      %v1944 = vpop.f32.mrb[0].mxu0
      %v1945 = vadd.f32 0.0, %v1944
      %v1946 = vpop.f32.mrb[0].mxu0
      %1947 = vmatprep.mubr.bf16.mxu0 0
      %1948 = vmatmul.mubr.bf16.gmra.mrb[0].mxu0 %v1834
      %v1949 = vpop.f32.mrb[0].mxu0
      %v1950 = vadd.f32 0.0, %v1949
      %v1951 = vpop.f32.mrb[0].mxu0
      %v1952 = vpop.f32.mrb[0].mxu0
      %v1953 = vadd.f32 0.0, %v1952
      %v1954 = vpop.f32.mrb[0].mxu0
      %1955 = vmatprep.mubr.bf16.mxu0 0
      %1956 = vmatmul.mubr.bf16.gmra.mrb[0].mxu0 %v1835
      %v1957 = vpop.f32.mrb[0].mxu0
      %v1958 = vadd.f32 0.0, %v1957
      %v1959 = vpop.f32.mrb[0].mxu0
      %v1960 = vpop.f32.mrb[0].mxu0
      %v1961 = vadd.f32 0.0, %v1960
      %v1962 = vpop.f32.mrb[0].mxu0
      %1963 = vmatprep.mubr.bf16.mxu0 0
      %1964 = vmatmul.mubr.bf16.gmra.mrb[0].mxu0 %v1836
      %v1965 = vpop.f32.mrb[0].mxu0
      %v1966 = vadd.f32 0.0, %v1965
      %v1967 = vpop.f32.mrb[0].mxu0
      %v1968 = vpop.f32.mrb[0].mxu0
      %v1969 = vadd.f32 0.0, %v1968
      %v1970 = vpop.f32.mrb[0].mxu0
      %1971 = vmatprep.mubr.bf16.mxu0 0
      %1972 = vmatmul.mubr.bf16.gmra.mrb[0].mxu0 %v1837
      %v1973 = vpop.f32.mrb[0].mxu0
      %v1974 = vadd.f32 0.0, %v1973
      %v1975 = vpop.f32.mrb[0].mxu0
      %v1976 = vpop.f32.mrb[0].mxu0
      %v1977 = vadd.f32 0.0, %v1976
      %v1978 = vpop.f32.mrb[0].mxu0
      %1979 = vmatprep.mubr.bf16.mxu0 0
      %1980 = vmatmul.mubr.bf16.gmra.mrb[0].mxu0 %v1838
      %v1981 = vpop.f32.mrb[0].mxu0
      %v1982 = vadd.f32 0.0, %v1981
      %v1983 = vpop.f32.mrb[0].mxu0
      %v1984 = vpop.f32.mrb[0].mxu0
      %v1985 = vadd.f32 0.0, %v1984
      %v1986 = vpop.f32.mrb[0].mxu0
      %1987 = vmatprep.mubr.bf16.mxu0 0
      %1988 = vmatmul.mubr.bf16.gmra.mrb[0].mxu0 %v1839
      %v1989 = vpop.f32.mrb[0].mxu0
      %v1990 = vadd.f32 0.0, %v1989
      %v1991 = vpop.f32.mrb[0].mxu0
      %v1992 = vpop.f32.mrb[0].mxu0
      %v1993 = vadd.f32 0.0, %v1992
      %v1994 = vpop.f32.mrb[0].mxu0
      %1995 = vmatprep.mubr.bf16.mxu0 0
      %1996 = vmatmul.mubr.bf16.gmra.mrb[0].mxu0 %v1840
      %v1997 = vpop.f32.mrb[0].mxu0
      %v1998 = vadd.f32 0.0, %v1997
      %v1999 = vpop.f32.mrb[0].mxu0
      %v2000 = vpop.f32.mrb[0].mxu0
      %v2001 = vadd.f32 0.0, %v2000
      %v2002 = vpop.f32.mrb[0].mxu0
      %2003 = vmatprep.mubr.bf16.mxu0 0
      %2004 = vmatmul.mubr.bf16.gmra.mrb[0].mxu0 %v1841
      %v2005 = vpop.f32.mrb[0].mxu0
      %v2006 = vadd.f32 0.0, %v2005
      %v2007 = vpop.f32.mrb[0].mxu0
      %v2008 = vpop.f32.mrb[0].mxu0
      %v2009 = vadd.f32 0.0, %v2008
      %v2010 = vpop.f32.mrb[0].mxu0
      %2011 = vdwg.mxu0
      %v2012 = vmul.f32 %v1942, %v1135
      %v2013 = vmul.f32 %v1945, %v1140
      %v2014 = vmul.f32 %v1950, %v1145
      %v2015 = vmul.f32 %v1953, %v1150
      %v2016 = vmul.f32 %v1958, %v1155
      %v2017 = vmul.f32 %v1961, %v1160
      %v2018 = vmul.f32 %v1966, %v1165
      %v2019 = vmul.f32 %v1969, %v1170
      %v2020 = vmul.f32 %v1974, %v1175
      %v2021 = vmul.f32 %v1977, %v1180
      %v2022 = vmul.f32 %v1982, %v1185
      %v2023 = vmul.f32 %v1985, %v1190
      %v2024 = vmul.f32 %v1990, %v1195
      %v2025 = vmul.f32 %v1993, %v1200
      %v2026 = vmul.f32 %v1998, %v1205
      %v2027 = vmul.f32 %v2001, %v1210
      %v2028 = vmul.f32 %v2006, %v1215
      %v2029 = vmul.f32 %v2009, %v1220
      %v2030 = vadd.f32 %v1797, %v2012
      %v2031 = vadd.f32 %v1798, %v2013
      %v2032 = vadd.f32 %v1799, %v2014
      %v2033 = vadd.f32 %v1800, %v2015
      %v2034 = vadd.f32 %v1801, %v2016
      %v2035 = vadd.f32 %v1802, %v2017
      %v2036 = vadd.f32 %v1803, %v2018
      %v2037 = vadd.f32 %v1804, %v2019
      %v2038 = vadd.f32 %v1805, %v2020
      %v2039 = vadd.f32 %v1806, %v2021
      %v2040 = vadd.f32 %v1807, %v2022
      %v2041 = vadd.f32 %v1808, %v2023
      %v2042 = vadd.f32 %v1809, %v2024
      %v2043 = vadd.f32 %v1810, %v2025
      %v2044 = vadd.f32 %v1811, %v2026
      %v2045 = vadd.f32 %v1812, %v2027
      %v2046 = vadd.f32 %v1813, %v2028
      %v2047 = vadd.f32 %v1814, %v2029
      %v2048 = vld [vmem:[#allocation2 + $0x10] sm:$0xff]
      %v2049 = vld [vmem:[#allocation2 + $0x18] sm:$0xff]
      %v2050 = vld [vmem:[#allocation2 + $0x20] sm:$0xff]
      %v2051 = vld [vmem:[#allocation2 + $0x28] sm:$0xff]
      %v2052 = vld [vmem:[#allocation2 + $0x30] sm:$0xff]
      %v2053 = vld [vmem:[#allocation2 + $0x38] sm:$0xff]
      %v2054 = vld [vmem:[#allocation2 + $0x40] sm:$0xff]
      %v2055 = vld [vmem:[#allocation2 + $0x48] sm:$0xff]
      %v2056 = vld [vmem:[#allocation2 + $0x50] sm:$0xff]
      %v2057 = vld [vmem:[#allocation2 + $0x58] sm:$0xff]
      %v2058 = vld [vmem:[#allocation2 + $0x60] sm:$0xff]
      %v2059 = vld [vmem:[#allocation2 + $0x68] sm:$0xff]
      %v2060 = vld [vmem:[#allocation2 + $0x70] sm:$0xff]
      %v2061 = vld [vmem:[#allocation2 + $0x78] sm:$0xff]
      %v2062 = vld [vmem:[#allocation2 + $0x80] sm:$0xff]
      %v2063 = vld [vmem:[#allocation2 + $0x88] sm:$0xff]
      %v2064 = vld [vmem:[#allocation2 + $0x90] sm:$0xff]
      %v2065 = vld [vmem:[#allocation2 + $0x98] sm:$0xff]
      %v2066 = vpack.c.bf16 %v2049, %v2048
      %v2067 = vpack.c.bf16 %v2051, %v2050
      %v2068 = vpack.c.bf16 %v2053, %v2052
      %v2069 = vpack.c.bf16 %v2055, %v2054
      %v2070 = vpack.c.bf16 %v2057, %v2056
      %v2071 = vpack.c.bf16 %v2059, %v2058
      %v2072 = vpack.c.bf16 %v2061, %v2060
      %v2073 = vpack.c.bf16 %v2063, %v2062
      %v2074 = vpack.c.bf16 %v2065, %v2064
      %s2075 = scalar_lea.vmem %s6, 256
      %v2076 = vld [vmem:[%s2075] sm:$0xf]
      %v2077 = vld [vmem:[%s2075 + $0x4] sm:$0xf]
      %v2078 = vld [vmem:[%s2075 + $0x8] sm:$0xf]
      %v2079 = vld [vmem:[%s2075 + $0xc] sm:$0xf]
      %v2080 = vld [vmem:[%s2075 + $0x10] sm:$0xf]
      %v2081 = vld [vmem:[%s2075 + $0x14] sm:$0xf]
      %v2082 = vld [vmem:[%s2075 + $0x18] sm:$0xf]
      %v2083 = vld [vmem:[%s2075 + $0x1c] sm:$0xf]
      %v2084 = vld [vmem:[%s2075 + $0x20] sm:$0xf]
      %v2085 = vld [vmem:[%s2075 + $0x24] sm:$0xf]
      %v2086 = vld [vmem:[%s2075 + $0x28] sm:$0xf]
      %v2087 = vld [vmem:[%s2075 + $0x2c] sm:$0xf]
      %v2088 = vld [vmem:[%s2075 + $0x30] sm:$0xf]
      %v2089 = vld [vmem:[%s2075 + $0x34] sm:$0xf]
      %v2090 = vld [vmem:[%s2075 + $0x38] sm:$0xf]
      %v2091 = vld [vmem:[%s2075 + $0x3c] sm:$0xf]
      %v2108 = vunpack.c.l.b16 %v2076
      %v2109 = vunpack.c.l.b16 %v2077
      %v2110 = vunpack.c.l.b16 %v2078
      %v2111 = vunpack.c.l.b16 %v2079
      %v2112 = vunpack.c.l.b16 %v2080
      %v2113 = vunpack.c.l.b16 %v2081
      %v2114 = vunpack.c.l.b16 %v2082
      %v2115 = vunpack.c.l.b16 %v2083
      %v2116 = vunpack.c.l.b16 %v2084
      %v2117 = vunpack.c.l.b16 %v2085
      %v2118 = vunpack.c.l.b16 %v2086
      %v2119 = vunpack.c.l.b16 %v2087
      %v2120 = vunpack.c.l.b16 %v2088
      %v2121 = vunpack.c.l.b16 %v2089
      %v2122 = vunpack.c.l.b16 %v2090
      %v2123 = vunpack.c.l.b16 %v2091
      %v2124 = vpack.c.b16 %v2109, %v2108
      %v2125 = vpack.c.b16 %v2111, %v2110
      %v2126 = vpack.c.b16 %v2113, %v2112
      %v2127 = vpack.c.b16 %v2115, %v2114
      %v2128 = vpack.c.b16 %v2117, %v2116
      %v2129 = vpack.c.b16 %v2119, %v2118
      %v2130 = vpack.c.b16 %v2121, %v2120
      %v2131 = vpack.c.b16 %v2123, %v2122
      %2140 = vmatprep.subr.bf16.mxu0 0
      %2141 = vmatpush1.bf16.msra.mxu0 %v2124
      %2142 = vmatprep.subr.bf16.mxu0 0
      %2143 = vmatpush1.bf16.msra.mxu0 %v2125
      %2144 = vmatprep.subr.bf16.mxu0 0
      %2145 = vmatpush1.bf16.msra.mxu0 %v2126
      %2146 = vmatprep.subr.bf16.mxu0 0
      %2147 = vmatpush1.bf16.msra.mxu0 %v2127
      %2148 = vmatprep.subr.bf16.mxu0 0
      %2149 = vmatpush1.bf16.msra.mxu0 %v2128
      %2150 = vmatprep.subr.bf16.mxu0 0
      %2151 = vmatpush1.bf16.msra.mxu0 %v2129
      %2152 = vmatprep.subr.bf16.mxu0 0
      %2153 = vmatpush1.bf16.msra.mxu0 %v2130
      %2154 = vmatprep.subr.bf16.mxu0 0
      %2155 = vmatpush1.bf16.msra.mxu0 %v2131
      %2156 = vmatprep.subr.bf16.mxu0 0
      %2157 = vmatpush1.bf16.msra.mxu0 0
      %2158 = vmatprep.subr.bf16.mxu0 0
      %2159 = vmatpush1.bf16.msra.mxu0 0
      %2160 = vmatprep.subr.bf16.mxu0 0
      %2161 = vmatpush1.bf16.msra.mxu0 0
      %2162 = vmatprep.subr.bf16.mxu0 0
      %2163 = vmatpush1.bf16.msra.mxu0 0
      %2164 = vmatprep.subr.bf16.mxu0 0
      %2165 = vmatpush1.bf16.msra.mxu0 0
      %2166 = vmatprep.subr.bf16.mxu0 0
      %2167 = vmatpush1.bf16.msra.mxu0 0
      %2168 = vmatprep.subr.bf16.mxu0 0
      %2169 = vmatpush1.bf16.msra.mxu0 0
      %2170 = vmatprep.subr.bf16.mxu0 0
      %2171 = vmatpush1.bf16.msra.mxu0 0
      %2172 = vmatprep.mubr.bf16.mxu0 0
      %2173 = vmatmul.mubr.bf16.gmra.mrb[0].mxu0 %v2066
      %v2174 = vpop.f32.mrb[0].mxu0
      %v2175 = vadd.f32 0.0, %v2174
      %v2176 = vpop.f32.mrb[0].mxu0
      %v2177 = vpop.f32.mrb[0].mxu0
      %v2178 = vadd.f32 0.0, %v2177
      %v2179 = vpop.f32.mrb[0].mxu0
      %2180 = vmatprep.mubr.bf16.mxu0 0
      %2181 = vmatmul.mubr.bf16.gmra.mrb[0].mxu0 %v2067
      %v2182 = vpop.f32.mrb[0].mxu0
      %v2183 = vadd.f32 0.0, %v2182
      %v2184 = vpop.f32.mrb[0].mxu0
      %v2185 = vpop.f32.mrb[0].mxu0
      %v2186 = vadd.f32 0.0, %v2185
      %v2187 = vpop.f32.mrb[0].mxu0
      %2188 = vmatprep.mubr.bf16.mxu0 0
      %2189 = vmatmul.mubr.bf16.gmra.mrb[0].mxu0 %v2068
      %v2190 = vpop.f32.mrb[0].mxu0
      %v2191 = vadd.f32 0.0, %v2190
      %v2192 = vpop.f32.mrb[0].mxu0
      %v2193 = vpop.f32.mrb[0].mxu0
      %v2194 = vadd.f32 0.0, %v2193
      %v2195 = vpop.f32.mrb[0].mxu0
      %2196 = vmatprep.mubr.bf16.mxu0 0
      %2197 = vmatmul.mubr.bf16.gmra.mrb[0].mxu0 %v2069
      %v2198 = vpop.f32.mrb[0].mxu0
      %v2199 = vadd.f32 0.0, %v2198
      %v2200 = vpop.f32.mrb[0].mxu0
      %v2201 = vpop.f32.mrb[0].mxu0
      %v2202 = vadd.f32 0.0, %v2201
      %v2203 = vpop.f32.mrb[0].mxu0
      %2204 = vmatprep.mubr.bf16.mxu0 0
      %2205 = vmatmul.mubr.bf16.gmra.mrb[0].mxu0 %v2070
      %v2206 = vpop.f32.mrb[0].mxu0
      %v2207 = vadd.f32 0.0, %v2206
      %v2208 = vpop.f32.mrb[0].mxu0
      %v2209 = vpop.f32.mrb[0].mxu0
      %v2210 = vadd.f32 0.0, %v2209
      %v2211 = vpop.f32.mrb[0].mxu0
      %2212 = vmatprep.mubr.bf16.mxu0 0
      %2213 = vmatmul.mubr.bf16.gmra.mrb[0].mxu0 %v2071
      %v2214 = vpop.f32.mrb[0].mxu0
      %v2215 = vadd.f32 0.0, %v2214
      %v2216 = vpop.f32.mrb[0].mxu0
      %v2217 = vpop.f32.mrb[0].mxu0
      %v2218 = vadd.f32 0.0, %v2217
      %v2219 = vpop.f32.mrb[0].mxu0
      %2220 = vmatprep.mubr.bf16.mxu0 0
      %2221 = vmatmul.mubr.bf16.gmra.mrb[0].mxu0 %v2072
      %v2222 = vpop.f32.mrb[0].mxu0
      %v2223 = vadd.f32 0.0, %v2222
      %v2224 = vpop.f32.mrb[0].mxu0
      %v2225 = vpop.f32.mrb[0].mxu0
      %v2226 = vadd.f32 0.0, %v2225
      %v2227 = vpop.f32.mrb[0].mxu0
      %2228 = vmatprep.mubr.bf16.mxu0 0
      %2229 = vmatmul.mubr.bf16.gmra.mrb[0].mxu0 %v2073
      %v2230 = vpop.f32.mrb[0].mxu0
      %v2231 = vadd.f32 0.0, %v2230
      %v2232 = vpop.f32.mrb[0].mxu0
      %v2233 = vpop.f32.mrb[0].mxu0
      %v2234 = vadd.f32 0.0, %v2233
      %v2235 = vpop.f32.mrb[0].mxu0
      %2236 = vmatprep.mubr.bf16.mxu0 0
      %2237 = vmatmul.mubr.bf16.gmra.mrb[0].mxu0 %v2074
      %v2238 = vpop.f32.mrb[0].mxu0
      %v2239 = vadd.f32 0.0, %v2238
      %v2240 = vpop.f32.mrb[0].mxu0
      %v2241 = vpop.f32.mrb[0].mxu0
      %v2242 = vadd.f32 0.0, %v2241
      %v2243 = vpop.f32.mrb[0].mxu0
      %2244 = vdwg.mxu0
      %v2245 = vadd.f32 %v2030, %v2175
      %v2246 = vadd.f32 %v2031, %v2178
      %v2247 = vadd.f32 %v2032, %v2183
      %v2248 = vadd.f32 %v2033, %v2186
      %v2249 = vadd.f32 %v2034, %v2191
      %v2250 = vadd.f32 %v2035, %v2194
      %v2251 = vadd.f32 %v2036, %v2199
      %v2252 = vadd.f32 %v2037, %v2202
      %v2253 = vadd.f32 %v2038, %v2207
      %v2254 = vadd.f32 %v2039, %v2210
      %v2255 = vadd.f32 %v2040, %v2215
      %v2256 = vadd.f32 %v2041, %v2218
      %v2257 = vadd.f32 %v2042, %v2223
      %v2258 = vadd.f32 %v2043, %v2226
      %v2259 = vadd.f32 %v2044, %v2231
      %v2260 = vadd.f32 %v2045, %v2234
      %v2261 = vadd.f32 %v2046, %v2239
      %v2262 = vadd.f32 %v2047, %v2242
      %v2263 = vld [vmem:[#allocation2 + $0x11] sm:$0xff]
      %v2264 = vld [vmem:[#allocation2 + $0x19] sm:$0xff]
      %v2265 = vld [vmem:[#allocation2 + $0x21] sm:$0xff]
      %v2266 = vld [vmem:[#allocation2 + $0x29] sm:$0xff]
      %v2267 = vld [vmem:[#allocation2 + $0x31] sm:$0xff]
      %v2268 = vld [vmem:[#allocation2 + $0x39] sm:$0xff]
      %v2269 = vld [vmem:[#allocation2 + $0x41] sm:$0xff]
      %v2270 = vld [vmem:[#allocation2 + $0x49] sm:$0xff]
      %v2271 = vld [vmem:[#allocation2 + $0x51] sm:$0xff]
      %v2272 = vld [vmem:[#allocation2 + $0x59] sm:$0xff]
      %v2273 = vld [vmem:[#allocation2 + $0x61] sm:$0xff]
      %v2274 = vld [vmem:[#allocation2 + $0x69] sm:$0xff]
      %v2275 = vld [vmem:[#allocation2 + $0x71] sm:$0xff]
      %v2276 = vld [vmem:[#allocation2 + $0x79] sm:$0xff]
      %v2277 = vld [vmem:[#allocation2 + $0x81] sm:$0xff]
      %v2278 = vld [vmem:[#allocation2 + $0x89] sm:$0xff]
      %v2279 = vld [vmem:[#allocation2 + $0x91] sm:$0xff]
      %v2280 = vld [vmem:[#allocation2 + $0x99] sm:$0xff]
      %v2281 = vpack.c.bf16 %v2264, %v2263
      %v2282 = vpack.c.bf16 %v2266, %v2265
      %v2283 = vpack.c.bf16 %v2268, %v2267
      %v2284 = vpack.c.bf16 %v2270, %v2269
      %v2285 = vpack.c.bf16 %v2272, %v2271
      %v2286 = vpack.c.bf16 %v2274, %v2273
      %v2287 = vpack.c.bf16 %v2276, %v2275
      %v2288 = vpack.c.bf16 %v2278, %v2277
      %v2289 = vpack.c.bf16 %v2280, %v2279
      %s2290 = scalar_lea.vmem %s6, 320
      %v2291 = vld [vmem:[%s2290] sm:$0xf]
      %v2292 = vld [vmem:[%s2290 + $0x4] sm:$0xf]
      %v2293 = vld [vmem:[%s2290 + $0x8] sm:$0xf]
      %v2294 = vld [vmem:[%s2290 + $0xc] sm:$0xf]
      %v2295 = vld [vmem:[%s2290 + $0x10] sm:$0xf]
      %v2296 = vld [vmem:[%s2290 + $0x14] sm:$0xf]
      %v2297 = vld [vmem:[%s2290 + $0x18] sm:$0xf]
      %v2298 = vld [vmem:[%s2290 + $0x1c] sm:$0xf]
      %v2299 = vld [vmem:[%s2290 + $0x20] sm:$0xf]
      %v2300 = vld [vmem:[%s2290 + $0x24] sm:$0xf]
      %v2301 = vld [vmem:[%s2290 + $0x28] sm:$0xf]
      %v2302 = vld [vmem:[%s2290 + $0x2c] sm:$0xf]
      %v2303 = vld [vmem:[%s2290 + $0x30] sm:$0xf]
      %v2304 = vld [vmem:[%s2290 + $0x34] sm:$0xf]
      %v2305 = vld [vmem:[%s2290 + $0x38] sm:$0xf]
      %v2306 = vld [vmem:[%s2290 + $0x3c] sm:$0xf]
      %v2323 = vunpack.c.l.b16 %v2291
      %v2324 = vunpack.c.l.b16 %v2292
      %v2325 = vunpack.c.l.b16 %v2293
      %v2326 = vunpack.c.l.b16 %v2294
      %v2327 = vunpack.c.l.b16 %v2295
      %v2328 = vunpack.c.l.b16 %v2296
      %v2329 = vunpack.c.l.b16 %v2297
      %v2330 = vunpack.c.l.b16 %v2298
      %v2331 = vunpack.c.l.b16 %v2299
      %v2332 = vunpack.c.l.b16 %v2300
      %v2333 = vunpack.c.l.b16 %v2301
      %v2334 = vunpack.c.l.b16 %v2302
      %v2335 = vunpack.c.l.b16 %v2303
      %v2336 = vunpack.c.l.b16 %v2304
      %v2337 = vunpack.c.l.b16 %v2305
      %v2338 = vunpack.c.l.b16 %v2306
      %v2339 = vpack.c.b16 %v2324, %v2323
      %v2340 = vpack.c.b16 %v2326, %v2325
      %v2341 = vpack.c.b16 %v2328, %v2327
      %v2342 = vpack.c.b16 %v2330, %v2329
      %v2343 = vpack.c.b16 %v2332, %v2331
      %v2344 = vpack.c.b16 %v2334, %v2333
      %v2345 = vpack.c.b16 %v2336, %v2335
      %v2346 = vpack.c.b16 %v2338, %v2337
      %2355 = vmatprep.subr.bf16.mxu0 0
      %2356 = vmatpush1.bf16.msra.mxu0 %v2339
      %2357 = vmatprep.subr.bf16.mxu0 0
      %2358 = vmatpush1.bf16.msra.mxu0 %v2340
      %2359 = vmatprep.subr.bf16.mxu0 0
      %2360 = vmatpush1.bf16.msra.mxu0 %v2341
      %2361 = vmatprep.subr.bf16.mxu0 0
      %2362 = vmatpush1.bf16.msra.mxu0 %v2342
      %2363 = vmatprep.subr.bf16.mxu0 0
      %2364 = vmatpush1.bf16.msra.mxu0 %v2343
      %2365 = vmatprep.subr.bf16.mxu0 0
      %2366 = vmatpush1.bf16.msra.mxu0 %v2344
      %2367 = vmatprep.subr.bf16.mxu0 0
      %2368 = vmatpush1.bf16.msra.mxu0 %v2345
      %2369 = vmatprep.subr.bf16.mxu0 0
      %2370 = vmatpush1.bf16.msra.mxu0 %v2346
      %2371 = vmatprep.subr.bf16.mxu0 0
      %2372 = vmatpush1.bf16.msra.mxu0 0
      %2373 = vmatprep.subr.bf16.mxu0 0
      %2374 = vmatpush1.bf16.msra.mxu0 0
      %2375 = vmatprep.subr.bf16.mxu0 0
      %2376 = vmatpush1.bf16.msra.mxu0 0
      %2377 = vmatprep.subr.bf16.mxu0 0
      %2378 = vmatpush1.bf16.msra.mxu0 0
      %2379 = vmatprep.subr.bf16.mxu0 0
      %2380 = vmatpush1.bf16.msra.mxu0 0
      %2381 = vmatprep.subr.bf16.mxu0 0
      %2382 = vmatpush1.bf16.msra.mxu0 0
      %2383 = vmatprep.subr.bf16.mxu0 0
      %2384 = vmatpush1.bf16.msra.mxu0 0
      %2385 = vmatprep.subr.bf16.mxu0 0
      %2386 = vmatpush1.bf16.msra.mxu0 0
      %2387 = vmatprep.mubr.bf16.mxu0 0
      %2388 = vmatmul.mubr.bf16.gmra.mrb[0].mxu0 %v2281
      %v2389 = vpop.f32.mrb[0].mxu0
      %v2390 = vadd.f32 0.0, %v2389
      %v2391 = vpop.f32.mrb[0].mxu0
      %v2392 = vpop.f32.mrb[0].mxu0
      %v2393 = vadd.f32 0.0, %v2392
      %v2394 = vpop.f32.mrb[0].mxu0
      %2395 = vmatprep.mubr.bf16.mxu0 0
      %2396 = vmatmul.mubr.bf16.gmra.mrb[0].mxu0 %v2282
      %v2397 = vpop.f32.mrb[0].mxu0
      %v2398 = vadd.f32 0.0, %v2397
      %v2399 = vpop.f32.mrb[0].mxu0
      %v2400 = vpop.f32.mrb[0].mxu0
      %v2401 = vadd.f32 0.0, %v2400
      %v2402 = vpop.f32.mrb[0].mxu0
      %2403 = vmatprep.mubr.bf16.mxu0 0
      %2404 = vmatmul.mubr.bf16.gmra.mrb[0].mxu0 %v2283
      %v2405 = vpop.f32.mrb[0].mxu0
      %v2406 = vadd.f32 0.0, %v2405
      %v2407 = vpop.f32.mrb[0].mxu0
      %v2408 = vpop.f32.mrb[0].mxu0
      %v2409 = vadd.f32 0.0, %v2408
      %v2410 = vpop.f32.mrb[0].mxu0
      %2411 = vmatprep.mubr.bf16.mxu0 0
      %2412 = vmatmul.mubr.bf16.gmra.mrb[0].mxu0 %v2284
      %v2413 = vpop.f32.mrb[0].mxu0
      %v2414 = vadd.f32 0.0, %v2413
      %v2415 = vpop.f32.mrb[0].mxu0
      %v2416 = vpop.f32.mrb[0].mxu0
      %v2417 = vadd.f32 0.0, %v2416
      %v2418 = vpop.f32.mrb[0].mxu0
      %2419 = vmatprep.mubr.bf16.mxu0 0
      %2420 = vmatmul.mubr.bf16.gmra.mrb[0].mxu0 %v2285
      %v2421 = vpop.f32.mrb[0].mxu0
      %v2422 = vadd.f32 0.0, %v2421
      %v2423 = vpop.f32.mrb[0].mxu0
      %v2424 = vpop.f32.mrb[0].mxu0
      %v2425 = vadd.f32 0.0, %v2424
      %v2426 = vpop.f32.mrb[0].mxu0
      %2427 = vmatprep.mubr.bf16.mxu0 0
      %2428 = vmatmul.mubr.bf16.gmra.mrb[0].mxu0 %v2286
      %v2429 = vpop.f32.mrb[0].mxu0
      %v2430 = vadd.f32 0.0, %v2429
      %v2431 = vpop.f32.mrb[0].mxu0
      %v2432 = vpop.f32.mrb[0].mxu0
      %v2433 = vadd.f32 0.0, %v2432
      %v2434 = vpop.f32.mrb[0].mxu0
      %2435 = vmatprep.mubr.bf16.mxu0 0
      %2436 = vmatmul.mubr.bf16.gmra.mrb[0].mxu0 %v2287
      %v2437 = vpop.f32.mrb[0].mxu0
      %v2438 = vadd.f32 0.0, %v2437
      %v2439 = vpop.f32.mrb[0].mxu0
      %v2440 = vpop.f32.mrb[0].mxu0
      %v2441 = vadd.f32 0.0, %v2440
      %v2442 = vpop.f32.mrb[0].mxu0
      %2443 = vmatprep.mubr.bf16.mxu0 0
      %2444 = vmatmul.mubr.bf16.gmra.mrb[0].mxu0 %v2288
      %v2445 = vpop.f32.mrb[0].mxu0
      %v2446 = vadd.f32 0.0, %v2445
      %v2447 = vpop.f32.mrb[0].mxu0
      %v2448 = vpop.f32.mrb[0].mxu0
      %v2449 = vadd.f32 0.0, %v2448
      %v2450 = vpop.f32.mrb[0].mxu0
      %2451 = vmatprep.mubr.bf16.mxu0 0
      %2452 = vmatmul.mubr.bf16.gmra.mrb[0].mxu0 %v2289
      %v2453 = vpop.f32.mrb[0].mxu0
      %v2454 = vadd.f32 0.0, %v2453
      %v2455 = vpop.f32.mrb[0].mxu0
      %v2456 = vpop.f32.mrb[0].mxu0
      %v2457 = vadd.f32 0.0, %v2456
      %v2458 = vpop.f32.mrb[0].mxu0
      %2459 = vdwg.mxu0
      %v2460 = vmul.f32 %v2390, %v1692
      %v2461 = vmul.f32 %v2393, %v1697
      %v2462 = vmul.f32 %v2398, %v1702
      %v2463 = vmul.f32 %v2401, %v1707
      %v2464 = vmul.f32 %v2406, %v1712
      %v2465 = vmul.f32 %v2409, %v1717
      %v2466 = vmul.f32 %v2414, %v1722
      %v2467 = vmul.f32 %v2417, %v1727
      %v2468 = vmul.f32 %v2422, %v1732
      %v2469 = vmul.f32 %v2425, %v1737
      %v2470 = vmul.f32 %v2430, %v1742
      %v2471 = vmul.f32 %v2433, %v1747
      %v2472 = vmul.f32 %v2438, %v1752
      %v2473 = vmul.f32 %v2441, %v1757
      %v2474 = vmul.f32 %v2446, %v1762
      %v2475 = vmul.f32 %v2449, %v1767
      %v2476 = vmul.f32 %v2454, %v1772
      %v2477 = vmul.f32 %v2457, %v1777
      %v2478 = vadd.f32 %v2245, %v2460
      %v2479 = vadd.f32 %v2246, %v2461
      %v2480 = vadd.f32 %v2247, %v2462
      %v2481 = vadd.f32 %v2248, %v2463
      %v2482 = vadd.f32 %v2249, %v2464
      %v2483 = vadd.f32 %v2250, %v2465
      %v2484 = vadd.f32 %v2251, %v2466
      %v2485 = vadd.f32 %v2252, %v2467
      %v2486 = vadd.f32 %v2253, %v2468
      %v2487 = vadd.f32 %v2254, %v2469
      %v2488 = vadd.f32 %v2255, %v2470
      %v2489 = vadd.f32 %v2256, %v2471
      %v2490 = vadd.f32 %v2257, %v2472
      %v2491 = vadd.f32 %v2258, %v2473
      %v2492 = vadd.f32 %v2259, %v2474
      %v2493 = vadd.f32 %v2260, %v2475
      %v2494 = vadd.f32 %v2261, %v2476
      %v2495 = vadd.f32 %v2262, %v2477
      %v2496 = vld [vmem:[#allocation2 + $0x1b] sm:$0xff]
      %v2497 = vld [vmem:[#allocation2 + $0x23] sm:$0xff]
      %v2498 = vld [vmem:[#allocation2 + $0x2b] sm:$0xff]
      %v2499 = vld [vmem:[#allocation2 + $0x33] sm:$0xff]
      %v2500 = vld [vmem:[#allocation2 + $0x3b] sm:$0xff]
      %v2501 = vld [vmem:[#allocation2 + $0x43] sm:$0xff]
      %v2502 = vld [vmem:[#allocation2 + $0x4b] sm:$0xff]
      %v2503 = vld [vmem:[#allocation2 + $0x53] sm:$0xff]
      %v2504 = vld [vmem:[#allocation2 + $0x5b] sm:$0xff]
      %v2505 = vld [vmem:[#allocation2 + $0x63] sm:$0xff]
      %v2506 = vld [vmem:[#allocation2 + $0x6b] sm:$0xff]
      %v2507 = vld [vmem:[#allocation2 + $0x73] sm:$0xff]
      %v2508 = vld [vmem:[#allocation2 + $0x7b] sm:$0xff]
      %v2509 = vld [vmem:[#allocation2 + $0x83] sm:$0xff]
      %v2510 = vld [vmem:[#allocation2 + $0x8b] sm:$0xff]
      %v2511 = vld [vmem:[#allocation2 + $0x93] sm:$0xff]
      %v2512 = vld [vmem:[#allocation2 + $0x9b] sm:$0xff]
      %v2513 = vld [vmem:[#allocation2 + $0xa3] sm:$0xff]
      %v2514 = vpack.c.bf16 %v2497, %v2496
      %v2515 = vpack.c.bf16 %v2499, %v2498
      %v2516 = vpack.c.bf16 %v2501, %v2500
      %v2517 = vpack.c.bf16 %v2503, %v2502
      %v2518 = vpack.c.bf16 %v2505, %v2504
      %v2519 = vpack.c.bf16 %v2507, %v2506
      %v2520 = vpack.c.bf16 %v2509, %v2508
      %v2521 = vpack.c.bf16 %v2511, %v2510
      %v2522 = vpack.c.bf16 %v2513, %v2512
      %s2523 = scalar_lea.vmem %s6, 384
      %v2524 = vld [vmem:[%s2523] sm:$0xf]
      %v2525 = vld [vmem:[%s2523 + $0x4] sm:$0xf]
      %v2526 = vld [vmem:[%s2523 + $0x8] sm:$0xf]
      %v2527 = vld [vmem:[%s2523 + $0xc] sm:$0xf]
      %v2528 = vld [vmem:[%s2523 + $0x10] sm:$0xf]
      %v2529 = vld [vmem:[%s2523 + $0x14] sm:$0xf]
      %v2530 = vld [vmem:[%s2523 + $0x18] sm:$0xf]
      %v2531 = vld [vmem:[%s2523 + $0x1c] sm:$0xf]
      %v2532 = vld [vmem:[%s2523 + $0x20] sm:$0xf]
      %v2533 = vld [vmem:[%s2523 + $0x24] sm:$0xf]
      %v2534 = vld [vmem:[%s2523 + $0x28] sm:$0xf]
      %v2535 = vld [vmem:[%s2523 + $0x2c] sm:$0xf]
      %v2536 = vld [vmem:[%s2523 + $0x30] sm:$0xf]
      %v2537 = vld [vmem:[%s2523 + $0x34] sm:$0xf]
      %v2538 = vld [vmem:[%s2523 + $0x38] sm:$0xf]
      %v2539 = vld [vmem:[%s2523 + $0x3c] sm:$0xf]
      %v2556 = vunpack.c.l.b16 %v2524
      %v2557 = vunpack.c.l.b16 %v2525
      %v2558 = vunpack.c.l.b16 %v2526
      %v2559 = vunpack.c.l.b16 %v2527
      %v2560 = vunpack.c.l.b16 %v2528
      %v2561 = vunpack.c.l.b16 %v2529
      %v2562 = vunpack.c.l.b16 %v2530
      %v2563 = vunpack.c.l.b16 %v2531
      %v2564 = vunpack.c.l.b16 %v2532
      %v2565 = vunpack.c.l.b16 %v2533
      %v2566 = vunpack.c.l.b16 %v2534
      %v2567 = vunpack.c.l.b16 %v2535
      %v2568 = vunpack.c.l.b16 %v2536
      %v2569 = vunpack.c.l.b16 %v2537
      %v2570 = vunpack.c.l.b16 %v2538
      %v2571 = vunpack.c.l.b16 %v2539
      %v2572 = vpack.c.b16 %v2557, %v2556
      %v2573 = vpack.c.b16 %v2559, %v2558
      %v2574 = vpack.c.b16 %v2561, %v2560
      %v2575 = vpack.c.b16 %v2563, %v2562
      %v2576 = vpack.c.b16 %v2565, %v2564
      %v2577 = vpack.c.b16 %v2567, %v2566
      %v2578 = vpack.c.b16 %v2569, %v2568
      %v2579 = vpack.c.b16 %v2571, %v2570
      %2588 = vmatprep.subr.bf16.mxu0 0
      %2589 = vmatpush1.bf16.msra.mxu0 %v2572
      %2590 = vmatprep.subr.bf16.mxu0 0
      %2591 = vmatpush1.bf16.msra.mxu0 %v2573
      %2592 = vmatprep.subr.bf16.mxu0 0
      %2593 = vmatpush1.bf16.msra.mxu0 %v2574
      %2594 = vmatprep.subr.bf16.mxu0 0
      %2595 = vmatpush1.bf16.msra.mxu0 %v2575
      %2596 = vmatprep.subr.bf16.mxu0 0
      %2597 = vmatpush1.bf16.msra.mxu0 %v2576
      %2598 = vmatprep.subr.bf16.mxu0 0
      %2599 = vmatpush1.bf16.msra.mxu0 %v2577
      %2600 = vmatprep.subr.bf16.mxu0 0
      %2601 = vmatpush1.bf16.msra.mxu0 %v2578
      %2602 = vmatprep.subr.bf16.mxu0 0
      %2603 = vmatpush1.bf16.msra.mxu0 %v2579
      %2604 = vmatprep.subr.bf16.mxu0 0
      %2605 = vmatpush1.bf16.msra.mxu0 0
      %2606 = vmatprep.subr.bf16.mxu0 0
      %2607 = vmatpush1.bf16.msra.mxu0 0
      %2608 = vmatprep.subr.bf16.mxu0 0
      %2609 = vmatpush1.bf16.msra.mxu0 0
      %2610 = vmatprep.subr.bf16.mxu0 0
      %2611 = vmatpush1.bf16.msra.mxu0 0
      %2612 = vmatprep.subr.bf16.mxu0 0
      %2613 = vmatpush1.bf16.msra.mxu0 0
      %2614 = vmatprep.subr.bf16.mxu0 0
      %2615 = vmatpush1.bf16.msra.mxu0 0
      %2616 = vmatprep.subr.bf16.mxu0 0
      %2617 = vmatpush1.bf16.msra.mxu0 0
      %2618 = vmatprep.subr.bf16.mxu0 0
      %2619 = vmatpush1.bf16.msra.mxu0 0
      %2620 = vmatprep.mubr.bf16.mxu0 0
      %2621 = vmatmul.mubr.bf16.gmra.mrb[0].mxu0 %v2514
      %v2622 = vpop.f32.mrb[0].mxu0
      %v2623 = vadd.f32 0.0, %v2622
      %v2624 = vpop.f32.mrb[0].mxu0
      %v2625 = vpop.f32.mrb[0].mxu0
      %v2626 = vadd.f32 0.0, %v2625
      %v2627 = vpop.f32.mrb[0].mxu0
      %2628 = vmatprep.mubr.bf16.mxu0 0
      %2629 = vmatmul.mubr.bf16.gmra.mrb[0].mxu0 %v2515
      %v2630 = vpop.f32.mrb[0].mxu0
      %v2631 = vadd.f32 0.0, %v2630
      %v2632 = vpop.f32.mrb[0].mxu0
      %v2633 = vpop.f32.mrb[0].mxu0
      %v2634 = vadd.f32 0.0, %v2633
      %v2635 = vpop.f32.mrb[0].mxu0
      %2636 = vmatprep.mubr.bf16.mxu0 0
      %2637 = vmatmul.mubr.bf16.gmra.mrb[0].mxu0 %v2516
      %v2638 = vpop.f32.mrb[0].mxu0
      %v2639 = vadd.f32 0.0, %v2638
      %v2640 = vpop.f32.mrb[0].mxu0
      %v2641 = vpop.f32.mrb[0].mxu0
      %v2642 = vadd.f32 0.0, %v2641
      %v2643 = vpop.f32.mrb[0].mxu0
      %2644 = vmatprep.mubr.bf16.mxu0 0
      %2645 = vmatmul.mubr.bf16.gmra.mrb[0].mxu0 %v2517
      %v2646 = vpop.f32.mrb[0].mxu0
      %v2647 = vadd.f32 0.0, %v2646
      %v2648 = vpop.f32.mrb[0].mxu0
      %v2649 = vpop.f32.mrb[0].mxu0
      %v2650 = vadd.f32 0.0, %v2649
      %v2651 = vpop.f32.mrb[0].mxu0
      %2652 = vmatprep.mubr.bf16.mxu0 0
      %2653 = vmatmul.mubr.bf16.gmra.mrb[0].mxu0 %v2518
      %v2654 = vpop.f32.mrb[0].mxu0
      %v2655 = vadd.f32 0.0, %v2654
      %v2656 = vpop.f32.mrb[0].mxu0
      %v2657 = vpop.f32.mrb[0].mxu0
      %v2658 = vadd.f32 0.0, %v2657
      %v2659 = vpop.f32.mrb[0].mxu0
      %2660 = vmatprep.mubr.bf16.mxu0 0
      %2661 = vmatmul.mubr.bf16.gmra.mrb[0].mxu0 %v2519
      %v2662 = vpop.f32.mrb[0].mxu0
      %v2663 = vadd.f32 0.0, %v2662
      %v2664 = vpop.f32.mrb[0].mxu0
      %v2665 = vpop.f32.mrb[0].mxu0
      %v2666 = vadd.f32 0.0, %v2665
      %v2667 = vpop.f32.mrb[0].mxu0
      %2668 = vmatprep.mubr.bf16.mxu0 0
      %2669 = vmatmul.mubr.bf16.gmra.mrb[0].mxu0 %v2520
      %v2670 = vpop.f32.mrb[0].mxu0
      %v2671 = vadd.f32 0.0, %v2670
      %v2672 = vpop.f32.mrb[0].mxu0
      %v2673 = vpop.f32.mrb[0].mxu0
      %v2674 = vadd.f32 0.0, %v2673
      %v2675 = vpop.f32.mrb[0].mxu0
      %2676 = vmatprep.mubr.bf16.mxu0 0
      %2677 = vmatmul.mubr.bf16.gmra.mrb[0].mxu0 %v2521
      %v2678 = vpop.f32.mrb[0].mxu0
      %v2679 = vadd.f32 0.0, %v2678
      %v2680 = vpop.f32.mrb[0].mxu0
      %v2681 = vpop.f32.mrb[0].mxu0
      %v2682 = vadd.f32 0.0, %v2681
      %v2683 = vpop.f32.mrb[0].mxu0
      %2684 = vmatprep.mubr.bf16.mxu0 0
      %2685 = vmatmul.mubr.bf16.gmra.mrb[0].mxu0 %v2522
      %v2686 = vpop.f32.mrb[0].mxu0
      %v2687 = vadd.f32 0.0, %v2686
      %v2688 = vpop.f32.mrb[0].mxu0
      %v2689 = vpop.f32.mrb[0].mxu0
      %v2690 = vadd.f32 0.0, %v2689
      %v2691 = vpop.f32.mrb[0].mxu0
      %2692 = vdwg.mxu0
      %v2693 = vmul.f32 %v2623, %v1135
      %v2694 = vmul.f32 %v2626, %v1140
      %v2695 = vmul.f32 %v2631, %v1145
      %v2696 = vmul.f32 %v2634, %v1150
      %v2697 = vmul.f32 %v2639, %v1155
      %v2698 = vmul.f32 %v2642, %v1160
      %v2699 = vmul.f32 %v2647, %v1165
      %v2700 = vmul.f32 %v2650, %v1170
      %v2701 = vmul.f32 %v2655, %v1175
      %v2702 = vmul.f32 %v2658, %v1180
      %v2703 = vmul.f32 %v2663, %v1185
      %v2704 = vmul.f32 %v2666, %v1190
      %v2705 = vmul.f32 %v2671, %v1195
      %v2706 = vmul.f32 %v2674, %v1200
      %v2707 = vmul.f32 %v2679, %v1205
      %v2708 = vmul.f32 %v2682, %v1210
      %v2709 = vmul.f32 %v2687, %v1215
      %v2710 = vmul.f32 %v2690, %v1220
      %v2711 = vadd.f32 %v2478, %v2693
      %v2712 = vadd.f32 %v2479, %v2694
      %v2713 = vadd.f32 %v2480, %v2695
      %v2714 = vadd.f32 %v2481, %v2696
      %v2715 = vadd.f32 %v2482, %v2697
      %v2716 = vadd.f32 %v2483, %v2698
      %v2717 = vadd.f32 %v2484, %v2699
      %v2718 = vadd.f32 %v2485, %v2700
      %v2719 = vadd.f32 %v2486, %v2701
      %v2720 = vadd.f32 %v2487, %v2702
      %v2721 = vadd.f32 %v2488, %v2703
      %v2722 = vadd.f32 %v2489, %v2704
      %v2723 = vadd.f32 %v2490, %v2705
      %v2724 = vadd.f32 %v2491, %v2706
      %v2725 = vadd.f32 %v2492, %v2707
      %v2726 = vadd.f32 %v2493, %v2708
      %v2727 = vadd.f32 %v2494, %v2709
      %v2728 = vadd.f32 %v2495, %v2710
      %v2729 = vld [vmem:[#allocation2 + $0x1c] sm:$0xff]
      %v2730 = vld [vmem:[#allocation2 + $0x24] sm:$0xff]
      %v2731 = vld [vmem:[#allocation2 + $0x2c] sm:$0xff]
      %v2732 = vld [vmem:[#allocation2 + $0x34] sm:$0xff]
      %v2733 = vld [vmem:[#allocation2 + $0x3c] sm:$0xff]
      %v2734 = vld [vmem:[#allocation2 + $0x44] sm:$0xff]
      %v2735 = vld [vmem:[#allocation2 + $0x4c] sm:$0xff]
      %v2736 = vld [vmem:[#allocation2 + $0x54] sm:$0xff]
      %v2737 = vld [vmem:[#allocation2 + $0x5c] sm:$0xff]
      %v2738 = vld [vmem:[#allocation2 + $0x64] sm:$0xff]
      %v2739 = vld [vmem:[#allocation2 + $0x6c] sm:$0xff]
      %v2740 = vld [vmem:[#allocation2 + $0x74] sm:$0xff]
      %v2741 = vld [vmem:[#allocation2 + $0x7c] sm:$0xff]
      %v2742 = vld [vmem:[#allocation2 + $0x84] sm:$0xff]
      %v2743 = vld [vmem:[#allocation2 + $0x8c] sm:$0xff]
      %v2744 = vld [vmem:[#allocation2 + $0x94] sm:$0xff]
      %v2745 = vld [vmem:[#allocation2 + $0x9c] sm:$0xff]
      %v2746 = vld [vmem:[#allocation2 + $0xa4] sm:$0xff]
      %v2747 = vpack.c.bf16 %v2730, %v2729
      %v2748 = vpack.c.bf16 %v2732, %v2731
      %v2749 = vpack.c.bf16 %v2734, %v2733
      %v2750 = vpack.c.bf16 %v2736, %v2735
      %v2751 = vpack.c.bf16 %v2738, %v2737
      %v2752 = vpack.c.bf16 %v2740, %v2739
      %v2753 = vpack.c.bf16 %v2742, %v2741
      %v2754 = vpack.c.bf16 %v2744, %v2743
      %v2755 = vpack.c.bf16 %v2746, %v2745
      %s2756 = scalar_lea.vmem %s6, 448
      %v2757 = vld [vmem:[%s2756] sm:$0xf]
      %v2758 = vld [vmem:[%s2756 + $0x4] sm:$0xf]
      %v2759 = vld [vmem:[%s2756 + $0x8] sm:$0xf]
      %v2760 = vld [vmem:[%s2756 + $0xc] sm:$0xf]
      %v2761 = vld [vmem:[%s2756 + $0x10] sm:$0xf]
      %v2762 = vld [vmem:[%s2756 + $0x14] sm:$0xf]
      %v2763 = vld [vmem:[%s2756 + $0x18] sm:$0xf]
      %v2764 = vld [vmem:[%s2756 + $0x1c] sm:$0xf]
      %v2765 = vld [vmem:[%s2756 + $0x20] sm:$0xf]
      %v2766 = vld [vmem:[%s2756 + $0x24] sm:$0xf]
      %v2767 = vld [vmem:[%s2756 + $0x28] sm:$0xf]
      %v2768 = vld [vmem:[%s2756 + $0x2c] sm:$0xf]
      %v2769 = vld [vmem:[%s2756 + $0x30] sm:$0xf]
      %v2770 = vld [vmem:[%s2756 + $0x34] sm:$0xf]
      %v2771 = vld [vmem:[%s2756 + $0x38] sm:$0xf]
      %v2772 = vld [vmem:[%s2756 + $0x3c] sm:$0xf]
      %v2789 = vunpack.c.l.b16 %v2757
      %v2790 = vunpack.c.l.b16 %v2758
      %v2791 = vunpack.c.l.b16 %v2759
      %v2792 = vunpack.c.l.b16 %v2760
      %v2793 = vunpack.c.l.b16 %v2761
      %v2794 = vunpack.c.l.b16 %v2762
      %v2795 = vunpack.c.l.b16 %v2763
      %v2796 = vunpack.c.l.b16 %v2764
      %v2797 = vunpack.c.l.b16 %v2765
      %v2798 = vunpack.c.l.b16 %v2766
      %v2799 = vunpack.c.l.b16 %v2767
      %v2800 = vunpack.c.l.b16 %v2768
      %v2801 = vunpack.c.l.b16 %v2769
      %v2802 = vunpack.c.l.b16 %v2770
      %v2803 = vunpack.c.l.b16 %v2771
      %v2804 = vunpack.c.l.b16 %v2772
      %v2805 = vpack.c.b16 %v2790, %v2789
      %v2806 = vpack.c.b16 %v2792, %v2791
      %v2807 = vpack.c.b16 %v2794, %v2793
      %v2808 = vpack.c.b16 %v2796, %v2795
      %v2809 = vpack.c.b16 %v2798, %v2797
      %v2810 = vpack.c.b16 %v2800, %v2799
      %v2811 = vpack.c.b16 %v2802, %v2801
      %v2812 = vpack.c.b16 %v2804, %v2803
      %2821 = vmatprep.subr.bf16.mxu0 0
      %2822 = vmatpush1.bf16.msra.mxu0 %v2805
      %2823 = vmatprep.subr.bf16.mxu0 0
      %2824 = vmatpush1.bf16.msra.mxu0 %v2806
      %2825 = vmatprep.subr.bf16.mxu0 0
      %2826 = vmatpush1.bf16.msra.mxu0 %v2807
      %2827 = vmatprep.subr.bf16.mxu0 0
      %2828 = vmatpush1.bf16.msra.mxu0 %v2808
      %2829 = vmatprep.subr.bf16.mxu0 0
      %2830 = vmatpush1.bf16.msra.mxu0 %v2809
      %2831 = vmatprep.subr.bf16.mxu0 0
      %2832 = vmatpush1.bf16.msra.mxu0 %v2810
      %2833 = vmatprep.subr.bf16.mxu0 0
      %2834 = vmatpush1.bf16.msra.mxu0 %v2811
      %2835 = vmatprep.subr.bf16.mxu0 0
      %2836 = vmatpush1.bf16.msra.mxu0 %v2812
      %2837 = vmatprep.subr.bf16.mxu0 0
      %2838 = vmatpush1.bf16.msra.mxu0 0
      %2839 = vmatprep.subr.bf16.mxu0 0
      %2840 = vmatpush1.bf16.msra.mxu0 0
      %2841 = vmatprep.subr.bf16.mxu0 0
      %2842 = vmatpush1.bf16.msra.mxu0 0
      %2843 = vmatprep.subr.bf16.mxu0 0
      %2844 = vmatpush1.bf16.msra.mxu0 0
      %2845 = vmatprep.subr.bf16.mxu0 0
      %2846 = vmatpush1.bf16.msra.mxu0 0
      %2847 = vmatprep.subr.bf16.mxu0 0
      %2848 = vmatpush1.bf16.msra.mxu0 0
      %2849 = vmatprep.subr.bf16.mxu0 0
      %2850 = vmatpush1.bf16.msra.mxu0 0
      %2851 = vmatprep.subr.bf16.mxu0 0
      %2852 = vmatpush1.bf16.msra.mxu0 0
      %2853 = vmatprep.mubr.bf16.mxu0 0
      %2854 = vmatmul.mubr.bf16.gmra.mrb[0].mxu0 %v2747
      %v2855 = vpop.f32.mrb[0].mxu0
      %v2856 = vadd.f32 0.0, %v2855
      %v2857 = vpop.f32.mrb[0].mxu0
      %v2858 = vpop.f32.mrb[0].mxu0
      %v2859 = vadd.f32 0.0, %v2858
      %v2860 = vpop.f32.mrb[0].mxu0
      %2861 = vmatprep.mubr.bf16.mxu0 0
      %2862 = vmatmul.mubr.bf16.gmra.mrb[0].mxu0 %v2748
      %v2863 = vpop.f32.mrb[0].mxu0
      %v2864 = vadd.f32 0.0, %v2863
      %v2865 = vpop.f32.mrb[0].mxu0
      %v2866 = vpop.f32.mrb[0].mxu0
      %v2867 = vadd.f32 0.0, %v2866
      %v2868 = vpop.f32.mrb[0].mxu0
      %2869 = vmatprep.mubr.bf16.mxu0 0
      %2870 = vmatmul.mubr.bf16.gmra.mrb[0].mxu0 %v2749
      %v2871 = vpop.f32.mrb[0].mxu0
      %v2872 = vadd.f32 0.0, %v2871
      %v2873 = vpop.f32.mrb[0].mxu0
      %v2874 = vpop.f32.mrb[0].mxu0
      %v2875 = vadd.f32 0.0, %v2874
      %v2876 = vpop.f32.mrb[0].mxu0
      %2877 = vmatprep.mubr.bf16.mxu0 0
      %2878 = vmatmul.mubr.bf16.gmra.mrb[0].mxu0 %v2750
      %v2879 = vpop.f32.mrb[0].mxu0
      %v2880 = vadd.f32 0.0, %v2879
      %v2881 = vpop.f32.mrb[0].mxu0
      %v2882 = vpop.f32.mrb[0].mxu0
      %v2883 = vadd.f32 0.0, %v2882
      %v2884 = vpop.f32.mrb[0].mxu0
      %2885 = vmatprep.mubr.bf16.mxu0 0
      %2886 = vmatmul.mubr.bf16.gmra.mrb[0].mxu0 %v2751
      %v2887 = vpop.f32.mrb[0].mxu0
      %v2888 = vadd.f32 0.0, %v2887
      %v2889 = vpop.f32.mrb[0].mxu0
      %v2890 = vpop.f32.mrb[0].mxu0
      %v2891 = vadd.f32 0.0, %v2890
      %v2892 = vpop.f32.mrb[0].mxu0
      %2893 = vmatprep.mubr.bf16.mxu0 0
      %2894 = vmatmul.mubr.bf16.gmra.mrb[0].mxu0 %v2752
      %v2895 = vpop.f32.mrb[0].mxu0
      %v2896 = vadd.f32 0.0, %v2895
      %v2897 = vpop.f32.mrb[0].mxu0
      %v2898 = vpop.f32.mrb[0].mxu0
      %v2899 = vadd.f32 0.0, %v2898
      %v2900 = vpop.f32.mrb[0].mxu0
      %2901 = vmatprep.mubr.bf16.mxu0 0
      %2902 = vmatmul.mubr.bf16.gmra.mrb[0].mxu0 %v2753
      %v2903 = vpop.f32.mrb[0].mxu0
      %v2904 = vadd.f32 0.0, %v2903
      %v2905 = vpop.f32.mrb[0].mxu0
      %v2906 = vpop.f32.mrb[0].mxu0
      %v2907 = vadd.f32 0.0, %v2906
      %v2908 = vpop.f32.mrb[0].mxu0
      %2909 = vmatprep.mubr.bf16.mxu0 0
      %2910 = vmatmul.mubr.bf16.gmra.mrb[0].mxu0 %v2754
      %v2911 = vpop.f32.mrb[0].mxu0
      %v2912 = vadd.f32 0.0, %v2911
      %v2913 = vpop.f32.mrb[0].mxu0
      %v2914 = vpop.f32.mrb[0].mxu0
      %v2915 = vadd.f32 0.0, %v2914
      %v2916 = vpop.f32.mrb[0].mxu0
      %2917 = vmatprep.mubr.bf16.mxu0 0
      %2918 = vmatmul.mubr.bf16.gmra.mrb[0].mxu0 %v2755
      %v2919 = vpop.f32.mrb[0].mxu0
      %v2920 = vadd.f32 0.0, %v2919
      %v2921 = vpop.f32.mrb[0].mxu0
      %v2922 = vpop.f32.mrb[0].mxu0
      %v2923 = vadd.f32 0.0, %v2922
      %v2924 = vpop.f32.mrb[0].mxu0
      %2925 = vdwg.mxu0
      %v2926 = vadd.f32 %v2711, %v2856
      %v2927 = vadd.f32 %v2712, %v2859
      %v2928 = vadd.f32 %v2713, %v2864
      %v2929 = vadd.f32 %v2714, %v2867
      %v2930 = vadd.f32 %v2715, %v2872
      %v2931 = vadd.f32 %v2716, %v2875
      %v2932 = vadd.f32 %v2717, %v2880
      %v2933 = vadd.f32 %v2718, %v2883
      %v2934 = vadd.f32 %v2719, %v2888
      %v2935 = vadd.f32 %v2720, %v2891
      %v2936 = vadd.f32 %v2721, %v2896
      %v2937 = vadd.f32 %v2722, %v2899
      %v2938 = vadd.f32 %v2723, %v2904
      %v2939 = vadd.f32 %v2724, %v2907
      %v2940 = vadd.f32 %v2725, %v2912
      %v2941 = vadd.f32 %v2726, %v2915
      %v2942 = vadd.f32 %v2727, %v2920
      %v2943 = vadd.f32 %v2728, %v2923
      %v2944 = vld [vmem:[#allocation2 + $0x1d] sm:$0xff]
      %v2945 = vld [vmem:[#allocation2 + $0x25] sm:$0xff]
      %v2946 = vld [vmem:[#allocation2 + $0x2d] sm:$0xff]
      %v2947 = vld [vmem:[#allocation2 + $0x35] sm:$0xff]
      %v2948 = vld [vmem:[#allocation2 + $0x3d] sm:$0xff]
      %v2949 = vld [vmem:[#allocation2 + $0x45] sm:$0xff]
      %v2950 = vld [vmem:[#allocation2 + $0x4d] sm:$0xff]
      %v2951 = vld [vmem:[#allocation2 + $0x55] sm:$0xff]
      %v2952 = vld [vmem:[#allocation2 + $0x5d] sm:$0xff]
      %v2953 = vld [vmem:[#allocation2 + $0x65] sm:$0xff]
      %v2954 = vld [vmem:[#allocation2 + $0x6d] sm:$0xff]
      %v2955 = vld [vmem:[#allocation2 + $0x75] sm:$0xff]
      %v2956 = vld [vmem:[#allocation2 + $0x7d] sm:$0xff]
      %v2957 = vld [vmem:[#allocation2 + $0x85] sm:$0xff]
      %v2958 = vld [vmem:[#allocation2 + $0x8d] sm:$0xff]
      %v2959 = vld [vmem:[#allocation2 + $0x95] sm:$0xff]
      %v2960 = vld [vmem:[#allocation2 + $0x9d] sm:$0xff]
      %v2961 = vld [vmem:[#allocation2 + $0xa5] sm:$0xff]
      %v2962 = vpack.c.bf16 %v2945, %v2944
      %v2963 = vpack.c.bf16 %v2947, %v2946
      %v2964 = vpack.c.bf16 %v2949, %v2948
      %v2965 = vpack.c.bf16 %v2951, %v2950
      %v2966 = vpack.c.bf16 %v2953, %v2952
      %v2967 = vpack.c.bf16 %v2955, %v2954
      %v2968 = vpack.c.bf16 %v2957, %v2956
      %v2969 = vpack.c.bf16 %v2959, %v2958
      %v2970 = vpack.c.bf16 %v2961, %v2960
      %s2971 = scalar_lea.vmem %s6, 512
      %v2972 = vld [vmem:[%s2971] sm:$0xf]
      %v2973 = vld [vmem:[%s2971 + $0x4] sm:$0xf]
      %v2974 = vld [vmem:[%s2971 + $0x8] sm:$0xf]
      %v2975 = vld [vmem:[%s2971 + $0xc] sm:$0xf]
      %v2976 = vld [vmem:[%s2971 + $0x10] sm:$0xf]
      %v2977 = vld [vmem:[%s2971 + $0x14] sm:$0xf]
      %v2978 = vld [vmem:[%s2971 + $0x18] sm:$0xf]
      %v2979 = vld [vmem:[%s2971 + $0x1c] sm:$0xf]
      %v2980 = vld [vmem:[%s2971 + $0x20] sm:$0xf]
      %v2981 = vld [vmem:[%s2971 + $0x24] sm:$0xf]
      %v2982 = vld [vmem:[%s2971 + $0x28] sm:$0xf]
      %v2983 = vld [vmem:[%s2971 + $0x2c] sm:$0xf]
      %v2984 = vld [vmem:[%s2971 + $0x30] sm:$0xf]
      %v2985 = vld [vmem:[%s2971 + $0x34] sm:$0xf]
      %v2986 = vld [vmem:[%s2971 + $0x38] sm:$0xf]
      %v2987 = vld [vmem:[%s2971 + $0x3c] sm:$0xf]
      %v3004 = vunpack.c.l.b16 %v2972
      %v3005 = vunpack.c.l.b16 %v2973
      %v3006 = vunpack.c.l.b16 %v2974
      %v3007 = vunpack.c.l.b16 %v2975
      %v3008 = vunpack.c.l.b16 %v2976
      %v3009 = vunpack.c.l.b16 %v2977
      %v3010 = vunpack.c.l.b16 %v2978
      %v3011 = vunpack.c.l.b16 %v2979
      %v3012 = vunpack.c.l.b16 %v2980
      %v3013 = vunpack.c.l.b16 %v2981
      %v3014 = vunpack.c.l.b16 %v2982
      %v3015 = vunpack.c.l.b16 %v2983
      %v3016 = vunpack.c.l.b16 %v2984
      %v3017 = vunpack.c.l.b16 %v2985
      %v3018 = vunpack.c.l.b16 %v2986
      %v3019 = vunpack.c.l.b16 %v2987
      %v3020 = vpack.c.b16 %v3005, %v3004
      %v3021 = vpack.c.b16 %v3007, %v3006
      %v3022 = vpack.c.b16 %v3009, %v3008
      %v3023 = vpack.c.b16 %v3011, %v3010
      %v3024 = vpack.c.b16 %v3013, %v3012
      %v3025 = vpack.c.b16 %v3015, %v3014
      %v3026 = vpack.c.b16 %v3017, %v3016
      %v3027 = vpack.c.b16 %v3019, %v3018
      %3036 = vmatprep.subr.bf16.mxu0 0
      %3037 = vmatpush1.bf16.msra.mxu0 %v3020
      %3038 = vmatprep.subr.bf16.mxu0 0
      %3039 = vmatpush1.bf16.msra.mxu0 %v3021
      %3040 = vmatprep.subr.bf16.mxu0 0
      %3041 = vmatpush1.bf16.msra.mxu0 %v3022
      %3042 = vmatprep.subr.bf16.mxu0 0
      %3043 = vmatpush1.bf16.msra.mxu0 %v3023
      %3044 = vmatprep.subr.bf16.mxu0 0
      %3045 = vmatpush1.bf16.msra.mxu0 %v3024
      %3046 = vmatprep.subr.bf16.mxu0 0
      %3047 = vmatpush1.bf16.msra.mxu0 %v3025
      %3048 = vmatprep.subr.bf16.mxu0 0
      %3049 = vmatpush1.bf16.msra.mxu0 %v3026
      %3050 = vmatprep.subr.bf16.mxu0 0
      %3051 = vmatpush1.bf16.msra.mxu0 %v3027
      %3052 = vmatprep.subr.bf16.mxu0 0
      %3053 = vmatpush1.bf16.msra.mxu0 0
      %3054 = vmatprep.subr.bf16.mxu0 0
      %3055 = vmatpush1.bf16.msra.mxu0 0
      %3056 = vmatprep.subr.bf16.mxu0 0
      %3057 = vmatpush1.bf16.msra.mxu0 0
      %3058 = vmatprep.subr.bf16.mxu0 0
      %3059 = vmatpush1.bf16.msra.mxu0 0
      %3060 = vmatprep.subr.bf16.mxu0 0
      %3061 = vmatpush1.bf16.msra.mxu0 0
      %3062 = vmatprep.subr.bf16.mxu0 0
      %3063 = vmatpush1.bf16.msra.mxu0 0
      %3064 = vmatprep.subr.bf16.mxu0 0
      %3065 = vmatpush1.bf16.msra.mxu0 0
      %3066 = vmatprep.subr.bf16.mxu0 0
      %3067 = vmatpush1.bf16.msra.mxu0 0
      %3068 = vmatprep.mubr.bf16.mxu0 0
      %3069 = vmatmul.mubr.bf16.gmra.mrb[0].mxu0 %v2962
      %v3070 = vpop.f32.mrb[0].mxu0
      %v3071 = vadd.f32 0.0, %v3070
      %v3072 = vpop.f32.mrb[0].mxu0
      %v3073 = vpop.f32.mrb[0].mxu0
      %v3074 = vadd.f32 0.0, %v3073
      %v3075 = vpop.f32.mrb[0].mxu0
      %3076 = vmatprep.mubr.bf16.mxu0 0
      %3077 = vmatmul.mubr.bf16.gmra.mrb[0].mxu0 %v2963
      %v3078 = vpop.f32.mrb[0].mxu0
      %v3079 = vadd.f32 0.0, %v3078
      %v3080 = vpop.f32.mrb[0].mxu0
      %v3081 = vpop.f32.mrb[0].mxu0
      %v3082 = vadd.f32 0.0, %v3081
      %v3083 = vpop.f32.mrb[0].mxu0
      %3084 = vmatprep.mubr.bf16.mxu0 0
      %3085 = vmatmul.mubr.bf16.gmra.mrb[0].mxu0 %v2964
      %v3086 = vpop.f32.mrb[0].mxu0
      %v3087 = vadd.f32 0.0, %v3086
      %v3088 = vpop.f32.mrb[0].mxu0
      %v3089 = vpop.f32.mrb[0].mxu0
      %v3090 = vadd.f32 0.0, %v3089
      %v3091 = vpop.f32.mrb[0].mxu0
      %3092 = vmatprep.mubr.bf16.mxu0 0
      %3093 = vmatmul.mubr.bf16.gmra.mrb[0].mxu0 %v2965
      %v3094 = vpop.f32.mrb[0].mxu0
      %v3095 = vadd.f32 0.0, %v3094
      %v3096 = vpop.f32.mrb[0].mxu0
      %v3097 = vpop.f32.mrb[0].mxu0
      %v3098 = vadd.f32 0.0, %v3097
      %v3099 = vpop.f32.mrb[0].mxu0
      %3100 = vmatprep.mubr.bf16.mxu0 0
      %3101 = vmatmul.mubr.bf16.gmra.mrb[0].mxu0 %v2966
      %v3102 = vpop.f32.mrb[0].mxu0
      %v3103 = vadd.f32 0.0, %v3102
      %v3104 = vpop.f32.mrb[0].mxu0
      %v3105 = vpop.f32.mrb[0].mxu0
      %v3106 = vadd.f32 0.0, %v3105
      %v3107 = vpop.f32.mrb[0].mxu0
      %3108 = vmatprep.mubr.bf16.mxu0 0
      %3109 = vmatmul.mubr.bf16.gmra.mrb[0].mxu0 %v2967
      %v3110 = vpop.f32.mrb[0].mxu0
      %v3111 = vadd.f32 0.0, %v3110
      %v3112 = vpop.f32.mrb[0].mxu0
      %v3113 = vpop.f32.mrb[0].mxu0
      %v3114 = vadd.f32 0.0, %v3113
      %v3115 = vpop.f32.mrb[0].mxu0
      %3116 = vmatprep.mubr.bf16.mxu0 0
      %3117 = vmatmul.mubr.bf16.gmra.mrb[0].mxu0 %v2968
      %v3118 = vpop.f32.mrb[0].mxu0
      %v3119 = vadd.f32 0.0, %v3118
      %v3120 = vpop.f32.mrb[0].mxu0
      %v3121 = vpop.f32.mrb[0].mxu0
      %v3122 = vadd.f32 0.0, %v3121
      %v3123 = vpop.f32.mrb[0].mxu0
      %3124 = vmatprep.mubr.bf16.mxu0 0
      %3125 = vmatmul.mubr.bf16.gmra.mrb[0].mxu0 %v2969
      %v3126 = vpop.f32.mrb[0].mxu0
      %v3127 = vadd.f32 0.0, %v3126
      %v3128 = vpop.f32.mrb[0].mxu0
      %v3129 = vpop.f32.mrb[0].mxu0
      %v3130 = vadd.f32 0.0, %v3129
      %v3131 = vpop.f32.mrb[0].mxu0
      %3132 = vmatprep.mubr.bf16.mxu0 0
      %3133 = vmatmul.mubr.bf16.gmra.mrb[0].mxu0 %v2970
      %v3134 = vpop.f32.mrb[0].mxu0
      %v3135 = vadd.f32 0.0, %v3134
      %v3136 = vpop.f32.mrb[0].mxu0
      %v3137 = vpop.f32.mrb[0].mxu0
      %v3138 = vadd.f32 0.0, %v3137
      %v3139 = vpop.f32.mrb[0].mxu0
      %3140 = vdwg.mxu0
      %v3141 = vmul.f32 %v3071, %v1692
      %v3142 = vmul.f32 %v3074, %v1697
      %v3143 = vmul.f32 %v3079, %v1702
      %v3144 = vmul.f32 %v3082, %v1707
      %v3145 = vmul.f32 %v3087, %v1712
      %v3146 = vmul.f32 %v3090, %v1717
      %v3147 = vmul.f32 %v3095, %v1722
      %v3148 = vmul.f32 %v3098, %v1727
      %v3149 = vmul.f32 %v3103, %v1732
      %v3150 = vmul.f32 %v3106, %v1737
      %v3151 = vmul.f32 %v3111, %v1742
      %v3152 = vmul.f32 %v3114, %v1747
      %v3153 = vmul.f32 %v3119, %v1752
      %v3154 = vmul.f32 %v3122, %v1757
      %v3155 = vmul.f32 %v3127, %v1762
      %v3156 = vmul.f32 %v3130, %v1767
      %v3157 = vmul.f32 %v3135, %v1772
      %v3158 = vmul.f32 %v3138, %v1777
      %v3159 = vadd.f32 %v2926, %v3141
      %v3160 = vadd.f32 %v2927, %v3142
      %v3161 = vadd.f32 %v2928, %v3143
      %v3162 = vadd.f32 %v2929, %v3144
      %v3163 = vadd.f32 %v2930, %v3145
      %v3164 = vadd.f32 %v2931, %v3146
      %v3165 = vadd.f32 %v2932, %v3147
      %v3166 = vadd.f32 %v2933, %v3148
      %v3167 = vadd.f32 %v2934, %v3149
      %v3168 = vadd.f32 %v2935, %v3150
      %v3169 = vadd.f32 %v2936, %v3151
      %v3170 = vadd.f32 %v2937, %v3152
      %v3171 = vadd.f32 %v2938, %v3153
      %v3172 = vadd.f32 %v2939, %v3154
      %v3173 = vadd.f32 %v2940, %v3155
      %v3174 = vadd.f32 %v2941, %v3156
      %v3175 = vadd.f32 %v2942, %v3157
      %v3176 = vadd.f32 %v2943, %v3158
      %v3177 = vld [vmem:[%s7] sm:$0x1]
      %v3179 = vlaneseq
      %v3180 = vshrl.u32 %v3179, 7
      %v3181 = vsub.s32 0, %v3180
      %v3182 = vrot.slane %v3177, %v3181
      %v3184 = vadd.f32 %v3159, %v3182
      %v3185 = vadd.f32 %v3160, %v3182
      %v3186 = vadd.f32 %v3161, %v3182
      %v3187 = vadd.f32 %v3162, %v3182
      %v3188 = vadd.f32 %v3163, %v3182
      %v3189 = vadd.f32 %v3164, %v3182
      %v3190 = vadd.f32 %v3165, %v3182
      %v3191 = vadd.f32 %v3166, %v3182
      %v3192 = vadd.f32 %v3167, %v3182
      %v3193 = vadd.f32 %v3168, %v3182
      %v3194 = vadd.f32 %v3169, %v3182
      %v3195 = vadd.f32 %v3170, %v3182
      %v3196 = vadd.f32 %v3171, %v3182
      %v3197 = vadd.f32 %v3172, %v3182
      %v3198 = vadd.f32 %v3173, %v3182
      %v3199 = vadd.f32 %v3174, %v3182
      %v3200 = vadd.f32 %v3175, %v3182
      %v3201 = vadd.f32 %v3176, %v3182
      %v3202 = vmax.f32 %v3184, 0.0
      %v3203 = vmax.f32 %v3185, 0.0
      %v3204 = vmax.f32 %v3186, 0.0
      %v3205 = vmax.f32 %v3187, 0.0
      %v3206 = vmax.f32 %v3188, 0.0
      %v3207 = vmax.f32 %v3189, 0.0
      %v3208 = vmax.f32 %v3190, 0.0
      %v3209 = vmax.f32 %v3191, 0.0
      %v3210 = vmax.f32 %v3192, 0.0
      %v3211 = vmax.f32 %v3193, 0.0
      %v3212 = vmax.f32 %v3194, 0.0
      %v3213 = vmax.f32 %v3195, 0.0
      %v3214 = vmax.f32 %v3196, 0.0
      %v3215 = vmax.f32 %v3197, 0.0
      %v3216 = vmax.f32 %v3198, 0.0
      %v3217 = vmax.f32 %v3199, 0.0
      %v3218 = vmax.f32 %v3200, 0.0
      %v3219 = vmax.f32 %v3201, 0.0
      %v3220 = vld [vmem:[%s8] sm:$0xff]
      %v3221 = vld [vmem:[%s8 + $0x8] sm:$0xff]
      %v3222 = vld [vmem:[%s8 + $0x10] sm:$0xff]
      %v3223 = vld [vmem:[%s8 + $0x18] sm:$0xff]
      %v3224 = vld [vmem:[%s9] sm:$0x1]
      %v3226 = vlaneseq
      %v3227 = vshrl.u32 %v3226, 7
      %v3228 = vsub.s32 0, %v3227
      %v3229 = vrot.slane %v3224, %v3228
      %vm3231 = vcmask 261120
      %v3233 = vsel %vm3231, %v3202, 0
      %v3236 = vsel %vm3231, %v3203, 0
      %v3239 = vsel %vm3231, %v3204, 0
      %v3242 = vsel %vm3231, %v3205, 0
      %v3245 = vsel %vm3231, %v3206, 0
      %v3248 = vsel %vm3231, %v3207, 0
      %v3251 = vsel %vm3231, %v3208, 0
      %v3254 = vsel %vm3231, %v3209, 0
      %v3257 = vsel %vm3231, %v3210, 0
      %v3260 = vsel %vm3231, %v3211, 0
      %v3263 = vsel %vm3231, %v3212, 0
      %v3266 = vsel %vm3231, %v3213, 0
      %v3269 = vsel %vm3231, %v3214, 0
      %v3272 = vsel %vm3231, %v3215, 0
      %v3275 = vsel %vm3231, %v3216, 0
      %v3278 = vsel %vm3231, %v3217, 0
      %v3281 = vsel %vm3231, %v3218, 0
      %v3284 = vsel %vm3231, %v3219, 0
      %3286 = vmatprep.subr.mxu0 0.0
      %3287 = vmatpush1.msra.mxu0 %v3220
      %3288 = vmatprep.subr.mxu0 0.0
      %3289 = vmatpush1.msra.mxu0 %v3221
      %3290 = vmatprep.subr.mxu0 0.0
      %3291 = vmatpush1.msra.mxu0 %v3222
      %3292 = vmatprep.subr.mxu0 0.0
      %3293 = vmatpush1.msra.mxu0 %v3223
      %3294 = vmatprep.subr.mxu0 0.0
      %3295 = vmatpush1.msra.mxu0 0.0
      %3296 = vmatprep.subr.mxu0 0.0
      %3297 = vmatpush1.msra.mxu0 0.0
      %3298 = vmatprep.subr.mxu0 0.0
      %3299 = vmatpush1.msra.mxu0 0.0
      %3300 = vmatprep.subr.mxu0 0.0
      %3301 = vmatpush1.msra.mxu0 0.0
      %3302 = vmatprep.subr.mxu0 0.0
      %3303 = vmatpush1.msra.mxu0 0.0
      %3304 = vmatprep.subr.mxu0 0.0
      %3305 = vmatpush1.msra.mxu0 0.0
      %3306 = vmatprep.subr.mxu0 0.0
      %3307 = vmatpush1.msra.mxu0 0.0
      %3308 = vmatprep.subr.mxu0 0.0
      %3309 = vmatpush1.msra.mxu0 0.0
      %3310 = vmatprep.subr.mxu0 0.0
      %3311 = vmatpush1.msra.mxu0 0.0
      %3312 = vmatprep.subr.mxu0 0.0
      %3313 = vmatpush1.msra.mxu0 0.0
      %3314 = vmatprep.subr.mxu0 0.0
      %3315 = vmatpush1.msra.mxu0 0.0
      %3316 = vmatprep.subr.mxu0 0.0
      %3317 = vmatpush1.msra.mxu0 0.0
      %3318 = vmatprep.subr.mxu0 0.0
      %3319 = vmatpush1.msra.mxu0 0.0
      %3320 = vmatprep.subr.mxu0 0.0
      %3321 = vmatpush1.msra.mxu0 0.0
      %3322 = vmatprep.subr.mxu0 0.0
      %3323 = vmatpush1.msra.mxu0 0.0
      %3324 = vmatprep.subr.mxu0 0.0
      %3325 = vmatpush1.msra.mxu0 0.0
      %3326 = vmatprep.subr.mxu0 0.0
      %3327 = vmatpush1.msra.mxu0 0.0
      %3328 = vmatprep.subr.mxu0 0.0
      %3329 = vmatpush1.msra.mxu0 0.0
      %3330 = vmatprep.subr.mxu0 0.0
      %3331 = vmatpush1.msra.mxu0 0.0
      %3332 = vmatprep.subr.mxu0 0.0
      %3333 = vmatpush1.msra.mxu0 0.0
      %3334 = vmatprep.subr.mxu0 0.0
      %3335 = vmatpush1.msra.mxu0 0.0
      %3336 = vmatprep.subr.mxu0 0.0
      %3337 = vmatpush1.msra.mxu0 0.0
      %3338 = vmatprep.subr.mxu0 0.0
      %3339 = vmatpush1.msra.mxu0 0.0
      %3340 = vmatprep.subr.mxu0 0.0
      %3341 = vmatpush1.msra.mxu0 0.0
      %3342 = vmatprep.subr.mxu0 0.0
      %3343 = vmatpush1.msra.mxu0 0.0
      %3344 = vmatprep.subr.mxu0 0.0
      %3345 = vmatpush1.msra.mxu0 0.0
      %3346 = vmatprep.subr.mxu0 0.0
      %3347 = vmatpush1.msra.mxu0 0.0
      %3348 = vmatprep.subr.mxu0 0.0
      %3349 = vmatpush1.msra.mxu0 0.0
      %3350 = vmatprep.mubr.f32.mxu0 0.0
      %3351 = vmatmul.mubr.f32.gmra.mrb[0].mxu0 %v3233
      %v3352 = vpop.f32.mrb[0].mxu0
      %v3353 = vadd.f32 %v3229, %v3352
      %v3354 = vpop.f32.mrb[0].mxu0
      %3355 = vmatprep.mubr.f32.mxu0 0.0
      %3356 = vmatmul.mubr.f32.gmra.mrb[0].mxu0 %v3236
      %v3357 = vpop.f32.mrb[0].mxu0
      %v3358 = vadd.f32 %v3229, %v3357
      %v3359 = vpop.f32.mrb[0].mxu0
      %3360 = vmatprep.mubr.f32.mxu0 0.0
      %3361 = vmatmul.mubr.f32.gmra.mrb[0].mxu0 %v3239
      %v3362 = vpop.f32.mrb[0].mxu0
      %v3363 = vadd.f32 %v3229, %v3362
      %v3364 = vpop.f32.mrb[0].mxu0
      %3365 = vmatprep.mubr.f32.mxu0 0.0
      %3366 = vmatmul.mubr.f32.gmra.mrb[0].mxu0 %v3242
      %v3367 = vpop.f32.mrb[0].mxu0
      %v3368 = vadd.f32 %v3229, %v3367
      %v3369 = vpop.f32.mrb[0].mxu0
      %3370 = vmatprep.mubr.f32.mxu0 0.0
      %3371 = vmatmul.mubr.f32.gmra.mrb[0].mxu0 %v3245
      %v3372 = vpop.f32.mrb[0].mxu0
      %v3373 = vadd.f32 %v3229, %v3372
      %v3374 = vpop.f32.mrb[0].mxu0
      %3375 = vmatprep.mubr.f32.mxu0 0.0
      %3376 = vmatmul.mubr.f32.gmra.mrb[0].mxu0 %v3248
      %v3377 = vpop.f32.mrb[0].mxu0
      %v3378 = vadd.f32 %v3229, %v3377
      %v3379 = vpop.f32.mrb[0].mxu0
      %3380 = vmatprep.mubr.f32.mxu0 0.0
      %3381 = vmatmul.mubr.f32.gmra.mrb[0].mxu0 %v3251
      %v3382 = vpop.f32.mrb[0].mxu0
      %v3383 = vadd.f32 %v3229, %v3382
      %v3384 = vpop.f32.mrb[0].mxu0
      %3385 = vmatprep.mubr.f32.mxu0 0.0
      %3386 = vmatmul.mubr.f32.gmra.mrb[0].mxu0 %v3254
      %v3387 = vpop.f32.mrb[0].mxu0
      %v3388 = vadd.f32 %v3229, %v3387
      %v3389 = vpop.f32.mrb[0].mxu0
      %3390 = vmatprep.mubr.f32.mxu0 0.0
      %3391 = vmatmul.mubr.f32.gmra.mrb[0].mxu0 %v3257
      %v3392 = vpop.f32.mrb[0].mxu0
      %v3393 = vadd.f32 %v3229, %v3392
      %v3394 = vpop.f32.mrb[0].mxu0
      %3395 = vmatprep.mubr.f32.mxu0 0.0
      %3396 = vmatmul.mubr.f32.gmra.mrb[0].mxu0 %v3260
      %v3397 = vpop.f32.mrb[0].mxu0
      %v3398 = vadd.f32 %v3229, %v3397
      %v3399 = vpop.f32.mrb[0].mxu0
      %3400 = vmatprep.mubr.f32.mxu0 0.0
      %3401 = vmatmul.mubr.f32.gmra.mrb[0].mxu0 %v3263
      %v3402 = vpop.f32.mrb[0].mxu0
      %v3403 = vadd.f32 %v3229, %v3402
      %v3404 = vpop.f32.mrb[0].mxu0
      %3405 = vmatprep.mubr.f32.mxu0 0.0
      %3406 = vmatmul.mubr.f32.gmra.mrb[0].mxu0 %v3266
      %v3407 = vpop.f32.mrb[0].mxu0
      %v3408 = vadd.f32 %v3229, %v3407
      %v3409 = vpop.f32.mrb[0].mxu0
      %3410 = vmatprep.mubr.f32.mxu0 0.0
      %3411 = vmatmul.mubr.f32.gmra.mrb[0].mxu0 %v3269
      %v3412 = vpop.f32.mrb[0].mxu0
      %v3413 = vadd.f32 %v3229, %v3412
      %v3414 = vpop.f32.mrb[0].mxu0
      %3415 = vmatprep.mubr.f32.mxu0 0.0
      %3416 = vmatmul.mubr.f32.gmra.mrb[0].mxu0 %v3272
      %v3417 = vpop.f32.mrb[0].mxu0
      %v3418 = vadd.f32 %v3229, %v3417
      %v3419 = vpop.f32.mrb[0].mxu0
      %3420 = vmatprep.mubr.f32.mxu0 0.0
      %3421 = vmatmul.mubr.f32.gmra.mrb[0].mxu0 %v3275
      %v3422 = vpop.f32.mrb[0].mxu0
      %v3423 = vadd.f32 %v3229, %v3422
      %v3424 = vpop.f32.mrb[0].mxu0
      %3425 = vmatprep.mubr.f32.mxu0 0.0
      %3426 = vmatmul.mubr.f32.gmra.mrb[0].mxu0 %v3278
      %v3427 = vpop.f32.mrb[0].mxu0
      %v3428 = vadd.f32 %v3229, %v3427
      %v3429 = vpop.f32.mrb[0].mxu0
      %3430 = vmatprep.mubr.f32.mxu0 0.0
      %3431 = vmatmul.mubr.f32.gmra.mrb[0].mxu0 %v3281
      %v3432 = vpop.f32.mrb[0].mxu0
      %v3433 = vadd.f32 %v3229, %v3432
      %v3434 = vpop.f32.mrb[0].mxu0
      %3435 = vmatprep.mubr.f32.mxu0 0.0
      %3436 = vmatmul.mubr.f32.gmra.mrb[0].mxu0 %v3284
      %v3437 = vpop.f32.mrb[0].mxu0
      %v3438 = vadd.f32 %v3229, %v3437
      %v3439 = vpop.f32.mrb[0].mxu0
      %3440 = vdwg.mxu0
      %3441 = vst [vmem:[%s439] sm:$0xff] %v3353
      %3442 = vst [vmem:[%s439 + $0x8] sm:$0xff] %v3358
      %3443 = vst [vmem:[%s439 + $0x10] sm:$0xff] %v3363
      %3444 = vst [vmem:[%s439 + $0x18] sm:$0xff] %v3368
      %3445 = vst [vmem:[%s439 + $0x20] sm:$0xff] %v3373
      %3446 = vst [vmem:[%s439 + $0x28] sm:$0xff] %v3378
      %3447 = vst [vmem:[%s439 + $0x30] sm:$0xff] %v3383
      %3448 = vst [vmem:[%s439 + $0x38] sm:$0xff] %v3388
      %3449 = vst [vmem:[%s439 + $0x40] sm:$0xff] %v3393
      %3450 = vst [vmem:[%s439 + $0x48] sm:$0xff] %v3398
      %3451 = vst [vmem:[%s439 + $0x50] sm:$0xff] %v3403
      %3452 = vst [vmem:[%s439 + $0x58] sm:$0xff] %v3408
      %3453 = vst [vmem:[%s439 + $0x60] sm:$0xff] %v3413
      %3454 = vst [vmem:[%s439 + $0x68] sm:$0xff] %v3418
      %3455 = vst [vmem:[%s439 + $0x70] sm:$0xff] %v3423
      %3456 = vst [vmem:[%s439 + $0x78] sm:$0xff] %v3428
      %3457 = vst [vmem:[%s439 + $0x80] sm:$0xff] %v3433
      %3458 = vst [vmem:[%s439 + $0x88] sm:$0xff] %v3438
      %p3459 = scmp.lt.s32.totalorder %s21, 1
      %s3460 = scalar_select %p3459, %s21, 1
      %s3461 = smul.addr %s3460, 18
      %s3462 = smul.addr %s3461, 8
      %s3463 = scalar_lea.vmem %s10, %s3462
      // Predicated region
      $region61: #{psp_head_forward.1} parent=59 // pred_check
        %p3464 = pneg %p274
      $region62: #{psp_head_forward.1} parent=59 // pred_check_branch
        %3466 = sbr.rel (%p3464) target = $region64
      $region63: #{psp_head_forward.1} parent=59 // pred_region
        _
      $region64: #{psp_head_forward.1} parent=59 // pred_fallthru
        _
    $region60: #{psp_head_forward.1} parent=5 // pred_fallthru
      _
    %p3467 = scmp.le.s32.totalorder 2, %s16
    // Predicated region
    $region65: #{psp_head_forward.1} parent=5 // pred_check
      %p3468 = pneg %p3467
    $region66: #{psp_head_forward.1} parent=5 // pred_check_branch
      %3470 = sbr.rel (%p3468) target = $region68
    $region67: #{psp_head_forward.1} parent=5 // pred_region
      %s3471 = ssub.s32 %s16, 2
      // Predicated region
      $region69: #{psp_head_forward.1} parent=67 // pred_check
        %p3472 = pneg %p280
      $region70: #{psp_head_forward.1} parent=67 // pred_check_branch
        %3474 = sbr.rel (%p3472) target = $region72
      $region71: #{psp_head_forward.1} parent=67 // pred_region
        %p3475 = scmp.lt.s32.totalorder %s22, 1
        %s3476 = scalar_select %p3475, %s22, 1
        %s3477 = smul.addr %s3476, 18
        %s3478 = smul.addr %s3477, 8
        %s3479 = scalar_lea.vmem %s10, %s3478
      $region72: #{psp_head_forward.1} parent=67 // pred_fallthru
        _
    $region68: #{psp_head_forward.1} parent=5 // pred_fallthru
      _
  $region6: #{psp_head_forward.1} parent=0 // loop_footer
    %s20 = sadd.s32 1, %s16
  $region7: #{psp_head_forward.1} parent=0 // loop_footer_branch
    %15 = sbr.rel target = $region3
  $region8: #{psp_head_forward.1} parent=0 // loop_exit
    _

</llo_original>
